<compile_context>
chip_gen: v6e
topology: v6e:2x2x1
jax: 0.10.0
libtpu: 0.0.40
codegen_flags: <defaults>
</compile_context>

<pallas_src>
import functools

import jax
import jax.numpy as jnp
from jax.experimental import pallas as pl
from jax.experimental.pallas import tpu as pltpu

LN_EPS = 1e-5


def _vmem_budgets():
    """(scoped VMEM limit, fused-FFN weight budget, matmul tile cap) per generation."""
    try:
        cap = pltpu.get_tpu_info().vmem_capacity_bytes
    except Exception:
        cap = 64 * 1024 * 1024          # assume the smallest (v7x per-TC) if unknown
    if cap >= 128 * 1024 * 1024:        # v5e / v6e
        return 64 * 1024 * 1024, 24 * 1024 * 1024, 512
    return 32 * 1024 * 1024, 12 * 1024 * 1024, 256   # v7x: 64 MiB per TensorCore


VMEM_LIMIT, FFN_FUSE_BUDGET, MM_TILE_CAP = _vmem_budgets()


# ------------------------------ small helpers ------------------------------ #

def _round_up(n, m):
    return ((n + m - 1) // m) * m


def _pick_tile(dim, cap, align):
    """Largest tile <= cap that divides `dim` and respects (8,128) alignment,
    falling back to the full dim (full-extent blocks are always legal)."""
    if dim <= cap:
        return dim
    t = (cap // align) * align
    while t >= align:
        if dim % t == 0:
            return t
        t -= align
    return dim


def _pad_rows(x, mult):
    """Zero-pad the leading (row) axis up to a multiple of `mult`."""
    n = x.shape[0]
    r = _round_up(n, mult) - n
    if r == 0:
        return x
    return jnp.pad(x, ((0, r),) + ((0, 0),) * (x.ndim - 1))


def _layernorm_f32(y, g, b):
    mu = jnp.mean(y, axis=-1, keepdims=True)
    var = jnp.mean(jnp.square(y - mu), axis=-1, keepdims=True)
    yhat = (y - mu) * jax.lax.rsqrt(var + LN_EPS)
    return yhat * g.astype(jnp.float32) + b.astype(jnp.float32)


# --------------------------- tiled matmul kernels --------------------------- #

def _matmul_bias_kernel(x_ref, w_ref, b_ref, o_ref, acc_ref, *, activation):
    @pl.when(pl.program_id(2) == 0)
    def _():
        acc_ref[...] = jnp.zeros_like(acc_ref)

    # native-dtype operands on the MXU, f32 accumulation
    acc_ref[...] += jnp.dot(x_ref[...], w_ref[...],
                            preferred_element_type=jnp.float32)

    @pl.when(pl.program_id(2) == pl.num_programs(2) - 1)
    def _():
        y = acc_ref[...] + b_ref[...].astype(jnp.float32)
        if activation == "relu":
            y = jnp.maximum(y, 0.0)
        o_ref[...] = y.astype(o_ref.dtype)


def matmul_bias(x, w, b, activation=None, tm_cap=None, tn_cap=None, tk_cap=512):
    """out = act(x @ w + b), tiled over (M, N, K) with a VMEM f32 accumulator."""
    M0, K = x.shape
    N = w.shape[1]
    tm_cap = MM_TILE_CAP if tm_cap is None else tm_cap
    tn_cap = MM_TILE_CAP if tn_cap is None else tn_cap

    tm = min(tm_cap, _round_up(M0, 8))
    x = _pad_rows(x, tm)                      # never fall back to a full-M block
    M = x.shape[0]
    tn = _pick_tile(N, tn_cap, 128)
    tk = _pick_tile(K, tk_cap, 128)
    grid = (M // tm, N // tn, K // tk)

    kern = functools.partial(_matmul_bias_kernel, activation=activation)
    out = pl.pallas_call(
        kern,
        out_shape=jax.ShapeDtypeStruct((M, N), x.dtype),
        grid=grid,
        in_specs=[
            pl.BlockSpec((tm, tk), lambda i, j, k: (i, k)),
            pl.BlockSpec((tk, tn), lambda i, j, k: (k, j)),
            pl.BlockSpec((1, tn), lambda i, j, k: (0, j)),
        ],
        out_specs=pl.BlockSpec((tm, tn), lambda i, j, k: (i, j)),
        scratch_shapes=[pltpu.VMEM((tm, tn), jnp.float32)],
        compiler_params=pltpu.CompilerParams(
            dimension_semantics=("parallel", "parallel", "arbitrary"),
            vmem_limit_bytes=VMEM_LIMIT),
    )(x, w, b.reshape(1, N))
    return out if M == M0 else out[:M0]


def _matmul_res_ln_kernel(x_ref, w_ref, b_ref, res_ref, g_ref, bln_ref,
                          o_ref, acc_ref):
    @pl.when(pl.program_id(1) == 0)
    def _():
        acc_ref[...] = jnp.zeros_like(acc_ref)

    acc_ref[...] += jnp.dot(x_ref[...], w_ref[...],
                            preferred_element_type=jnp.float32)

    @pl.when(pl.program_id(1) == pl.num_programs(1) - 1)
    def _():
        y = (acc_ref[...] + b_ref[...].astype(jnp.float32)
             + res_ref[...].astype(jnp.float32))
        o_ref[...] = _layernorm_f32(y, g_ref[...], bln_ref[...]).astype(o_ref.dtype)


def matmul_bias_res_ln(x, w, b, res, gamma, beta, tm_cap=None, tk_cap=512):
    """out = LayerNorm(x @ w + b + res)  -- matmul + epilogue fused.
    N (the LN axis) is kept whole per tile; tiled over M and the K reduction."""
    M0, K = x.shape
    N = w.shape[1]
    tm_cap = MM_TILE_CAP if tm_cap is None else tm_cap

    tm = min(tm_cap, _round_up(M0, 8))
    x = _pad_rows(x, tm)
    res = _pad_rows(res, tm)
    M = x.shape[0]
    tk = _pick_tile(K, tk_cap, 128)
    grid = (M // tm, K // tk)

    out = pl.pallas_call(
        _matmul_res_ln_kernel,
        out_shape=jax.ShapeDtypeStruct((M, N), x.dtype),
        grid=grid,
        in_specs=[
            pl.BlockSpec((tm, tk), lambda i, k: (i, k)),
            pl.BlockSpec((tk, N), lambda i, k: (k, 0)),
            pl.BlockSpec((1, N), lambda i, k: (0, 0)),
            pl.BlockSpec((tm, N), lambda i, k: (i, 0)),
            pl.BlockSpec((1, N), lambda i, k: (0, 0)),
            pl.BlockSpec((1, N), lambda i, k: (0, 0)),
        ],
        out_specs=pl.BlockSpec((tm, N), lambda i, k: (i, 0)),
        scratch_shapes=[pltpu.VMEM((tm, N), jnp.float32)],
        compiler_params=pltpu.CompilerParams(
            dimension_semantics=("parallel", "arbitrary"),
            vmem_limit_bytes=VMEM_LIMIT),
    )(x, w, b.reshape(1, N), res, gamma.reshape(1, N), beta.reshape(1, N))
    return out if M == M0 else out[:M0]


# ----------------------- fused FFN + residual + LN kernel ------------------- #

def _ffn_res_ln_kernel(x_ref, w1_ref, b1_ref, w2_ref, b2_ref, g_ref, bln_ref, o_ref):
    x = x_ref[...]                                       # native dtype -> MXU fast path
    h = jnp.dot(x, w1_ref[...], preferred_element_type=jnp.float32)
    h = jnp.maximum(h + b1_ref[...].astype(jnp.float32), 0.0)
    y = jnp.dot(h.astype(x.dtype), w2_ref[...],
                preferred_element_type=jnp.float32)
    y = y + b2_ref[...].astype(jnp.float32) + x.astype(jnp.float32)   # residual = x
    o_ref[...] = _layernorm_f32(y, g_ref[...], bln_ref[...]).astype(o_ref.dtype)


def ffn_res_ln(x, w1, b1, w2, b2, gamma, beta, tm_cap=None):
    M0, D = x.shape
    F = w1.shape[1]
    tm_cap = MM_TILE_CAP if tm_cap is None else tm_cap

    tm = min(tm_cap, _round_up(M0, 8))
    x = _pad_rows(x, tm)
    M = x.shape[0]
    grid = (M // tm,)

    # TODO(synk): single-buffer the constant-index weight specs (pl.Buffered(1))
    # once pipeline_mode support is universal; the fuse budget already accounts
    # for the default double-buffering.
    out = pl.pallas_call(
        _ffn_res_ln_kernel,
        out_shape=jax.ShapeDtypeStruct((M, D), x.dtype),
        grid=grid,
        in_specs=[
            pl.BlockSpec((tm, D), lambda i: (i, 0)),
            pl.BlockSpec((D, F), lambda i: (0, 0)),
            pl.BlockSpec((1, F), lambda i: (0, 0)),
            pl.BlockSpec((F, D), lambda i: (0, 0)),
            pl.BlockSpec((1, D), lambda i: (0, 0)),
            pl.BlockSpec((1, D), lambda i: (0, 0)),
            pl.BlockSpec((1, D), lambda i: (0, 0)),
        ],
        out_specs=pl.BlockSpec((tm, D), lambda i: (i, 0)),
        compiler_params=pltpu.CompilerParams(
            dimension_semantics=("parallel",),
            vmem_limit_bytes=VMEM_LIMIT),
    )(x, w1, b1.reshape(1, F), w2, b2.reshape(1, D),
      gamma.reshape(1, D), beta.reshape(1, D))
    return out if M == M0 else out[:M0]


# ------------------------------ attention kernel ---------------------------- #

def _mha_kernel(*refs, scale, has_mask):
    """One (batch, head, query-tile) step: scores, softmax, context."""
    if has_mask:
        q_ref, k_ref, v_ref, mask_ref, ctx_ref, probs_ref = refs
    else:
        q_ref, k_ref, v_ref, ctx_ref, probs_ref = refs
        mask_ref = None

    q = q_ref[...]                                  # (tq, Dh), native dtype
    k = k_ref[...]                                  # (Sk, Dh), native dtype
    v = v_ref[...]                                  # (Sk, Dh), native dtype

    # QK^T without materializing a transpose (rhs contracts on its minor dim);
    # scale applied to the f32 scores.
    s = jax.lax.dot_general(q, k, (((1,), (1,)), ((), ())),
                            preferred_element_type=jnp.float32) * scale
    if has_mask:
        s = jnp.where(mask_ref[...] != 0, s, jnp.float32(-1e9))

    s = s - jnp.max(s, axis=-1, keepdims=True)
    e = jnp.exp(s)
    p = e / jnp.sum(e, axis=-1, keepdims=True)      # exact: probs are a module output
    probs_ref[...] = p.astype(probs_ref.dtype)

    # PV in the value dtype (bf16 MXU fast path when inputs are bf16).
    ctx_ref[...] = jnp.dot(p.astype(v.dtype), v,
                           preferred_element_type=jnp.float32).astype(ctx_ref.dtype)


def multihead_attention(q, k, v, mask, scale, out_dtype, tq_cap=128):
    """q/k/v: (B, H, S, Dh).  mask: (mb, mh, Sq, Sk) int32 or None (mb in {1,B},
    mh in {1,H}).  Returns ctx (B,H,Sq,Dh) and probs (B,H,Sq,Sk) f32."""
    B, H, Sq, Dh = q.shape
    Sk = k.shape[2]
    tq = _pick_tile(Sq, tq_cap, 8)
    has_mask = mask is not None

    in_specs = [
        pl.BlockSpec((None, None, tq, Dh), lambda b, h, qi: (b, h, qi, 0)),
        pl.BlockSpec((None, None, Sk, Dh), lambda b, h, qi: (b, h, 0, 0)),
        pl.BlockSpec((None, None, Sk, Dh), lambda b, h, qi: (b, h, 0, 0)),
    ]
    args = [q, k, v]
    if has_mask:
        mb, mh = mask.shape[0], mask.shape[1]

        def mask_map(b, h, qi, mb=mb, mh=mh):
            return (b if mb > 1 else 0, h if mh > 1 else 0, qi, 0)

        in_specs.append(pl.BlockSpec((None, None, tq, Sk), mask_map))
        args.append(mask)

    kern = functools.partial(_mha_kernel, scale=scale, has_mask=has_mask)
    return pl.pallas_call(
        kern,
        out_shape=(jax.ShapeDtypeStruct((B, H, Sq, Dh), out_dtype),
                   jax.ShapeDtypeStruct((B, H, Sq, Sk), jnp.float32)),
        grid=(B, H, Sq // tq),
        in_specs=in_specs,
        out_specs=(pl.BlockSpec((None, None, tq, Dh), lambda b, h, qi: (b, h, qi, 0)),
                   pl.BlockSpec((None, None, tq, Sk), lambda b, h, qi: (b, h, qi, 0))),
        compiler_params=pltpu.CompilerParams(
            dimension_semantics=("parallel", "parallel", "parallel"),
            vmem_limit_bytes=VMEM_LIMIT),
    )(*args)


def _prep_mask(mask, Sq, Sk):
    """Compact int32 mask (nonzero = keep).  Broadcastable batch/head dims stay
    size-1 -- no HBM materialization of the broadcast (index_map picks block 0)."""
    if mask is None:
        return None
    m = jnp.asarray(mask)
    if m.ndim == 2:
        m = m[None, None]
    elif m.ndim == 3:
        m = m[:, None]
    elif m.ndim != 4:
        raise ValueError("attention mask must be 2D, 3D or 4D")
    mb, mh = m.shape[0], m.shape[1]
    m = jnp.broadcast_to(m, (mb, mh, Sq, Sk))
    return m.astype(jnp.int32)


# ------------------------------- module glue -------------------------------- #

def self_attention_sublayer(x, mask, p, n_heads):
    """Fused QKV proj -> (B,H,tq) tiled attention -> out proj + residual + LN."""
    B, S, D = x.shape
    Dh = D // n_heads
    x2 = x.reshape(B * S, D)

    qkv = matmul_bias(x2, p["wqkv"], p["bqkv"])                        # (B*S, 3D)
    qkv = qkv.reshape(B, S, 3, n_heads, Dh).transpose(2, 0, 3, 1, 4)   # (3,B,H,S,Dh)

    mask_b = _prep_mask(mask, S, S)
    scale = 1.0 / float(Dh) ** 0.5
    ctx, probs = multihead_attention(qkv[0], qkv[1], qkv[2], mask_b, scale, x.dtype)

    ctx2 = ctx.transpose(0, 2, 1, 3).reshape(B * S, D)
    out2 = matmul_bias_res_ln(ctx2, p["wo"], p["bo"], x2, p["ln_g"], p["ln_b"])
    return out2.reshape(B, S, D), probs


def cross_attention_sublayer(x_q, x_kv, mask, p, n_heads):
    B, Sq, D = x_q.shape
    Sk = x_kv.shape[1]
    Dh = D // n_heads
    xq2 = x_q.reshape(B * Sq, D)
    xkv2 = x_kv.reshape(B * Sk, D)

    q = matmul_bias(xq2, p["wq"], p["bq"]) \
        .reshape(B, Sq, n_heads, Dh).transpose(0, 2, 1, 3)             # (B,H,Sq,Dh)
    kv = matmul_bias(xkv2, p["wkv"], p["bkv"]) \
        .reshape(B, Sk, 2, n_heads, Dh).transpose(2, 0, 3, 1, 4)       # (2,B,H,Sk,Dh)

    mask_b = _prep_mask(mask, Sq, Sk)
    scale = 1.0 / float(Dh) ** 0.5
    ctx, probs = multihead_attention(q, kv[0], kv[1], mask_b, scale, x_q.dtype)

    ctx2 = ctx.transpose(0, 2, 1, 3).reshape(B * Sq, D)
    out2 = matmul_bias_res_ln(ctx2, p["wo"], p["bo"], xq2, p["ln_g"], p["ln_b"])
    return out2.reshape(B, Sq, D), probs


def positionwise_feedforward(x, p):
    B, S, D = x.shape
    x2 = x.reshape(B * S, D)
    F = p["w1"].shape[1]
    # Account for default double-buffering of the resident weights.
    weight_bytes = 2 * (D * F + F * D) * jnp.dtype(x.dtype).itemsize
    if weight_bytes <= FFN_FUSE_BUDGET:
        out2 = ffn_res_ln(x2, p["w1"], p["b1"], p["w2"], p["b2"],
                          p["ln_g"], p["ln_b"])
    else:
        # Weights too big to keep resident: two tiled kernels instead.
        h = matmul_bias(x2, p["w1"], p["b1"], activation="relu")
        out2 = matmul_bias_res_ln(h, p["w2"], p["b2"], x2, p["ln_g"], p["ln_b"])
    return out2.reshape(B, S, D)


def decoder_layer(dec_inp, enc_out, params, self_attn_mask, enc_attn_mask, n_heads):
    dec_out, dec_self_scores = self_attention_sublayer(
        dec_inp, self_attn_mask, params["self_attn"], n_heads)
    dec_out, dec_enc_scores = cross_attention_sublayer(
        dec_out, enc_out, enc_attn_mask, params["enc_attn"], n_heads)
    dec_out = positionwise_feedforward(dec_out, params["pff"])
    return dec_out, dec_self_scores, dec_enc_scores


# ------------------------------ params & reference -------------------------- #

def init_params(key, embed_dim, d_pf):
    ks = jax.random.split(key, 12)

    def w(k, shape):
        return 0.02 * jax.random.normal(k, shape, jnp.float32)

    def mha_params(k0, k1, k2, k3):
        return {
            "wq": w(k0, (embed_dim, embed_dim)), "bq": jnp.zeros((embed_dim,), jnp.float32),
            "wk": w(k1, (embed_dim, embed_dim)), "bk": jnp.zeros((embed_dim,), jnp.float32),
            "wv": w(k2, (embed_dim, embed_dim)), "bv": jnp.zeros((embed_dim,), jnp.float32),
            "wo": w(k3, (embed_dim, embed_dim)), "bo": jnp.zeros((embed_dim,), jnp.float32),
            "ln_g": jnp.ones((embed_dim,), jnp.float32),
            "ln_b": jnp.zeros((embed_dim,), jnp.float32),
        }

    return {
        "self_attn": mha_params(ks[0], ks[1], ks[2], ks[3]),
        "enc_attn": mha_params(ks[4], ks[5], ks[6], ks[7]),
        "pff": {
            "w1": w(ks[8], (embed_dim, d_pf)), "b1": jnp.zeros((d_pf,), jnp.float32),
            "w2": w(ks[9], (d_pf, embed_dim)), "b2": jnp.zeros((embed_dim,), jnp.float32),
            "ln_g": jnp.ones((embed_dim,), jnp.float32),
            "ln_b": jnp.zeros((embed_dim,), jnp.float32),
        },
    }


def prepare_params(params):
    """One-time weight fusion done OUTSIDE jit: wq|wk|wv -> (D,3D), wk|wv -> (D,2D)."""
    sa, ea, pff = params["self_attn"], params["enc_attn"], params["pff"]
    return {
        "self_attn": {
            "wqkv": jnp.concatenate([sa["wq"], sa["wk"], sa["wv"]], axis=1),
            "bqkv": jnp.concatenate([sa["bq"], sa["bk"], sa["bv"]], axis=0),
            "wo": sa["wo"], "bo": sa["bo"],
            "ln_g": sa["ln_g"], "ln_b": sa["ln_b"],
        },
        "enc_attn": {
            "wq": ea["wq"], "bq": ea["bq"],
            "wkv": jnp.concatenate([ea["wk"], ea["wv"]], axis=1),
            "bkv": jnp.concatenate([ea["bk"], ea["bv"]], axis=0),
            "wo": ea["wo"], "bo": ea["bo"],
            "ln_g": ea["ln_g"], "ln_b": ea["ln_b"],
        },
        "pff": dict(pff),
    }


def _ref_ln(y, g, b):
    mu = y.mean(-1, keepdims=True)
    var = ((y - mu) ** 2).mean(-1, keepdims=True)
    return (y - mu) / jnp.sqrt(var + LN_EPS) * g + b


def _ref_mha(x_q, x_kv, mask, p, n_heads):
    B, Sq, D = x_q.shape
    Sk = x_kv.shape[1]
    Dh = D // n_heads
    q = (x_q @ p["wq"] + p["bq"]).reshape(B, Sq, n_heads, Dh).transpose(0, 2, 1, 3)
    k = (x_kv @ p["wk"] + p["bk"]).reshape(B, Sk, n_heads, Dh).transpose(0, 2, 1, 3)
    v = (x_kv @ p["wv"] + p["bv"]).reshape(B, Sk, n_heads, Dh).transpose(0, 2, 1, 3)
    s = jnp.einsum("bhqd,bhkd->bhqk", q, k) / jnp.sqrt(Dh)
    if mask is not None:
        s = jnp.where(jnp.broadcast_to(mask, s.shape) != 0, s, -1e9)
    pr = jax.nn.softmax(s, axis=-1)
    ctx = jnp.einsum("bhqk,bhkd->bhqd", pr, v).transpose(0, 2, 1, 3).reshape(B, Sq, D)
    out = _ref_ln(ctx @ p["wo"] + p["bo"] + x_q, p["ln_g"], p["ln_b"])
    return out, pr


def _ref_decoder_layer(dec_inp, enc_out, params, m1, m2, n_heads):
    o, s1 = _ref_mha(dec_inp, dec_inp, m1, params["self_attn"], n_heads)
    o, s2 = _ref_mha(o, enc_out, m2, params["enc_attn"], n_heads)
    pff = params["pff"]
    h = jnp.maximum(o @ pff["w1"] + pff["b1"], 0.0)
    o = _ref_ln(h @ pff["w2"] + pff["b2"] + o, pff["ln_g"], pff["ln_b"])
    return o, s1, s2


# ----------------------------------- main ------------------------------------ #

if __name__ == "__main__":
    B, S_DEC, S_ENC, D, H, D_PF = 2, 8, 8, 32, 4, 64

    key = jax.random.PRNGKey(0)
    k_in, k_enc, k_par = jax.random.split(key, 3)

    dec_inp = jax.random.normal(k_in, (B, S_DEC, D), jnp.float32)
    enc_out = jax.random.normal(k_enc, (B, S_ENC, D), jnp.float32)
    params = init_params(k_par, D, D_PF)
    prepared = prepare_params(params)          # weight fusion done once, outside jit

    # causal mask for decoder self-attention; None for encoder-decoder attention
    self_attn_mask = jnp.tril(jnp.ones((S_DEC, S_DEC), jnp.float32))[None, None, :, :]

    layer = jax.jit(decoder_layer, static_argnames=("n_heads",))
    out, self_scores, enc_scores = layer(
        dec_inp, enc_out, prepared, self_attn_mask, None, n_heads=H)
    jax.block_until_ready((out, self_scores, enc_scores))

    assert out.shape == (B, S_DEC, D)
    assert self_scores.shape == (B, H, S_DEC, S_DEC)
    assert enc_scores.shape == (B, H, S_DEC, S_ENC)

    # numerical sanity check against a pure-JAX reference
    r_out, r_s1, r_s2 = _ref_decoder_layer(
        dec_inp, enc_out, params, self_attn_mask, None, H)
    for got, want, name in ((out, r_out, "out"),
                            (self_scores, r_s1, "self_scores"),
                            (enc_scores, r_s2, "enc_scores")):
        err = float(jnp.max(jnp.abs(got - want)))
        assert err < 2e-3, f"{name} mismatch: max abs err {err}"

    print("KERNEL_OK")
</pallas_src>

<mosaic_0001>
module attributes {stable_mosaic.version = 11 : i64} {
  func.func @_matmul_bias_kernel(%arg0: i32, %arg1: i32, %arg2: i32, %arg3: memref<16x32xf32, #tpu.memory_space<vmem>>, %arg4: memref<32x96xf32, #tpu.memory_space<vmem>>, %arg5: memref<1x96xf32, #tpu.memory_space<vmem>>, %arg6: memref<16x96xf32, #tpu.memory_space<vmem>>, %arg7: memref<16x96xf32, #tpu.memory_space<vmem>>) attributes {dimension_semantics = [#tpu.dimension_semantics<parallel>, #tpu.dimension_semantics<parallel>, #tpu.dimension_semantics<arbitrary>], iteration_bounds = array<i64: 1, 1, 1>, scalar_prefetch = 0 : i64, scratch_operands = 1 : i64, tpu.core_type = #tpu.core_type<tc>, window_params = [{transform_indices = @transform_0, window_bounds = array<i64: 16, 32>}, {transform_indices = @transform_1, window_bounds = array<i64: 32, 96>}, {transform_indices = @transform_2, window_bounds = array<i64: 1, 96>}, {transform_indices = @transform_3, window_bounds = array<i64: 16, 96>}]} {
    %c0_i32 = arith.constant 0 : i32
    %0 = arith.cmpi eq, %arg2, %c0_i32 : i32
    %1 = arith.extui %0 : i1 to i32
    %c0_i32_0 = arith.constant 0 : i32
    %2 = arith.cmpi ne, %1, %c0_i32_0 : i32
    scf.if %2 {
      %cst_10 = arith.constant 0.000000e+00 : f32
      %12 = vector.broadcast %cst_10 : f32 to vector<16x96xf32>
      %c0_11 = arith.constant 0 : index
      %c0_12 = arith.constant 0 : index
      %13 = vector.load %arg7[%c0_11, %c0_12] : memref<16x96xf32, #tpu.memory_space<vmem>>, vector<16x96xf32>
      tpu.vector_store %arg7[%c0_11, %c0_12], %12 {strides = array<i32>} : memref<16x96xf32, #tpu.memory_space<vmem>>, vector<16x96xf32>,
    } else {
    }
    %c0 = arith.constant 0 : index
    %c0_1 = arith.constant 0 : index
    %3 = vector.load %arg7[%c0, %c0_1] : memref<16x96xf32, #tpu.memory_space<vmem>>, vector<16x96xf32>
    %c0_2 = arith.constant 0 : index
    %c0_3 = arith.constant 0 : index
    %4 = vector.load %arg3[%c0_2, %c0_3] : memref<16x32xf32, #tpu.memory_space<vmem>>, vector<16x32xf32>
    %c0_4 = arith.constant 0 : index
    %c0_5 = arith.constant 0 : index
    %5 = vector.load %arg4[%c0_4, %c0_5] : memref<32x96xf32, #tpu.memory_space<vmem>>, vector<32x96xf32>
    %cst = arith.constant dense<0.000000e+00> : vector<16x96xf32>
    %6 = tpu.matmul %4, %5, %cst {dimension_numbers = #tpu.dot_dimension_numbers<[1], [0], [0], [1], [0, 0, 1, 1], [], []>} : vector<16x32xf32>, vector<32x96xf32>, vector<16x96xf32> -> vector<16x96xf32>
    %7 = arith.addf %3, %6 : vector<16x96xf32>
    %c0_6 = arith.constant 0 : index
    %c0_7 = arith.constant 0 : index
    %8 = vector.load %arg7[%c0_6, %c0_7] : memref<16x96xf32, #tpu.memory_space<vmem>>, vector<16x96xf32>
    tpu.vector_store %arg7[%c0_6, %c0_7], %7 {strides = array<i32>} : memref<16x96xf32, #tpu.memory_space<vmem>>, vector<16x96xf32>,
    %c0_i32_8 = arith.constant 0 : i32
    %9 = arith.cmpi eq, %arg2, %c0_i32_8 : i32
    %10 = arith.extui %9 : i1 to i32
    %c0_i32_9 = arith.constant 0 : i32
    %11 = arith.cmpi ne, %10, %c0_i32_9 : i32
    scf.if %11 {
      %c0_10 = arith.constant 0 : index
      %c0_11 = arith.constant 0 : index
      %12 = vector.load %arg7[%c0_10, %c0_11] : memref<16x96xf32, #tpu.memory_space<vmem>>, vector<16x96xf32>
      %c0_12 = arith.constant 0 : index
      %c0_13 = arith.constant 0 : index
      %13 = vector.load %arg5[%c0_12, %c0_13] : memref<1x96xf32, #tpu.memory_space<vmem>>, vector<1x96xf32>
      %14 = vector.broadcast %13 : vector<1x96xf32> to vector<16x96xf32>
      %15 = arith.addf %12, %14 : vector<16x96xf32>
      %c0_14 = arith.constant 0 : index
      %c0_15 = arith.constant 0 : index
      %16 = vector.load %arg6[%c0_14, %c0_15] : memref<16x96xf32, #tpu.memory_space<vmem>>, vector<16x96xf32>
      tpu.vector_store %arg6[%c0_14, %c0_15], %15 {strides = array<i32>} : memref<16x96xf32, #tpu.memory_space<vmem>>, vector<16x96xf32>,
    } else {
    }
    return
  }
  func.func @transform_0(%arg0: i32, %arg1: i32, %arg2: i32) -> (i32, i32) {
    %c0_i32 = arith.constant 0 : i32
    return %arg0, %arg2 : i32, i32
  }
  func.func @transform_1(%arg0: i32, %arg1: i32, %arg2: i32) -> (i32, i32) {
    %c0_i32 = arith.constant 0 : i32
    return %arg2, %arg1 : i32, i32
  }
  func.func @transform_2(%arg0: i32, %arg1: i32, %arg2: i32) -> (i32, i32) {
    %c0_i32 = arith.constant 0 : i32
    %c0_i32_0 = arith.constant 0 : i32
    return %c0_i32, %arg1 : i32, i32
  }
  func.func @transform_3(%arg0: i32, %arg1: i32, %arg2: i32) -> (i32, i32) {
    %c0_i32 = arith.constant 0 : i32
    return %arg0, %arg1 : i32, i32
  }
}

module attributes {stable_mosaic.version = 11 : i64} {
  func.func @_matmul_res_ln_kernel(%arg0: i32, %arg1: i32, %arg2: memref<16x32xf32, #tpu.memory_space<vmem>>, %arg3: memref<32x32xf32, #tpu.memory_space<vmem>>, %arg4: memref<1x32xf32, #tpu.memory_space<vmem>>, %arg5: memref<16x32xf32, #tpu.memory_space<vmem>>, %arg6: memref<1x32xf32, #tpu.memory_space<vmem>>, %arg7: memref<1x32xf32, #tpu.memory_space<vmem>>, %arg8: memref<16x32xf32, #tpu.memory_space<vmem>>, %arg9: memref<16x32xf32, #tpu.memory_space<vmem>>) attributes {dimension_semantics = [#tpu.dimension_semantics<parallel>, #tpu.dimension_semantics<arbitrary>], iteration_bounds = array<i64: 1, 1>, scalar_prefetch = 0 : i64, scratch_operands = 1 : i64, tpu.core_type = #tpu.core_type<tc>, window_params = [{transform_indices = @transform_0, window_bounds = array<i64: 16, 32>}, {transform_indices = @transform_1, window_bounds = array<i64: 32, 32>}, {pipeline_mode = #tpu.pipeline_mode<synchronous>, transform_indices = @transform_2, window_bounds = array<i64: 1, 32>}, {transform_indices = @transform_3, window_bounds = array<i64: 16, 32>}, {pipeline_mode = #tpu.pipeline_mode<synchronous>, transform_indices = @transform_4, window_bounds = array<i64: 1, 32>}, {pipeline_mode = #tpu.pipeline_mode<synchronous>, transform_indices = @transform_5, window_bounds = array<i64: 1, 32>}, {transform_indices = @transform_6, window_bounds = array<i64: 16, 32>}]} {
    %c0_i32 = arith.constant 0 : i32
    %0 = arith.cmpi eq, %arg1, %c0_i32 : i32
    %1 = arith.extui %0 : i1 to i32
    %c0_i32_0 = arith.constant 0 : i32
    %2 = arith.cmpi ne, %1, %c0_i32_0 : i32
    scf.if %2 {
      %cst_10 = arith.constant 0.000000e+00 : f32
      %12 = vector.broadcast %cst_10 : f32 to vector<16x32xf32>
      %c0_11 = arith.constant 0 : index
      %c0_12 = arith.constant 0 : index
      %13 = vector.load %arg9[%c0_11, %c0_12] : memref<16x32xf32, #tpu.memory_space<vmem>>, vector<16x32xf32>
      tpu.vector_store %arg9[%c0_11, %c0_12], %12 {strides = array<i32>} : memref<16x32xf32, #tpu.memory_space<vmem>>, vector<16x32xf32>,
    } else {
    }
    %c0 = arith.constant 0 : index
    %c0_1 = arith.constant 0 : index
    %3 = vector.load %arg9[%c0, %c0_1] : memref<16x32xf32, #tpu.memory_space<vmem>>, vector<16x32xf32>
    %c0_2 = arith.constant 0 : index
    %c0_3 = arith.constant 0 : index
    %4 = vector.load %arg2[%c0_2, %c0_3] : memref<16x32xf32, #tpu.memory_space<vmem>>, vector<16x32xf32>
    %c0_4 = arith.constant 0 : index
    %c0_5 = arith.constant 0 : index
    %5 = vector.load %arg3[%c0_4, %c0_5] : memref<32x32xf32, #tpu.memory_space<vmem>>, vector<32x32xf32>
    %cst = arith.constant dense<0.000000e+00> : vector<16x32xf32>
    %6 = tpu.matmul %4, %5, %cst {dimension_numbers = #tpu.dot_dimension_numbers<[1], [0], [0], [1], [0, 0, 1, 1], [], []>} : vector<16x32xf32>, vector<32x32xf32>, vector<16x32xf32> -> vector<16x32xf32>
    %7 = arith.addf %3, %6 : vector<16x32xf32>
    %c0_6 = arith.constant 0 : index
    %c0_7 = arith.constant 0 : index
    %8 = vector.load %arg9[%c0_6, %c0_7] : memref<16x32xf32, #tpu.memory_space<vmem>>, vector<16x32xf32>
    tpu.vector_store %arg9[%c0_6, %c0_7], %7 {strides = array<i32>} : memref<16x32xf32, #tpu.memory_space<vmem>>, vector<16x32xf32>,
    %c0_i32_8 = arith.constant 0 : i32
    %9 = arith.cmpi eq, %arg1, %c0_i32_8 : i32
    %10 = arith.extui %9 : i1 to i32
    %c0_i32_9 = arith.constant 0 : i32
    %11 = arith.cmpi ne, %10, %c0_i32_9 : i32
    scf.if %11 {
      %c0_10 = arith.constant 0 : index
      %c0_11 = arith.constant 0 : index
      %12 = vector.load %arg9[%c0_10, %c0_11] : memref<16x32xf32, #tpu.memory_space<vmem>>, vector<16x32xf32>
      %c0_12 = arith.constant 0 : index
      %c0_13 = arith.constant 0 : index
      %13 = vector.load %arg4[%c0_12, %c0_13] : memref<1x32xf32, #tpu.memory_space<vmem>>, vector<1x32xf32>
      %14 = vector.broadcast %13 : vector<1x32xf32> to vector<16x32xf32>
      %15 = arith.addf %12, %14 : vector<16x32xf32>
      %c0_14 = arith.constant 0 : index
      %c0_15 = arith.constant 0 : index
      %16 = vector.load %arg5[%c0_14, %c0_15] : memref<16x32xf32, #tpu.memory_space<vmem>>, vector<16x32xf32>
      %17 = arith.addf %15, %16 : vector<16x32xf32>
      %c0_16 = arith.constant 0 : index
      %c0_17 = arith.constant 0 : index
      %18 = vector.load %arg6[%c0_16, %c0_17] : memref<1x32xf32, #tpu.memory_space<vmem>>, vector<1x32xf32>
      %c0_18 = arith.constant 0 : index
      %c0_19 = arith.constant 0 : index
      %19 = vector.load %arg7[%c0_18, %c0_19] : memref<1x32xf32, #tpu.memory_space<vmem>>, vector<1x32xf32>
      %cst_20 = arith.constant dense<0.000000e+00> : vector<16xf32>
      %20 = vector.multi_reduction <add>, %17, %cst_20 [1] : vector<16x32xf32> to vector<16xf32>
      %21 = vector.shape_cast %20 : vector<16xf32> to vector<16x1xf32>
      %cst_21 = arith.constant 3.200000e+01 : f32
      %22 = vector.broadcast %cst_21 : f32 to vector<16x1xf32>
      %23 = arith.divf %21, %22 : vector<16x1xf32>
      %24 = vector.broadcast %23 : vector<16x1xf32> to vector<16x32xf32>
      %25 = arith.subf %17, %24 : vector<16x32xf32>
      %26 = arith.mulf %25, %25 : vector<16x32xf32>
      %cst_22 = arith.constant dense<0.000000e+00> : vector<16xf32>
      %27 = vector.multi_reduction <add>, %26, %cst_22 [1] : vector<16x32xf32> to vector<16xf32>
      %28 = vector.shape_cast %27 : vector<16xf32> to vector<16x1xf32>
      %cst_23 = arith.constant 3.200000e+01 : f32
      %29 = vector.broadcast %cst_23 : f32 to vector<16x1xf32>
      %30 = arith.divf %28, %29 : vector<16x1xf32>
      %31 = vector.broadcast %23 : vector<16x1xf32> to vector<16x32xf32>
      %32 = arith.subf %17, %31 : vector<16x32xf32>
      %cst_24 = arith.constant 9.99999974E-6 : f32
      %33 = vector.broadcast %cst_24 : f32 to vector<16x1xf32>
      %34 = arith.addf %30, %33 : vector<16x1xf32>
      %35 = math.rsqrt %34 : vector<16x1xf32>
      %36 = vector.broadcast %35 : vector<16x1xf32> to vector<16x32xf32>
      %37 = arith.mulf %32, %36 : vector<16x32xf32>
      %38 = vector.broadcast %18 : vector<1x32xf32> to vector<16x32xf32>
      %39 = arith.mulf %37, %38 : vector<16x32xf32>
      %40 = vector.broadcast %19 : vector<1x32xf32> to vector<16x32xf32>
      %41 = arith.addf %39, %40 : vector<16x32xf32>
      %c0_25 = arith.constant 0 : index
      %c0_26 = arith.constant 0 : index
      %42 = vector.load %arg8[%c0_25, %c0_26] : memref<16x32xf32, #tpu.memory_space<vmem>>, vector<16x32xf32>
      tpu.vector_store %arg8[%c0_25, %c0_26], %41 {strides = array<i32>} : memref<16x32xf32, #tpu.memory_space<vmem>>, vector<16x32xf32>,
    } else {
    }
    return
  }
  func.func @transform_0(%arg0: i32, %arg1: i32) -> (i32, i32) {
    %c0_i32 = arith.constant 0 : i32
    return %arg0, %arg1 : i32, i32
  }
  func.func @transform_1(%arg0: i32, %arg1: i32) -> (i32, i32) {
    %c0_i32 = arith.constant 0 : i32
    %c0_i32_0 = arith.constant 0 : i32
    return %arg1, %c0_i32 : i32, i32
  }
  func.func @transform_2(%arg0: i32, %arg1: i32) -> (i32, i32) {
    %c0_i32 = arith.constant 0 : i32
    %c0_i32_0 = arith.constant 0 : i32
    %c0_i32_1 = arith.constant 0 : i32
    return %c0_i32, %c0_i32_0 : i32, i32
  }
  func.func @transform_3(%arg0: i32, %arg1: i32) -> (i32, i32) {
    %c0_i32 = arith.constant 0 : i32
    %c0_i32_0 = arith.constant 0 : i32
    return %arg0, %c0_i32 : i32, i32
  }
  func.func @transform_4(%arg0: i32, %arg1: i32) -> (i32, i32) {
    %c0_i32 = arith.constant 0 : i32
    %c0_i32_0 = arith.constant 0 : i32
    %c0_i32_1 = arith.constant 0 : i32
    return %c0_i32, %c0_i32_0 : i32, i32
  }
  func.func @transform_5(%arg0: i32, %arg1: i32) -> (i32, i32) {
    %c0_i32 = arith.constant 0 : i32
    %c0_i32_0 = arith.constant 0 : i32
    %c0_i32_1 = arith.constant 0 : i32
    return %c0_i32, %c0_i32_0 : i32, i32
  }
  func.func @transform_6(%arg0: i32, %arg1: i32) -> (i32, i32) {
    %c0_i32 = arith.constant 0 : i32
    %c0_i32_0 = arith.constant 0 : i32
    return %arg0, %c0_i32 : i32, i32
  }
}

module attributes {stable_mosaic.version = 11 : i64} {
  func.func @_mha_kernel(%arg0: i32, %arg1: i32, %arg2: i32, %arg3: memref<1x1x8x8xf32, #tpu.memory_space<vmem>>, %arg4: memref<1x1x8x8xf32, #tpu.memory_space<vmem>>, %arg5: memref<1x1x8x8xf32, #tpu.memory_space<vmem>>, %arg6: memref<1x1x8x8xi32, #tpu.memory_space<vmem>>, %arg7: memref<1x1x8x8xf32, #tpu.memory_space<vmem>>, %arg8: memref<1x1x8x8xf32, #tpu.memory_space<vmem>>) attributes {dimension_semantics = [#tpu.dimension_semantics<parallel>, #tpu.dimension_semantics<parallel>, #tpu.dimension_semantics<parallel>], iteration_bounds = array<i64: 2, 4, 1>, scalar_prefetch = 0 : i64, scratch_operands = 0 : i64, tpu.core_type = #tpu.core_type<tc>, window_params = [{transform_indices = @transform_0, window_bounds = array<i64: 1, 1, 8, 8>}, {transform_indices = @transform_1, window_bounds = array<i64: 1, 1, 8, 8>}, {transform_indices = @transform_2, window_bounds = array<i64: 1, 1, 8, 8>}, {transform_indices = @transform_3, window_bounds = array<i64: 1, 1, 8, 8>}, {transform_indices = @transform_4, window_bounds = array<i64: 1, 1, 8, 8>}, {transform_indices = @transform_5, window_bounds = array<i64: 1, 1, 8, 8>}]} {
    %c0 = arith.constant 0 : index
    %c0_0 = arith.constant 0 : index
    %c0_1 = arith.constant 0 : index
    %c0_2 = arith.constant 0 : index
    %0 = vector.load %arg3[%c0, %c0_0, %c0_1, %c0_2] : memref<1x1x8x8xf32, #tpu.memory_space<vmem>>, vector<1x1x8x8xf32>
    %1 = vector.shape_cast %0 : vector<1x1x8x8xf32> to vector<8x8xf32>
    %c0_3 = arith.constant 0 : index
    %c0_4 = arith.constant 0 : index
    %c0_5 = arith.constant 0 : index
    %c0_6 = arith.constant 0 : index
    %2 = vector.load %arg4[%c0_3, %c0_4, %c0_5, %c0_6] : memref<1x1x8x8xf32, #tpu.memory_space<vmem>>, vector<1x1x8x8xf32>
    %3 = vector.shape_cast %2 : vector<1x1x8x8xf32> to vector<8x8xf32>
    %c0_7 = arith.constant 0 : index
    %c0_8 = arith.constant 0 : index
    %c0_9 = arith.constant 0 : index
    %c0_10 = arith.constant 0 : index
    %4 = vector.load %arg5[%c0_7, %c0_8, %c0_9, %c0_10] : memref<1x1x8x8xf32, #tpu.memory_space<vmem>>, vector<1x1x8x8xf32>
    %5 = vector.shape_cast %4 : vector<1x1x8x8xf32> to vector<8x8xf32>
    %cst = arith.constant dense<0.000000e+00> : vector<8x8xf32>
    %6 = tpu.matmul %1, %3, %cst {dimension_numbers = #tpu.dot_dimension_numbers<[1], [1], [0], [0], [0, 0, 1, 0], [], []>} : vector<8x8xf32>, vector<8x8xf32>, vector<8x8xf32> -> vector<8x8xf32>
    %cst_11 = arith.constant 0.353553385 : f32
    %7 = vector.broadcast %cst_11 : f32 to vector<8x8xf32>
    %8 = arith.mulf %6, %7 : vector<8x8xf32>
    %c0_12 = arith.constant 0 : index
    %c0_13 = arith.constant 0 : index
    %c0_14 = arith.constant 0 : index
    %c0_15 = arith.constant 0 : index
    %9 = vector.load %arg6[%c0_12, %c0_13, %c0_14, %c0_15] : memref<1x1x8x8xi32, #tpu.memory_space<vmem>>, vector<1x1x8x8xi32>
    %10 = vector.shape_cast %9 : vector<1x1x8x8xi32> to vector<8x8xi32>
    %c0_i32 = arith.constant 0 : i32
    %11 = vector.broadcast %c0_i32 : i32 to vector<8x8xi32>
    %12 = arith.cmpi ne, %10, %11 : vector<8x8xi32>
    %cst_16 = arith.constant -1.000000e+09 : f32
    %13 = vector.broadcast %cst_16 : f32 to vector<8x8xf32>
    %14 = arith.select %12, %8, %13 : vector<8x8xi1>, vector<8x8xf32>
    %cst_17 = arith.constant dense<0xFF800000> : vector<8xf32>
    %15 = vector.multi_reduction <maximumf>, %14, %cst_17 [1] : vector<8x8xf32> to vector<8xf32>
    %16 = vector.shape_cast %15 : vector<8xf32> to vector<8x1xf32>
    %17 = vector.broadcast %16 : vector<8x1xf32> to vector<8x8xf32>
    %18 = arith.subf %14, %17 : vector<8x8xf32>
    %19 = math.exp %18 : vector<8x8xf32>
    %cst_18 = arith.constant dense<0.000000e+00> : vector<8xf32>
    %20 = vector.multi_reduction <add>, %19, %cst_18 [1] : vector<8x8xf32> to vector<8xf32>
    %21 = vector.shape_cast %20 : vector<8xf32> to vector<8x1xf32>
    %22 = vector.broadcast %21 : vector<8x1xf32> to vector<8x8xf32>
    %23 = arith.divf %19, %22 : vector<8x8xf32>
    %c0_19 = arith.constant 0 : index
    %c0_20 = arith.constant 0 : index
    %c0_21 = arith.constant 0 : index
    %c0_22 = arith.constant 0 : index
    %24 = vector.load %arg8[%c0_19, %c0_20, %c0_21, %c0_22] : memref<1x1x8x8xf32, #tpu.memory_space<vmem>>, vector<1x1x8x8xf32>
    %25 = vector.shape_cast %24 : vector<1x1x8x8xf32> to vector<8x8xf32>
    %26 = vector.shape_cast %23 : vector<8x8xf32> to vector<1x1x8x8xf32>
    tpu.vector_store %arg8[%c0_19, %c0_20, %c0_21, %c0_22], %26 {strides = array<i32>} : memref<1x1x8x8xf32, #tpu.memory_space<vmem>>, vector<1x1x8x8xf32>,
    %cst_23 = arith.constant dense<0.000000e+00> : vector<8x8xf32>
    %27 = tpu.matmul %23, %5, %cst_23 {dimension_numbers = #tpu.dot_dimension_numbers<[1], [0], [0], [1], [0, 0, 1, 1], [], []>} : vector<8x8xf32>, vector<8x8xf32>, vector<8x8xf32> -> vector<8x8xf32>
    %c0_24 = arith.constant 0 : index
    %c0_25 = arith.constant 0 : index
    %c0_26 = arith.constant 0 : index
    %c0_27 = arith.constant 0 : index
    %28 = vector.load %arg7[%c0_24, %c0_25, %c0_26, %c0_27] : memref<1x1x8x8xf32, #tpu.memory_space<vmem>>, vector<1x1x8x8xf32>
    %29 = vector.shape_cast %28 : vector<1x1x8x8xf32> to vector<8x8xf32>
    %30 = vector.shape_cast %27 : vector<8x8xf32> to vector<1x1x8x8xf32>
    tpu.vector_store %arg7[%c0_24, %c0_25, %c0_26, %c0_27], %30 {strides = array<i32>} : memref<1x1x8x8xf32, #tpu.memory_space<vmem>>, vector<1x1x8x8xf32>,
    return
  }
  func.func @transform_0(%arg0: i32, %arg1: i32, %arg2: i32) -> (i32, i32, i32, i32) {
    %c0_i32 = arith.constant 0 : i32
    %c0_i32_0 = arith.constant 0 : i32
    return %arg0, %arg1, %arg2, %c0_i32 : i32, i32, i32, i32
  }
  func.func @transform_1(%arg0: i32, %arg1: i32, %arg2: i32) -> (i32, i32, i32, i32) {
    %c0_i32 = arith.constant 0 : i32
    %c0_i32_0 = arith.constant 0 : i32
    %c0_i32_1 = arith.constant 0 : i32
    return %arg0, %arg1, %c0_i32, %c0_i32_0 : i32, i32, i32, i32
  }
  func.func @transform_2(%arg0: i32, %arg1: i32, %arg2: i32) -> (i32, i32, i32, i32) {
    %c0_i32 = arith.constant 0 : i32
    %c0_i32_0 = arith.constant 0 : i32
    %c0_i32_1 = arith.constant 0 : i32
    return %arg0, %arg1, %c0_i32, %c0_i32_0 : i32, i32, i32, i32
  }
  func.func @transform_3(%arg0: i32, %arg1: i32, %arg2: i32) -> (i32, i32, i32, i32) {
    %c0_i32 = arith.constant 0 : i32
    %c0_i32_0 = arith.constant 0 : i32
    %c0_i32_1 = arith.constant 0 : i32
    %c0_i32_2 = arith.constant 0 : i32
    return %c0_i32, %c0_i32_0, %arg2, %c0_i32_1 : i32, i32, i32, i32
  }
  func.func @transform_4(%arg0: i32, %arg1: i32, %arg2: i32) -> (i32, i32, i32, i32) {
    %c0_i32 = arith.constant 0 : i32
    %c0_i32_0 = arith.constant 0 : i32
    return %arg0, %arg1, %arg2, %c0_i32 : i32, i32, i32, i32
  }
  func.func @transform_5(%arg0: i32, %arg1: i32, %arg2: i32) -> (i32, i32, i32, i32) {
    %c0_i32 = arith.constant 0 : i32
    %c0_i32_0 = arith.constant 0 : i32
    return %arg0, %arg1, %arg2, %c0_i32 : i32, i32, i32, i32
  }
}

module attributes {stable_mosaic.version = 11 : i64} {
  func.func @_matmul_bias_kernel(%arg0: i32, %arg1: i32, %arg2: i32, %arg3: memref<16x32xf32, #tpu.memory_space<vmem>>, %arg4: memref<32x32xf32, #tpu.memory_space<vmem>>, %arg5: memref<1x32xf32, #tpu.memory_space<vmem>>, %arg6: memref<16x32xf32, #tpu.memory_space<vmem>>, %arg7: memref<16x32xf32, #tpu.memory_space<vmem>>) attributes {dimension_semantics = [#tpu.dimension_semantics<parallel>, #tpu.dimension_semantics<parallel>, #tpu.dimension_semantics<arbitrary>], iteration_bounds = array<i64: 1, 1, 1>, scalar_prefetch = 0 : i64, scratch_operands = 1 : i64, tpu.core_type = #tpu.core_type<tc>, window_params = [{transform_indices = @transform_0, window_bounds = array<i64: 16, 32>}, {transform_indices = @transform_1, window_bounds = array<i64: 32, 32>}, {transform_indices = @transform_2, window_bounds = array<i64: 1, 32>}, {transform_indices = @transform_3, window_bounds = array<i64: 16, 32>}]} {
    %c0_i32 = arith.constant 0 : i32
    %0 = arith.cmpi eq, %arg2, %c0_i32 : i32
    %1 = arith.extui %0 : i1 to i32
    %c0_i32_0 = arith.constant 0 : i32
    %2 = arith.cmpi ne, %1, %c0_i32_0 : i32
    scf.if %2 {
      %cst_10 = arith.constant 0.000000e+00 : f32
      %12 = vector.broadcast %cst_10 : f32 to vector<16x32xf32>
      %c0_11 = arith.constant 0 : index
      %c0_12 = arith.constant 0 : index
      %13 = vector.load %arg7[%c0_11, %c0_12] : memref<16x32xf32, #tpu.memory_space<vmem>>, vector<16x32xf32>
      tpu.vector_store %arg7[%c0_11, %c0_12], %12 {strides = array<i32>} : memref<16x32xf32, #tpu.memory_space<vmem>>, vector<16x32xf32>,
    } else {
    }
    %c0 = arith.constant 0 : index
    %c0_1 = arith.constant 0 : index
    %3 = vector.load %arg7[%c0, %c0_1] : memref<16x32xf32, #tpu.memory_space<vmem>>, vector<16x32xf32>
    %c0_2 = arith.constant 0 : index
    %c0_3 = arith.constant 0 : index
    %4 = vector.load %arg3[%c0_2, %c0_3] : memref<16x32xf32, #tpu.memory_space<vmem>>, vector<16x32xf32>
    %c0_4 = arith.constant 0 : index
    %c0_5 = arith.constant 0 : index
    %5 = vector.load %arg4[%c0_4, %c0_5] : memref<32x32xf32, #tpu.memory_space<vmem>>, vector<32x32xf32>
    %cst = arith.constant dense<0.000000e+00> : vector<16x32xf32>
    %6 = tpu.matmul %4, %5, %cst {dimension_numbers = #tpu.dot_dimension_numbers<[1], [0], [0], [1], [0, 0, 1, 1], [], []>} : vector<16x32xf32>, vector<32x32xf32>, vector<16x32xf32> -> vector<16x32xf32>
    %7 = arith.addf %3, %6 : vector<16x32xf32>
    %c0_6 = arith.constant 0 : index
    %c0_7 = arith.constant 0 : index
    %8 = vector.load %arg7[%c0_6, %c0_7] : memref<16x32xf32, #tpu.memory_space<vmem>>, vector<16x32xf32>
    tpu.vector_store %arg7[%c0_6, %c0_7], %7 {strides = array<i32>} : memref<16x32xf32, #tpu.memory_space<vmem>>, vector<16x32xf32>,
    %c0_i32_8 = arith.constant 0 : i32
    %9 = arith.cmpi eq, %arg2, %c0_i32_8 : i32
    %10 = arith.extui %9 : i1 to i32
    %c0_i32_9 = arith.constant 0 : i32
    %11 = arith.cmpi ne, %10, %c0_i32_9 : i32
    scf.if %11 {
      %c0_10 = arith.constant 0 : index
      %c0_11 = arith.constant 0 : index
      %12 = vector.load %arg7[%c0_10, %c0_11] : memref<16x32xf32, #tpu.memory_space<vmem>>, vector<16x32xf32>
      %c0_12 = arith.constant 0 : index
      %c0_13 = arith.constant 0 : index
      %13 = vector.load %arg5[%c0_12, %c0_13] : memref<1x32xf32, #tpu.memory_space<vmem>>, vector<1x32xf32>
      %14 = vector.broadcast %13 : vector<1x32xf32> to vector<16x32xf32>
      %15 = arith.addf %12, %14 : vector<16x32xf32>
      %c0_14 = arith.constant 0 : index
      %c0_15 = arith.constant 0 : index
      %16 = vector.load %arg6[%c0_14, %c0_15] : memref<16x32xf32, #tpu.memory_space<vmem>>, vector<16x32xf32>
      tpu.vector_store %arg6[%c0_14, %c0_15], %15 {strides = array<i32>} : memref<16x32xf32, #tpu.memory_space<vmem>>, vector<16x32xf32>,
    } else {
    }
    return
  }
  func.func @transform_0(%arg0: i32, %arg1: i32, %arg2: i32) -> (i32, i32) {
    %c0_i32 = arith.constant 0 : i32
    return %arg0, %arg2 : i32, i32
  }
  func.func @transform_1(%arg0: i32, %arg1: i32, %arg2: i32) -> (i32, i32) {
    %c0_i32 = arith.constant 0 : i32
    return %arg2, %arg1 : i32, i32
  }
  func.func @transform_2(%arg0: i32, %arg1: i32, %arg2: i32) -> (i32, i32) {
    %c0_i32 = arith.constant 0 : i32
    %c0_i32_0 = arith.constant 0 : i32
    return %c0_i32, %arg1 : i32, i32
  }
  func.func @transform_3(%arg0: i32, %arg1: i32, %arg2: i32) -> (i32, i32) {
    %c0_i32 = arith.constant 0 : i32
    return %arg0, %arg1 : i32, i32
  }
}

module attributes {stable_mosaic.version = 11 : i64} {
  func.func @_matmul_bias_kernel(%arg0: i32, %arg1: i32, %arg2: i32, %arg3: memref<16x32xf32, #tpu.memory_space<vmem>>, %arg4: memref<32x64xf32, #tpu.memory_space<vmem>>, %arg5: memref<1x64xf32, #tpu.memory_space<vmem>>, %arg6: memref<16x64xf32, #tpu.memory_space<vmem>>, %arg7: memref<16x64xf32, #tpu.memory_space<vmem>>) attributes {dimension_semantics = [#tpu.dimension_semantics<parallel>, #tpu.dimension_semantics<parallel>, #tpu.dimension_semantics<arbitrary>], iteration_bounds = array<i64: 1, 1, 1>, scalar_prefetch = 0 : i64, scratch_operands = 1 : i64, tpu.core_type = #tpu.core_type<tc>, window_params = [{transform_indices = @transform_0, window_bounds = array<i64: 16, 32>}, {transform_indices = @transform_1, window_bounds = array<i64: 32, 64>}, {transform_indices = @transform_2, window_bounds = array<i64: 1, 64>}, {transform_indices = @transform_3, window_bounds = array<i64: 16, 64>}]} {
    %c0_i32 = arith.constant 0 : i32
    %0 = arith.cmpi eq, %arg2, %c0_i32 : i32
    %1 = arith.extui %0 : i1 to i32
    %c0_i32_0 = arith.constant 0 : i32
    %2 = arith.cmpi ne, %1, %c0_i32_0 : i32
    scf.if %2 {
      %cst_10 = arith.constant 0.000000e+00 : f32
      %12 = vector.broadcast %cst_10 : f32 to vector<16x64xf32>
      %c0_11 = arith.constant 0 : index
      %c0_12 = arith.constant 0 : index
      %13 = vector.load %arg7[%c0_11, %c0_12] : memref<16x64xf32, #tpu.memory_space<vmem>>, vector<16x64xf32>
      tpu.vector_store %arg7[%c0_11, %c0_12], %12 {strides = array<i32>} : memref<16x64xf32, #tpu.memory_space<vmem>>, vector<16x64xf32>,
    } else {
    }
    %c0 = arith.constant 0 : index
    %c0_1 = arith.constant 0 : index
    %3 = vector.load %arg7[%c0, %c0_1] : memref<16x64xf32, #tpu.memory_space<vmem>>, vector<16x64xf32>
    %c0_2 = arith.constant 0 : index
    %c0_3 = arith.constant 0 : index
    %4 = vector.load %arg3[%c0_2, %c0_3] : memref<16x32xf32, #tpu.memory_space<vmem>>, vector<16x32xf32>
    %c0_4 = arith.constant 0 : index
    %c0_5 = arith.constant 0 : index
    %5 = vector.load %arg4[%c0_4, %c0_5] : memref<32x64xf32, #tpu.memory_space<vmem>>, vector<32x64xf32>
    %cst = arith.constant dense<0.000000e+00> : vector<16x64xf32>
    %6 = tpu.matmul %4, %5, %cst {dimension_numbers = #tpu.dot_dimension_numbers<[1], [0], [0], [1], [0, 0, 1, 1], [], []>} : vector<16x32xf32>, vector<32x64xf32>, vector<16x64xf32> -> vector<16x64xf32>
    %7 = arith.addf %3, %6 : vector<16x64xf32>
    %c0_6 = arith.constant 0 : index
    %c0_7 = arith.constant 0 : index
    %8 = vector.load %arg7[%c0_6, %c0_7] : memref<16x64xf32, #tpu.memory_space<vmem>>, vector<16x64xf32>
    tpu.vector_store %arg7[%c0_6, %c0_7], %7 {strides = array<i32>} : memref<16x64xf32, #tpu.memory_space<vmem>>, vector<16x64xf32>,
    %c0_i32_8 = arith.constant 0 : i32
    %9 = arith.cmpi eq, %arg2, %c0_i32_8 : i32
    %10 = arith.extui %9 : i1 to i32
    %c0_i32_9 = arith.constant 0 : i32
    %11 = arith.cmpi ne, %10, %c0_i32_9 : i32
    scf.if %11 {
      %c0_10 = arith.constant 0 : index
      %c0_11 = arith.constant 0 : index
      %12 = vector.load %arg7[%c0_10, %c0_11] : memref<16x64xf32, #tpu.memory_space<vmem>>, vector<16x64xf32>
      %c0_12 = arith.constant 0 : index
      %c0_13 = arith.constant 0 : index
      %13 = vector.load %arg5[%c0_12, %c0_13] : memref<1x64xf32, #tpu.memory_space<vmem>>, vector<1x64xf32>
      %14 = vector.broadcast %13 : vector<1x64xf32> to vector<16x64xf32>
      %15 = arith.addf %12, %14 : vector<16x64xf32>
      %c0_14 = arith.constant 0 : index
      %c0_15 = arith.constant 0 : index
      %16 = vector.load %arg6[%c0_14, %c0_15] : memref<16x64xf32, #tpu.memory_space<vmem>>, vector<16x64xf32>
      tpu.vector_store %arg6[%c0_14, %c0_15], %15 {strides = array<i32>} : memref<16x64xf32, #tpu.memory_space<vmem>>, vector<16x64xf32>,
    } else {
    }
    return
  }
  func.func @transform_0(%arg0: i32, %arg1: i32, %arg2: i32) -> (i32, i32) {
    %c0_i32 = arith.constant 0 : i32
    return %arg0, %arg2 : i32, i32
  }
  func.func @transform_1(%arg0: i32, %arg1: i32, %arg2: i32) -> (i32, i32) {
    %c0_i32 = arith.constant 0 : i32
    return %arg2, %arg1 : i32, i32
  }
  func.func @transform_2(%arg0: i32, %arg1: i32, %arg2: i32) -> (i32, i32) {
    %c0_i32 = arith.constant 0 : i32
    %c0_i32_0 = arith.constant 0 : i32
    return %c0_i32, %arg1 : i32, i32
  }
  func.func @transform_3(%arg0: i32, %arg1: i32, %arg2: i32) -> (i32, i32) {
    %c0_i32 = arith.constant 0 : i32
    return %arg0, %arg1 : i32, i32
  }
}

module attributes {stable_mosaic.version = 11 : i64} {
  func.func @_mha_kernel(%arg0: i32, %arg1: i32, %arg2: i32, %arg3: memref<1x1x8x8xf32, #tpu.memory_space<vmem>>, %arg4: memref<1x1x8x8xf32, #tpu.memory_space<vmem>>, %arg5: memref<1x1x8x8xf32, #tpu.memory_space<vmem>>, %arg6: memref<1x1x8x8xf32, #tpu.memory_space<vmem>>, %arg7: memref<1x1x8x8xf32, #tpu.memory_space<vmem>>) attributes {dimension_semantics = [#tpu.dimension_semantics<parallel>, #tpu.dimension_semantics<parallel>, #tpu.dimension_semantics<parallel>], iteration_bounds = array<i64: 2, 4, 1>, scalar_prefetch = 0 : i64, scratch_operands = 0 : i64, tpu.core_type = #tpu.core_type<tc>, window_params = [{transform_indices = @transform_0, window_bounds = array<i64: 1, 1, 8, 8>}, {transform_indices = @transform_1, window_bounds = array<i64: 1, 1, 8, 8>}, {transform_indices = @transform_2, window_bounds = array<i64: 1, 1, 8, 8>}, {transform_indices = @transform_3, window_bounds = array<i64: 1, 1, 8, 8>}, {transform_indices = @transform_4, window_bounds = array<i64: 1, 1, 8, 8>}]} {
    %c0 = arith.constant 0 : index
    %c0_0 = arith.constant 0 : index
    %c0_1 = arith.constant 0 : index
    %c0_2 = arith.constant 0 : index
    %0 = vector.load %arg3[%c0, %c0_0, %c0_1, %c0_2] : memref<1x1x8x8xf32, #tpu.memory_space<vmem>>, vector<1x1x8x8xf32>
    %1 = vector.shape_cast %0 : vector<1x1x8x8xf32> to vector<8x8xf32>
    %c0_3 = arith.constant 0 : index
    %c0_4 = arith.constant 0 : index
    %c0_5 = arith.constant 0 : index
    %c0_6 = arith.constant 0 : index
    %2 = vector.load %arg4[%c0_3, %c0_4, %c0_5, %c0_6] : memref<1x1x8x8xf32, #tpu.memory_space<vmem>>, vector<1x1x8x8xf32>
    %3 = vector.shape_cast %2 : vector<1x1x8x8xf32> to vector<8x8xf32>
    %c0_7 = arith.constant 0 : index
    %c0_8 = arith.constant 0 : index
    %c0_9 = arith.constant 0 : index
    %c0_10 = arith.constant 0 : index
    %4 = vector.load %arg5[%c0_7, %c0_8, %c0_9, %c0_10] : memref<1x1x8x8xf32, #tpu.memory_space<vmem>>, vector<1x1x8x8xf32>
    %5 = vector.shape_cast %4 : vector<1x1x8x8xf32> to vector<8x8xf32>
    %cst = arith.constant dense<0.000000e+00> : vector<8x8xf32>
    %6 = tpu.matmul %1, %3, %cst {dimension_numbers = #tpu.dot_dimension_numbers<[1], [1], [0], [0], [0, 0, 1, 0], [], []>} : vector<8x8xf32>, vector<8x8xf32>, vector<8x8xf32> -> vector<8x8xf32>
    %cst_11 = arith.constant 0.353553385 : f32
    %7 = vector.broadcast %cst_11 : f32 to vector<8x8xf32>
    %8 = arith.mulf %6, %7 : vector<8x8xf32>
    %cst_12 = arith.constant dense<0xFF800000> : vector<8xf32>
    %9 = vector.multi_reduction <maximumf>, %8, %cst_12 [1] : vector<8x8xf32> to vector<8xf32>
    %10 = vector.shape_cast %9 : vector<8xf32> to vector<8x1xf32>
    %11 = vector.broadcast %10 : vector<8x1xf32> to vector<8x8xf32>
    %12 = arith.subf %8, %11 : vector<8x8xf32>
    %13 = math.exp %12 : vector<8x8xf32>
    %cst_13 = arith.constant dense<0.000000e+00> : vector<8xf32>
    %14 = vector.multi_reduction <add>, %13, %cst_13 [1] : vector<8x8xf32> to vector<8xf32>
    %15 = vector.shape_cast %14 : vector<8xf32> to vector<8x1xf32>
    %16 = vector.broadcast %15 : vector<8x1xf32> to vector<8x8xf32>
    %17 = arith.divf %13, %16 : vector<8x8xf32>
    %c0_14 = arith.constant 0 : index
    %c0_15 = arith.constant 0 : index
    %c0_16 = arith.constant 0 : index
    %c0_17 = arith.constant 0 : index
    %18 = vector.load %arg7[%c0_14, %c0_15, %c0_16, %c0_17] : memref<1x1x8x8xf32, #tpu.memory_space<vmem>>, vector<1x1x8x8xf32>
    %19 = vector.shape_cast %18 : vector<1x1x8x8xf32> to vector<8x8xf32>
    %20 = vector.shape_cast %17 : vector<8x8xf32> to vector<1x1x8x8xf32>
    tpu.vector_store %arg7[%c0_14, %c0_15, %c0_16, %c0_17], %20 {strides = array<i32>} : memref<1x1x8x8xf32, #tpu.memory_space<vmem>>, vector<1x1x8x8xf32>,
    %cst_18 = arith.constant dense<0.000000e+00> : vector<8x8xf32>
    %21 = tpu.matmul %17, %5, %cst_18 {dimension_numbers = #tpu.dot_dimension_numbers<[1], [0], [0], [1], [0, 0, 1, 1], [], []>} : vector<8x8xf32>, vector<8x8xf32>, vector<8x8xf32> -> vector<8x8xf32>
    %c0_19 = arith.constant 0 : index
    %c0_20 = arith.constant 0 : index
    %c0_21 = arith.constant 0 : index
    %c0_22 = arith.constant 0 : index
    %22 = vector.load %arg6[%c0_19, %c0_20, %c0_21, %c0_22] : memref<1x1x8x8xf32, #tpu.memory_space<vmem>>, vector<1x1x8x8xf32>
    %23 = vector.shape_cast %22 : vector<1x1x8x8xf32> to vector<8x8xf32>
    %24 = vector.shape_cast %21 : vector<8x8xf32> to vector<1x1x8x8xf32>
    tpu.vector_store %arg6[%c0_19, %c0_20, %c0_21, %c0_22], %24 {strides = array<i32>} : memref<1x1x8x8xf32, #tpu.memory_space<vmem>>, vector<1x1x8x8xf32>,
    return
  }
  func.func @transform_0(%arg0: i32, %arg1: i32, %arg2: i32) -> (i32, i32, i32, i32) {
    %c0_i32 = arith.constant 0 : i32
    %c0_i32_0 = arith.constant 0 : i32
    return %arg0, %arg1, %arg2, %c0_i32 : i32, i32, i32, i32
  }
  func.func @transform_1(%arg0: i32, %arg1: i32, %arg2: i32) -> (i32, i32, i32, i32) {
    %c0_i32 = arith.constant 0 : i32
    %c0_i32_0 = arith.constant 0 : i32
    %c0_i32_1 = arith.constant 0 : i32
    return %arg0, %arg1, %c0_i32, %c0_i32_0 : i32, i32, i32, i32
  }
  func.func @transform_2(%arg0: i32, %arg1: i32, %arg2: i32) -> (i32, i32, i32, i32) {
    %c0_i32 = arith.constant 0 : i32
    %c0_i32_0 = arith.constant 0 : i32
    %c0_i32_1 = arith.constant 0 : i32
    return %arg0, %arg1, %c0_i32, %c0_i32_0 : i32, i32, i32, i32
  }
  func.func @transform_3(%arg0: i32, %arg1: i32, %arg2: i32) -> (i32, i32, i32, i32) {
    %c0_i32 = arith.constant 0 : i32
    %c0_i32_0 = arith.constant 0 : i32
    return %arg0, %arg1, %arg2, %c0_i32 : i32, i32, i32, i32
  }
  func.func @transform_4(%arg0: i32, %arg1: i32, %arg2: i32) -> (i32, i32, i32, i32) {
    %c0_i32 = arith.constant 0 : i32
    %c0_i32_0 = arith.constant 0 : i32
    return %arg0, %arg1, %arg2, %c0_i32 : i32, i32, i32, i32
  }
}

module attributes {stable_mosaic.version = 11 : i64} {
  func.func @_ffn_res_ln_kernel(%arg0: i32, %arg1: memref<16x32xf32, #tpu.memory_space<vmem>>, %arg2: memref<32x64xf32, #tpu.memory_space<vmem>>, %arg3: memref<1x64xf32, #tpu.memory_space<vmem>>, %arg4: memref<64x32xf32, #tpu.memory_space<vmem>>, %arg5: memref<1x32xf32, #tpu.memory_space<vmem>>, %arg6: memref<1x32xf32, #tpu.memory_space<vmem>>, %arg7: memref<1x32xf32, #tpu.memory_space<vmem>>, %arg8: memref<16x32xf32, #tpu.memory_space<vmem>>) attributes {dimension_semantics = [#tpu.dimension_semantics<parallel>], iteration_bounds = array<i64: 1>, scalar_prefetch = 0 : i64, scratch_operands = 0 : i64, tpu.core_type = #tpu.core_type<tc>, window_params = [{transform_indices = @transform_0, window_bounds = array<i64: 16, 32>}, {pipeline_mode = #tpu.pipeline_mode<synchronous>, transform_indices = @transform_1, window_bounds = array<i64: 32, 64>}, {pipeline_mode = #tpu.pipeline_mode<synchronous>, transform_indices = @transform_2, window_bounds = array<i64: 1, 64>}, {pipeline_mode = #tpu.pipeline_mode<synchronous>, transform_indices = @transform_3, window_bounds = array<i64: 64, 32>}, {pipeline_mode = #tpu.pipeline_mode<synchronous>, transform_indices = @transform_4, window_bounds = array<i64: 1, 32>}, {pipeline_mode = #tpu.pipeline_mode<synchronous>, transform_indices = @transform_5, window_bounds = array<i64: 1, 32>}, {pipeline_mode = #tpu.pipeline_mode<synchronous>, transform_indices = @transform_6, window_bounds = array<i64: 1, 32>}, {transform_indices = @transform_7, window_bounds = array<i64: 16, 32>}]} {
    %c0 = arith.constant 0 : index
    %c0_0 = arith.constant 0 : index
    %0 = vector.load %arg1[%c0, %c0_0] : memref<16x32xf32, #tpu.memory_space<vmem>>, vector<16x32xf32>
    %c0_1 = arith.constant 0 : index
    %c0_2 = arith.constant 0 : index
    %1 = vector.load %arg2[%c0_1, %c0_2] : memref<32x64xf32, #tpu.memory_space<vmem>>, vector<32x64xf32>
    %cst = arith.constant dense<0.000000e+00> : vector<16x64xf32>
    %2 = tpu.matmul %0, %1, %cst {dimension_numbers = #tpu.dot_dimension_numbers<[1], [0], [0], [1], [0, 0, 1, 1], [], []>} : vector<16x32xf32>, vector<32x64xf32>, vector<16x64xf32> -> vector<16x64xf32>
    %c0_3 = arith.constant 0 : index
    %c0_4 = arith.constant 0 : index
    %3 = vector.load %arg3[%c0_3, %c0_4] : memref<1x64xf32, #tpu.memory_space<vmem>>, vector<1x64xf32>
    %4 = vector.broadcast %3 : vector<1x64xf32> to vector<16x64xf32>
    %5 = arith.addf %2, %4 : vector<16x64xf32>
    %cst_5 = arith.constant 0.000000e+00 : f32
    %6 = vector.broadcast %cst_5 : f32 to vector<16x64xf32>
    %7 = arith.maximumf %5, %6 : vector<16x64xf32>
    %c0_6 = arith.constant 0 : index
    %c0_7 = arith.constant 0 : index
    %8 = vector.load %arg4[%c0_6, %c0_7] : memref<64x32xf32, #tpu.memory_space<vmem>>, vector<64x32xf32>
    %cst_8 = arith.constant dense<0.000000e+00> : vector<16x32xf32>
    %9 = tpu.matmul %7, %8, %cst_8 {dimension_numbers = #tpu.dot_dimension_numbers<[1], [0], [0], [1], [0, 0, 1, 1], [], []>} : vector<16x64xf32>, vector<64x32xf32>, vector<16x32xf32> -> vector<16x32xf32>
    %c0_9 = arith.constant 0 : index
    %c0_10 = arith.constant 0 : index
    %10 = vector.load %arg5[%c0_9, %c0_10] : memref<1x32xf32, #tpu.memory_space<vmem>>, vector<1x32xf32>
    %11 = vector.broadcast %10 : vector<1x32xf32> to vector<16x32xf32>
    %12 = arith.addf %9, %11 : vector<16x32xf32>
    %13 = arith.addf %12, %0 : vector<16x32xf32>
    %c0_11 = arith.constant 0 : index
    %c0_12 = arith.constant 0 : index
    %14 = vector.load %arg6[%c0_11, %c0_12] : memref<1x32xf32, #tpu.memory_space<vmem>>, vector<1x32xf32>
    %c0_13 = arith.constant 0 : index
    %c0_14 = arith.constant 0 : index
    %15 = vector.load %arg7[%c0_13, %c0_14] : memref<1x32xf32, #tpu.memory_space<vmem>>, vector<1x32xf32>
    %cst_15 = arith.constant dense<0.000000e+00> : vector<16xf32>
    %16 = vector.multi_reduction <add>, %13, %cst_15 [1] : vector<16x32xf32> to vector<16xf32>
    %17 = vector.shape_cast %16 : vector<16xf32> to vector<16x1xf32>
    %cst_16 = arith.constant 3.200000e+01 : f32
    %18 = vector.broadcast %cst_16 : f32 to vector<16x1xf32>
    %19 = arith.divf %17, %18 : vector<16x1xf32>
    %20 = vector.broadcast %19 : vector<16x1xf32> to vector<16x32xf32>
    %21 = arith.subf %13, %20 : vector<16x32xf32>
    %22 = arith.mulf %21, %21 : vector<16x32xf32>
    %cst_17 = arith.constant dense<0.000000e+00> : vector<16xf32>
    %23 = vector.multi_reduction <add>, %22, %cst_17 [1] : vector<16x32xf32> to vector<16xf32>
    %24 = vector.shape_cast %23 : vector<16xf32> to vector<16x1xf32>
    %cst_18 = arith.constant 3.200000e+01 : f32
    %25 = vector.broadcast %cst_18 : f32 to vector<16x1xf32>
    %26 = arith.divf %24, %25 : vector<16x1xf32>
    %27 = vector.broadcast %19 : vector<16x1xf32> to vector<16x32xf32>
    %28 = arith.subf %13, %27 : vector<16x32xf32>
    %cst_19 = arith.constant 9.99999974E-6 : f32
    %29 = vector.broadcast %cst_19 : f32 to vector<16x1xf32>
    %30 = arith.addf %26, %29 : vector<16x1xf32>
    %31 = math.rsqrt %30 : vector<16x1xf32>
    %32 = vector.broadcast %31 : vector<16x1xf32> to vector<16x32xf32>
    %33 = arith.mulf %28, %32 : vector<16x32xf32>
    %34 = vector.broadcast %14 : vector<1x32xf32> to vector<16x32xf32>
    %35 = arith.mulf %33, %34 : vector<16x32xf32>
    %36 = vector.broadcast %15 : vector<1x32xf32> to vector<16x32xf32>
    %37 = arith.addf %35, %36 : vector<16x32xf32>
    %c0_20 = arith.constant 0 : index
    %c0_21 = arith.constant 0 : index
    %38 = vector.load %arg8[%c0_20, %c0_21] : memref<16x32xf32, #tpu.memory_space<vmem>>, vector<16x32xf32>
    tpu.vector_store %arg8[%c0_20, %c0_21], %37 {strides = array<i32>} : memref<16x32xf32, #tpu.memory_space<vmem>>, vector<16x32xf32>,
    return
  }
  func.func @transform_0(%arg0: i32) -> (i32, i32) {
    %c0_i32 = arith.constant 0 : i32
    %c0_i32_0 = arith.constant 0 : i32
    return %arg0, %c0_i32 : i32, i32
  }
  func.func @transform_1(%arg0: i32) -> (i32, i32) {
    %c0_i32 = arith.constant 0 : i32
    %c0_i32_0 = arith.constant 0 : i32
    %c0_i32_1 = arith.constant 0 : i32
    return %c0_i32, %c0_i32_0 : i32, i32
  }
  func.func @transform_2(%arg0: i32) -> (i32, i32) {
    %c0_i32 = arith.constant 0 : i32
    %c0_i32_0 = arith.constant 0 : i32
    %c0_i32_1 = arith.constant 0 : i32
    return %c0_i32, %c0_i32_0 : i32, i32
  }
  func.func @transform_3(%arg0: i32) -> (i32, i32) {
    %c0_i32 = arith.constant 0 : i32
    %c0_i32_0 = arith.constant 0 : i32
    %c0_i32_1 = arith.constant 0 : i32
    return %c0_i32, %c0_i32_0 : i32, i32
  }
  func.func @transform_4(%arg0: i32) -> (i32, i32) {
    %c0_i32 = arith.constant 0 : i32
    %c0_i32_0 = arith.constant 0 : i32
    %c0_i32_1 = arith.constant 0 : i32
    return %c0_i32, %c0_i32_0 : i32, i32
  }
  func.func @transform_5(%arg0: i32) -> (i32, i32) {
    %c0_i32 = arith.constant 0 : i32
    %c0_i32_0 = arith.constant 0 : i32
    %c0_i32_1 = arith.constant 0 : i32
    return %c0_i32, %c0_i32_0 : i32, i32
  }
  func.func @transform_6(%arg0: i32) -> (i32, i32) {
    %c0_i32 = arith.constant 0 : i32
    %c0_i32_0 = arith.constant 0 : i32
    %c0_i32_1 = arith.constant 0 : i32
    return %c0_i32, %c0_i32_0 : i32, i32
  }
  func.func @transform_7(%arg0: i32) -> (i32, i32) {
    %c0_i32 = arith.constant 0 : i32
    %c0_i32_0 = arith.constant 0 : i32
    return %arg0, %c0_i32 : i32, i32
  }
}

</mosaic_0001>

<llo_original>
// kernel: decoder_layer.8
$region0: #{decoder_layer.8}
  #allocation0 [shape = 'u32[]', space=smem, size = 0x4, offset = 0x4, fixed_abs, tag = 'smem constant byte address 0x4 - core index']
  #allocation1 [shape = 'u32[144,128]{1,0:T(1,128)}', space=vmem, size = 0x12000, scoped, tag = 'internal scratch']
  #allocation2 [shape = 'f32[16,96]{1,0:T(8,128)}', space=vmem, size = 0x2000, scoped, tag = 'scratch operand']
  %s0 = inlined_call_operand.vmem [shape: f32[16,32], index: 0, kind: input, shape index: {}]
  %s1 = inlined_call_operand.hbm [shape: f32[32,96], index: 1, kind: input, shape index: {}]
  %s2 = inlined_call_operand.vmem [shape: f32[1,96], index: 2, kind: input, shape index: {}]
  %s3 = inlined_call_operand.vmem [shape: f32[16,96], index: 3, kind: output, shape index: {}]
  %s4 = sld [smem:[#allocation0]]
  $region34: #{decoder_layer.8} parent=0
    _
  %s6 = ssub.s32 1, %s4
  %s7 = scalar_select 0, %s6, %s4
  $region1: #{decoder_layer.8} parent=0
    #allocation3 [shape = 'u8[16384]{0}', space=vmem, size = 0x4000, scoped, tag = 'input window, operand 1, single buffered']
    #allocation4 [shape = 's32[1]{0}', space=sflag, size = 0x4, scoped, tag = 'scoped memory for decoder_layer.8']
    %8 = vsyncpa [#allocation4], 0
    // Predicated region
    $region2: #{decoder_layer.8} parent=1 // pred_check
      _
    $region3: #{decoder_layer.8} parent=1 // pred_check_branch
      %10 = sbr.rel (0) target = $region5
    $region4: #{decoder_layer.8} parent=1 // pred_region
      _
    $region5: #{decoder_layer.8} parent=1 // pred_fallthru
      _
    // Predicated region
    $region6: #{decoder_layer.8} parent=1 // pred_check
      _
    $region7: #{decoder_layer.8} parent=1 // pred_check_branch
      %12 = sbr.rel (0) target = $region9
    $region8: #{decoder_layer.8} parent=1 // pred_region
      %s14 = ssub.s32 512, 512
      %15 = vsyncadd [#allocation4], %s14
      %s16 = sshll.u32 [#allocation3], 4
      %s17 = int_to_ptr.vmem [resolvable:$true] %s16
      %22 = dma.hbm_to_vmem [thread:$0]  %s1, 512, %s17, [#allocation4], 128, 128, 8
    $region9: #{decoder_layer.8} parent=1 // pred_fallthru
      _
    // Predicated region
    $region10: #{decoder_layer.8} parent=1 // pred_check
      _
    $region11: #{decoder_layer.8} parent=1 // pred_check_branch
      %24 = sbr.rel (0) target = $region13
    $region12: #{decoder_layer.8} parent=1 // pred_region
      _
    $region13: #{decoder_layer.8} parent=1 // pred_fallthru
      _
    // Predicated region
    $region14: #{decoder_layer.8} parent=1 // pred_check
      _
    $region15: #{decoder_layer.8} parent=1 // pred_check_branch
      %26 = sbr.rel (0) target = $region17
    $region16: #{decoder_layer.8} parent=1 // pred_region
      %27 = dma.done [#allocation4], 512
    $region17: #{decoder_layer.8} parent=1 // pred_fallthru
      _
    %p28 = scmp.eq.s32.totalorder 0, 0
    // Predicated region
    $region18: #{decoder_layer.8} parent=1 // pred_check
      %p29 = pneg %p28
    $region19: #{decoder_layer.8} parent=1 // pred_check_branch
      %31 = sbr.rel (%p29) target = $region21
    $region20: #{decoder_layer.8} parent=1 // pred_region
      %vm32 = vcmask 785408
      %33 = vst.msk [vmem:[#allocation2] sm:$0xff] %vm32, 0.0
      %34 = vst.msk [vmem:[#allocation2 + $0x8] sm:$0xff] %vm32, 0.0
    $region21: #{decoder_layer.8} parent=1 // pred_fallthru
      _
    %v35 = vld [vmem:[#allocation2] sm:$0xff]
    %v36 = vld [vmem:[#allocation2 + $0x8] sm:$0xff]
    %v37 = vld [vmem:[%s0] sm:$0xff]
    %v38 = vld [vmem:[%s0 + $0x8] sm:$0xff]
    %v39 = vld [vmem:[#allocation3] sm:$0xff]
    %v40 = vld [vmem:[#allocation3 + $0x8] sm:$0xff]
    %v41 = vld [vmem:[#allocation3 + $0x10] sm:$0xff]
    %v42 = vld [vmem:[#allocation3 + $0x18] sm:$0xff]
    %vm43 = vcmask 261120
    %v45 = vsel %vm43, %v37, 0
    %v48 = vsel %vm43, %v38, 0
    %50 = vmatprep.subr.mxu0 0.0
    %51 = vmatpush1.msra.mxu0 0.0
    %52 = vmatprep.subr.mxu0 0.0
    %53 = vmatpush1.msra.mxu0 0.0
    %54 = vmatprep.subr.mxu0 0.0
    %55 = vmatpush1.msra.mxu0 0.0
    %56 = vmatprep.subr.mxu0 0.0
    %57 = vmatpush1.msra.mxu0 0.0
    %58 = vmatprep.subr.mxu0 0.0
    %59 = vmatpush1.msra.mxu0 0.0
    %60 = vmatprep.subr.mxu0 0.0
    %61 = vmatpush1.msra.mxu0 0.0
    %62 = vmatprep.subr.mxu0 0.0
    %63 = vmatpush1.msra.mxu0 0.0
    %64 = vmatprep.subr.mxu0 0.0
    %65 = vmatpush1.msra.mxu0 0.0
    %66 = vmatprep.subr.mxu0 0.0
    %67 = vmatpush1.msra.mxu0 0.0
    %68 = vmatprep.subr.mxu0 0.0
    %69 = vmatpush1.msra.mxu0 0.0
    %70 = vmatprep.subr.mxu0 0.0
    %71 = vmatpush1.msra.mxu0 0.0
    %72 = vmatprep.subr.mxu0 0.0
    %73 = vmatpush1.msra.mxu0 0.0
    %74 = vmatprep.subr.mxu0 0.0
    %75 = vmatpush1.msra.mxu0 %v42
    %76 = vmatprep.subr.mxu0 0.0
    %77 = vmatpush1.msra.mxu0 %v41
    %78 = vmatprep.subr.mxu0 0.0
    %79 = vmatpush1.msra.mxu0 %v40
    %80 = vmatprep.subr.mxu0 0.0
    %81 = vmatpush1.msra.mxu0 %v39
    %82 = vmatprep.subr.mxu0 0.0
    %83 = vmatpush2.msra.mxu0 0.0
    %84 = vmatprep.subr.mxu0 0.0
    %85 = vmatpush2.msra.mxu0 0.0
    %86 = vmatprep.subr.mxu0 0.0
    %87 = vmatpush2.msra.mxu0 0.0
    %88 = vmatprep.subr.mxu0 0.0
    %89 = vmatpush2.msra.mxu0 0.0
    %90 = vmatprep.subr.mxu0 0.0
    %91 = vmatpush2.msra.mxu0 0.0
    %92 = vmatprep.subr.mxu0 0.0
    %93 = vmatpush2.msra.mxu0 0.0
    %94 = vmatprep.subr.mxu0 0.0
    %95 = vmatpush2.msra.mxu0 0.0
    %96 = vmatprep.subr.mxu0 0.0
    %97 = vmatpush2.msra.mxu0 0.0
    %98 = vmatprep.subr.mxu0 0.0
    %99 = vmatpush2.msra.mxu0 0.0
    %100 = vmatprep.subr.mxu0 0.0
    %101 = vmatpush2.msra.mxu0 0.0
    %102 = vmatprep.subr.mxu0 0.0
    %103 = vmatpush2.msra.mxu0 0.0
    %104 = vmatprep.subr.mxu0 0.0
    %105 = vmatpush2.msra.mxu0 0.0
    %106 = vmatprep.subr.mxu0 0.0
    %107 = vmatpush2.msra.mxu0 0.0
    %108 = vmatprep.subr.mxu0 0.0
    %109 = vmatpush2.msra.mxu0 0.0
    %110 = vmatprep.subr.mxu0 0.0
    %111 = vmatpush2.msra.mxu0 0.0
    %112 = vmatprep.subr.mxu0 0.0
    %113 = vmatpush2.msra.mxu0 0.0
    %114 = vmatprep.mubr.f32.mxu0 0.0
    %115 = vmatmul.mubr.f32.gmra.mxu0 %v45
    %v116 = vpop.f32.mrf.mxu0
    %v117 = vadd.f32 0.0, %v116
    %v118 = vpop.f32.mrf.mxu0
    %119 = vmatprep.mubr.f32.mxu0 0.0
    %120 = vmatmul.mubr.f32.gmra.mxu0 %v48
    %v121 = vpop.f32.mrf.mxu0
    %v122 = vadd.f32 0.0, %v121
    %v123 = vpop.f32.mrf.mxu0
    %124 = vdwg.mxu0
    %v125 = vadd.f32 %v35, %v117
    %v126 = vadd.f32 %v36, %v122
    %vm127 = vcmask 785408
    %128 = vst.msk [vmem:[#allocation2] sm:$0xff] %vm127, %v125
    %129 = vst.msk [vmem:[#allocation2 + $0x8] sm:$0xff] %vm127, %v126
    // Predicated region
    $region22: #{decoder_layer.8} parent=1 // pred_check
      %p130 = pneg %p28
    $region23: #{decoder_layer.8} parent=1 // pred_check_branch
      %132 = sbr.rel (%p130) target = $region25
    $region24: #{decoder_layer.8} parent=1 // pred_region
      %v133 = vld [vmem:[#allocation2] sm:$0xff]
      %v134 = vld [vmem:[#allocation2 + $0x8] sm:$0xff]
      %v135 = vld [vmem:[%s2] sm:$0x1]
      %v137 = vlaneseq
      %v138 = vshrl.u32 %v137, 7
      %v139 = vsub.s32 0, %v138
      %v140 = vrot.slane %v135, %v139
      %v142 = vadd.f32 %v133, %v140
      %v143 = vadd.f32 %v134, %v140
      %144 = vst.msk [vmem:[%s3] sm:$0xff] %vm127, %v142
      %145 = vst.msk [vmem:[%s3 + $0x8] sm:$0xff] %vm127, %v143
    $region25: #{decoder_layer.8} parent=1 // pred_fallthru
      _
    // Predicated region
    $region26: #{decoder_layer.8} parent=1 // pred_check
      _
    $region27: #{decoder_layer.8} parent=1 // pred_check_branch
      %147 = sbr.rel (0) target = $region29
    $region28: #{decoder_layer.8} parent=1 // pred_region
      _
    $region29: #{decoder_layer.8} parent=1 // pred_fallthru
      _
    // Predicated region
    $region30: #{decoder_layer.8} parent=1 // pred_check
      _
    $region31: #{decoder_layer.8} parent=1 // pred_check_branch
      %149 = sbr.rel (0) target = $region33
    $region32: #{decoder_layer.8} parent=1 // pred_region
      _
    $region33: #{decoder_layer.8} parent=1 // pred_fallthru
      _
    %150 = vsyncpa [#allocation4], 1

// kernel: decoder_layer.11
$region0: #{decoder_layer.11}
  #allocation0 [shape = 'u32[]', space=smem, size = 0x4, offset = 0x4, fixed_abs, tag = 'smem constant byte address 0x4 - core index']
  #allocation1 [shape = 'u32[144,128]{1,0:T(1,128)}', space=vmem, size = 0x12000, scoped, tag = 'internal scratch']
  #allocation2 [shape = 'f32[16,32]{1,0:T(8,128)}', space=vmem, size = 0x2000, scoped, tag = 'scratch operand']
  %s0 = inlined_call_operand.vmem [shape: f32[16,32], index: 0, kind: input, shape index: {}]
  %s1 = inlined_call_operand.vmem [shape: f32[32,32], index: 1, kind: input, shape index: {}]
  %s2 = inlined_call_operand.vmem [shape: f32[1,32], index: 2, kind: input, shape index: {}]
  %s3 = inlined_call_operand.vmem [shape: f32[16,32], index: 3, kind: output, shape index: {}]
  %s4 = sld [smem:[#allocation0]]
  $region30: #{decoder_layer.11} parent=0
    _
  %s6 = ssub.s32 1, %s4
  %s7 = scalar_select 0, %s6, %s4
  // Predicated region
  $region2: #{decoder_layer.11} parent=0 // pred_check
    _
  $region3: #{decoder_layer.11} parent=0 // pred_check_branch
    %9 = sbr.rel (0) target = $region5
  $region4: #{decoder_layer.11} parent=0 // pred_region
    _
  $region5: #{decoder_layer.11} parent=0 // pred_fallthru
    _
  // Predicated region
  $region6: #{decoder_layer.11} parent=0 // pred_check
    _
  $region7: #{decoder_layer.11} parent=0 // pred_check_branch
    %11 = sbr.rel (0) target = $region9
  $region8: #{decoder_layer.11} parent=0 // pred_region
    _
  $region9: #{decoder_layer.11} parent=0 // pred_fallthru
    _
  // Predicated region
  $region10: #{decoder_layer.11} parent=0 // pred_check
    _
  $region11: #{decoder_layer.11} parent=0 // pred_check_branch
    %13 = sbr.rel (0) target = $region13
  $region12: #{decoder_layer.11} parent=0 // pred_region
    _
  $region13: #{decoder_layer.11} parent=0 // pred_fallthru
    _
  %p14 = scmp.eq.s32.totalorder 0, 0
  // Predicated region
  $region14: #{decoder_layer.11} parent=0 // pred_check
    %p15 = pneg %p14
  $region15: #{decoder_layer.11} parent=0 // pred_check_branch
    %17 = sbr.rel (%p15) target = $region17
  $region16: #{decoder_layer.11} parent=0 // pred_region
    %vm18 = vcmask 261120
    %19 = vst.msk [vmem:[#allocation2] sm:$0xff] %vm18, 0.0
    %20 = vst.msk [vmem:[#allocation2 + $0x8] sm:$0xff] %vm18, 0.0
  $region17: #{decoder_layer.11} parent=0 // pred_fallthru
    _
  %v21 = vld [vmem:[#allocation2] sm:$0xff]
  %v22 = vld [vmem:[#allocation2 + $0x8] sm:$0xff]
  %v23 = vld [vmem:[%s0] sm:$0xff]
  %v24 = vld [vmem:[%s0 + $0x8] sm:$0xff]
  %v25 = vld [vmem:[%s1] sm:$0xff]
  %v26 = vld [vmem:[%s1 + $0x8] sm:$0xff]
  %v27 = vld [vmem:[%s1 + $0x10] sm:$0xff]
  %v28 = vld [vmem:[%s1 + $0x18] sm:$0xff]
  %vm29 = vcmask 261120
  %v31 = vsel %vm29, %v23, 0
  %v34 = vsel %vm29, %v24, 0
  %36 = vmatprep.subr.mxu0 0.0
  %37 = vmatpush1.msra.mxu0 0.0
  %38 = vmatprep.subr.mxu0 0.0
  %39 = vmatpush1.msra.mxu0 0.0
  %40 = vmatprep.subr.mxu0 0.0
  %41 = vmatpush1.msra.mxu0 0.0
  %42 = vmatprep.subr.mxu0 0.0
  %43 = vmatpush1.msra.mxu0 0.0
  %44 = vmatprep.subr.mxu0 0.0
  %45 = vmatpush1.msra.mxu0 0.0
  %46 = vmatprep.subr.mxu0 0.0
  %47 = vmatpush1.msra.mxu0 0.0
  %48 = vmatprep.subr.mxu0 0.0
  %49 = vmatpush1.msra.mxu0 0.0
  %50 = vmatprep.subr.mxu0 0.0
  %51 = vmatpush1.msra.mxu0 0.0
  %52 = vmatprep.subr.mxu0 0.0
  %53 = vmatpush1.msra.mxu0 0.0
  %54 = vmatprep.subr.mxu0 0.0
  %55 = vmatpush1.msra.mxu0 0.0
  %56 = vmatprep.subr.mxu0 0.0
  %57 = vmatpush1.msra.mxu0 0.0
  %58 = vmatprep.subr.mxu0 0.0
  %59 = vmatpush1.msra.mxu0 0.0
  %60 = vmatprep.subr.mxu0 0.0
  %61 = vmatpush1.msra.mxu0 %v28
  %62 = vmatprep.subr.mxu0 0.0
  %63 = vmatpush1.msra.mxu0 %v27
  %64 = vmatprep.subr.mxu0 0.0
  %65 = vmatpush1.msra.mxu0 %v26
  %66 = vmatprep.subr.mxu0 0.0
  %67 = vmatpush1.msra.mxu0 %v25
  %68 = vmatprep.subr.mxu0 0.0
  %69 = vmatpush2.msra.mxu0 0.0
  %70 = vmatprep.subr.mxu0 0.0
  %71 = vmatpush2.msra.mxu0 0.0
  %72 = vmatprep.subr.mxu0 0.0
  %73 = vmatpush2.msra.mxu0 0.0
  %74 = vmatprep.subr.mxu0 0.0
  %75 = vmatpush2.msra.mxu0 0.0
  %76 = vmatprep.subr.mxu0 0.0
  %77 = vmatpush2.msra.mxu0 0.0
  %78 = vmatprep.subr.mxu0 0.0
  %79 = vmatpush2.msra.mxu0 0.0
  %80 = vmatprep.subr.mxu0 0.0
  %81 = vmatpush2.msra.mxu0 0.0
  %82 = vmatprep.subr.mxu0 0.0
  %83 = vmatpush2.msra.mxu0 0.0
  %84 = vmatprep.subr.mxu0 0.0
  %85 = vmatpush2.msra.mxu0 0.0
  %86 = vmatprep.subr.mxu0 0.0
  %87 = vmatpush2.msra.mxu0 0.0
  %88 = vmatprep.subr.mxu0 0.0
  %89 = vmatpush2.msra.mxu0 0.0
  %90 = vmatprep.subr.mxu0 0.0
  %91 = vmatpush2.msra.mxu0 0.0
  %92 = vmatprep.subr.mxu0 0.0
  %93 = vmatpush2.msra.mxu0 0.0
  %94 = vmatprep.subr.mxu0 0.0
  %95 = vmatpush2.msra.mxu0 0.0
  %96 = vmatprep.subr.mxu0 0.0
  %97 = vmatpush2.msra.mxu0 0.0
  %98 = vmatprep.subr.mxu0 0.0
  %99 = vmatpush2.msra.mxu0 0.0
  %100 = vmatprep.mubr.f32.mxu0 0.0
  %101 = vmatmul.mubr.f32.gmra.mxu0 %v31
  %v102 = vpop.f32.mrf.mxu0
  %v103 = vadd.f32 0.0, %v102
  %v104 = vpop.f32.mrf.mxu0
  %105 = vmatprep.mubr.f32.mxu0 0.0
  %106 = vmatmul.mubr.f32.gmra.mxu0 %v34
  %v107 = vpop.f32.mrf.mxu0
  %v108 = vadd.f32 0.0, %v107
  %v109 = vpop.f32.mrf.mxu0
  %110 = vdwg.mxu0
  %v111 = vadd.f32 %v21, %v103
  %v112 = vadd.f32 %v22, %v108
  %113 = vst.msk [vmem:[#allocation2] sm:$0xff] %vm29, %v111
  %114 = vst.msk [vmem:[#allocation2 + $0x8] sm:$0xff] %vm29, %v112
  // Predicated region
  $region18: #{decoder_layer.11} parent=0 // pred_check
    %p115 = pneg %p14
  $region19: #{decoder_layer.11} parent=0 // pred_check_branch
    %117 = sbr.rel (%p115) target = $region21
  $region20: #{decoder_layer.11} parent=0 // pred_region
    %v118 = vld [vmem:[#allocation2] sm:$0xff]
    %v119 = vld [vmem:[#allocation2 + $0x8] sm:$0xff]
    %v120 = vld [vmem:[%s2] sm:$0x1]
    %v122 = vlaneseq
    %v123 = vshrl.u32 %v122, 7
    %v124 = vsub.s32 0, %v123
    %v125 = vrot.slane %v120, %v124
    %v127 = vadd.f32 %v118, %v125
    %v128 = vadd.f32 %v119, %v125
    %129 = vst.msk [vmem:[%s3] sm:$0xff] %vm29, %v127
    %130 = vst.msk [vmem:[%s3 + $0x8] sm:$0xff] %vm29, %v128
  $region21: #{decoder_layer.11} parent=0 // pred_fallthru
    _
  // Predicated region
  $region22: #{decoder_layer.11} parent=0 // pred_check
    _
  $region23: #{decoder_layer.11} parent=0 // pred_check_branch
    %132 = sbr.rel (0) target = $region25
  $region24: #{decoder_layer.11} parent=0 // pred_region
    _
  $region25: #{decoder_layer.11} parent=0 // pred_fallthru
    _
  // Predicated region
  $region26: #{decoder_layer.11} parent=0 // pred_check
    _
  $region27: #{decoder_layer.11} parent=0 // pred_check_branch
    %134 = sbr.rel (0) target = $region29
  $region28: #{decoder_layer.11} parent=0 // pred_region
    _
  $region29: #{decoder_layer.11} parent=0 // pred_fallthru
    _

// kernel: decoder_layer.10
$region0: #{decoder_layer.10}
  #allocation0 [shape = 'u32[]', space=smem, size = 0x4, offset = 0x4, fixed_abs, tag = 'smem constant byte address 0x4 - core index']
  #allocation1 [shape = 'u32[144,128]{1,0:T(1,128)}', space=vmem, size = 0x12000, scoped, tag = 'internal scratch']
  #allocation2 [shape = 'f32[16,32]{1,0:T(8,128)}', space=vmem, size = 0x2000, scoped, tag = 'scratch operand']
  %s0 = inlined_call_operand.vmem [shape: f32[16,32], index: 0, kind: input, shape index: {}]
  %s1 = inlined_call_operand.vmem [shape: f32[32,32], index: 1, kind: input, shape index: {}]
  %s2 = inlined_call_operand.vmem [shape: f32[1,32], index: 2, kind: input, shape index: {}]
  %s3 = inlined_call_operand.vmem [shape: f32[16,32], index: 3, kind: input, shape index: {}]
  %s4 = inlined_call_operand.vmem [shape: f32[1,32], index: 4, kind: input, shape index: {}]
  %s5 = inlined_call_operand.vmem [shape: f32[1,32], index: 5, kind: input, shape index: {}]
  %s6 = inlined_call_operand.vmem [shape: f32[16,32], index: 6, kind: output, shape index: {}]
  %s7 = sld [smem:[#allocation0]]
  $region42: #{decoder_layer.10} parent=0
    _
  %s9 = ssub.s32 1, %s7
  %s10 = scalar_select 0, %s9, %s7
  // Predicated region
  $region2: #{decoder_layer.10} parent=0 // pred_check
    _
  $region3: #{decoder_layer.10} parent=0 // pred_check_branch
    %12 = sbr.rel (0) target = $region5
  $region4: #{decoder_layer.10} parent=0 // pred_region
    _
  $region5: #{decoder_layer.10} parent=0 // pred_fallthru
    _
  // Predicated region
  $region6: #{decoder_layer.10} parent=0 // pred_check
    _
  $region7: #{decoder_layer.10} parent=0 // pred_check_branch
    %14 = sbr.rel (0) target = $region9
  $region8: #{decoder_layer.10} parent=0 // pred_region
    _
  $region9: #{decoder_layer.10} parent=0 // pred_fallthru
    _
  // Predicated region
  $region10: #{decoder_layer.10} parent=0 // pred_check
    _
  $region11: #{decoder_layer.10} parent=0 // pred_check_branch
    %16 = sbr.rel (0) target = $region13
  $region12: #{decoder_layer.10} parent=0 // pred_region
    _
  $region13: #{decoder_layer.10} parent=0 // pred_fallthru
    _
  // Predicated region
  $region14: #{decoder_layer.10} parent=0 // pred_check
    _
  $region15: #{decoder_layer.10} parent=0 // pred_check_branch
    %18 = sbr.rel (0) target = $region17
  $region16: #{decoder_layer.10} parent=0 // pred_region
    _
  $region17: #{decoder_layer.10} parent=0 // pred_fallthru
    _
  // Predicated region
  $region18: #{decoder_layer.10} parent=0 // pred_check
    _
  $region19: #{decoder_layer.10} parent=0 // pred_check_branch
    %20 = sbr.rel (0) target = $region21
  $region20: #{decoder_layer.10} parent=0 // pred_region
    _
  $region21: #{decoder_layer.10} parent=0 // pred_fallthru
    _
  // Predicated region
  $region22: #{decoder_layer.10} parent=0 // pred_check
    _
  $region23: #{decoder_layer.10} parent=0 // pred_check_branch
    %22 = sbr.rel (0) target = $region25
  $region24: #{decoder_layer.10} parent=0 // pred_region
    _
  $region25: #{decoder_layer.10} parent=0 // pred_fallthru
    _
  %p23 = scmp.eq.s32.totalorder 0, 0
  // Predicated region
  $region26: #{decoder_layer.10} parent=0 // pred_check
    %p24 = pneg %p23
  $region27: #{decoder_layer.10} parent=0 // pred_check_branch
    %26 = sbr.rel (%p24) target = $region29
  $region28: #{decoder_layer.10} parent=0 // pred_region
    %vm27 = vcmask 261120
    %28 = vst.msk [vmem:[#allocation2] sm:$0xff] %vm27, 0.0
    %29 = vst.msk [vmem:[#allocation2 + $0x8] sm:$0xff] %vm27, 0.0
  $region29: #{decoder_layer.10} parent=0 // pred_fallthru
    _
  %v30 = vld [vmem:[#allocation2] sm:$0xff]
  %v31 = vld [vmem:[#allocation2 + $0x8] sm:$0xff]
  %v32 = vld [vmem:[%s0] sm:$0xff]
  %v33 = vld [vmem:[%s0 + $0x8] sm:$0xff]
  %v34 = vld [vmem:[%s1] sm:$0xff]
  %v35 = vld [vmem:[%s1 + $0x8] sm:$0xff]
  %v36 = vld [vmem:[%s1 + $0x10] sm:$0xff]
  %v37 = vld [vmem:[%s1 + $0x18] sm:$0xff]
  %vm38 = vcmask 261120
  %v40 = vsel %vm38, %v32, 0
  %v43 = vsel %vm38, %v33, 0
  %45 = vmatprep.subr.mxu0 0.0
  %46 = vmatpush1.msra.mxu0 0.0
  %47 = vmatprep.subr.mxu0 0.0
  %48 = vmatpush1.msra.mxu0 0.0
  %49 = vmatprep.subr.mxu0 0.0
  %50 = vmatpush1.msra.mxu0 0.0
  %51 = vmatprep.subr.mxu0 0.0
  %52 = vmatpush1.msra.mxu0 0.0
  %53 = vmatprep.subr.mxu0 0.0
  %54 = vmatpush1.msra.mxu0 0.0
  %55 = vmatprep.subr.mxu0 0.0
  %56 = vmatpush1.msra.mxu0 0.0
  %57 = vmatprep.subr.mxu0 0.0
  %58 = vmatpush1.msra.mxu0 0.0
  %59 = vmatprep.subr.mxu0 0.0
  %60 = vmatpush1.msra.mxu0 0.0
  %61 = vmatprep.subr.mxu0 0.0
  %62 = vmatpush1.msra.mxu0 0.0
  %63 = vmatprep.subr.mxu0 0.0
  %64 = vmatpush1.msra.mxu0 0.0
  %65 = vmatprep.subr.mxu0 0.0
  %66 = vmatpush1.msra.mxu0 0.0
  %67 = vmatprep.subr.mxu0 0.0
  %68 = vmatpush1.msra.mxu0 0.0
  %69 = vmatprep.subr.mxu0 0.0
  %70 = vmatpush1.msra.mxu0 %v37
  %71 = vmatprep.subr.mxu0 0.0
  %72 = vmatpush1.msra.mxu0 %v36
  %73 = vmatprep.subr.mxu0 0.0
  %74 = vmatpush1.msra.mxu0 %v35
  %75 = vmatprep.subr.mxu0 0.0
  %76 = vmatpush1.msra.mxu0 %v34
  %77 = vmatprep.subr.mxu0 0.0
  %78 = vmatpush2.msra.mxu0 0.0
  %79 = vmatprep.subr.mxu0 0.0
  %80 = vmatpush2.msra.mxu0 0.0
  %81 = vmatprep.subr.mxu0 0.0
  %82 = vmatpush2.msra.mxu0 0.0
  %83 = vmatprep.subr.mxu0 0.0
  %84 = vmatpush2.msra.mxu0 0.0
  %85 = vmatprep.subr.mxu0 0.0
  %86 = vmatpush2.msra.mxu0 0.0
  %87 = vmatprep.subr.mxu0 0.0
  %88 = vmatpush2.msra.mxu0 0.0
  %89 = vmatprep.subr.mxu0 0.0
  %90 = vmatpush2.msra.mxu0 0.0
  %91 = vmatprep.subr.mxu0 0.0
  %92 = vmatpush2.msra.mxu0 0.0
  %93 = vmatprep.subr.mxu0 0.0
  %94 = vmatpush2.msra.mxu0 0.0
  %95 = vmatprep.subr.mxu0 0.0
  %96 = vmatpush2.msra.mxu0 0.0
  %97 = vmatprep.subr.mxu0 0.0
  %98 = vmatpush2.msra.mxu0 0.0
  %99 = vmatprep.subr.mxu0 0.0
  %100 = vmatpush2.msra.mxu0 0.0
  %101 = vmatprep.subr.mxu0 0.0
  %102 = vmatpush2.msra.mxu0 0.0
  %103 = vmatprep.subr.mxu0 0.0
  %104 = vmatpush2.msra.mxu0 0.0
  %105 = vmatprep.subr.mxu0 0.0
  %106 = vmatpush2.msra.mxu0 0.0
  %107 = vmatprep.subr.mxu0 0.0
  %108 = vmatpush2.msra.mxu0 0.0
  %109 = vmatprep.mubr.f32.mxu0 0.0
  %110 = vmatmul.mubr.f32.gmra.mxu0 %v40
  %v111 = vpop.f32.mrf.mxu0
  %v112 = vadd.f32 0.0, %v111
  %v113 = vpop.f32.mrf.mxu0
  %114 = vmatprep.mubr.f32.mxu0 0.0
  %115 = vmatmul.mubr.f32.gmra.mxu0 %v43
  %v116 = vpop.f32.mrf.mxu0
  %v117 = vadd.f32 0.0, %v116
  %v118 = vpop.f32.mrf.mxu0
  %119 = vdwg.mxu0
  %v120 = vadd.f32 %v30, %v112
  %v121 = vadd.f32 %v31, %v117
  %122 = vst.msk [vmem:[#allocation2] sm:$0xff] %vm38, %v120
  %123 = vst.msk [vmem:[#allocation2 + $0x8] sm:$0xff] %vm38, %v121
  // Predicated region
  $region30: #{decoder_layer.10} parent=0 // pred_check
    %p124 = pneg %p23
  $region31: #{decoder_layer.10} parent=0 // pred_check_branch
    %126 = sbr.rel (%p124) target = $region33
  $region32: #{decoder_layer.10} parent=0 // pred_region
    %v127 = vld [vmem:[#allocation2] sm:$0xff]
    %v128 = vld [vmem:[#allocation2 + $0x8] sm:$0xff]
    %v129 = vld [vmem:[%s2] sm:$0x1]
    %v131 = vlaneseq
    %v132 = vshrl.u32 %v131, 7
    %v133 = vsub.s32 0, %v132
    %v134 = vrot.slane %v129, %v133
    %v136 = vadd.f32 %v127, %v134
    %v137 = vadd.f32 %v128, %v134
    %v138 = vld [vmem:[%s3] sm:$0xff]
    %v139 = vld [vmem:[%s3 + $0x8] sm:$0xff]
    %v140 = vadd.f32 %v136, %v138
    %v141 = vadd.f32 %v137, %v139
    %v142 = vld [vmem:[%s4] sm:$0x1]
    %v143 = vld [vmem:[%s5] sm:$0x1]
    %v144 = vsel %vm38, %v140, 0.0
    %145 = vadd.xlane.f32.xlu0 %v144
    %v146 = vpop.xlane.xlu0 %145
    %v147 = vsel %vm38, %v141, 0.0
    %148 = vadd.xlane.f32.xlu0 %v147
    %v149 = vpop.xlane.xlu0 %148
    %v150 = vrcp.pop 32.0
    %v151 = vmul.f32 %v146, %v150
    %v152 = vmul.f32 %v149, %v150
    %v153 = vsub.f32 %v140, %v151
    %v154 = vsub.f32 %v141, %v152
    %v155 = vmul.f32 %v153, %v153
    %v156 = vmul.f32 %v154, %v154
    %v157 = vsel %vm38, %v155, 0.0
    %158 = vadd.xlane.f32.xlu0 %v157
    %v159 = vpop.xlane.xlu0 %158
    %v160 = vsel %vm38, %v156, 0.0
    %161 = vadd.xlane.f32.xlu0 %v160
    %v162 = vpop.xlane.xlu0 %161
    %v163 = vmul.f32 %v159, %v150
    %v164 = vmul.f32 %v162, %v150
    %v165 = vadd.f32 %v163, 1e-05
    %v166 = vadd.f32 %v164, 1e-05
    %v167 = vrsqrt.pop %v165
    %v168 = vrsqrt.pop %v166
    %v169 = vmul.f32 %v153, %v167
    %v170 = vmul.f32 %v154, %v168
    %v172 = vlaneseq
    %v173 = vshrl.u32 %v172, 7
    %v174 = vsub.s32 0, %v173
    %v175 = vrot.slane %v142, %v174
    %v177 = vmul.f32 %v169, %v175
    %v178 = vmul.f32 %v170, %v175
    %v180 = vlaneseq
    %v181 = vshrl.u32 %v180, 7
    %v182 = vsub.s32 0, %v181
    %v183 = vrot.slane %v143, %v182
    %v185 = vadd.f32 %v177, %v183
    %v186 = vadd.f32 %v178, %v183
    %187 = vst.msk [vmem:[%s6] sm:$0xff] %vm38, %v185
    %188 = vst.msk [vmem:[%s6 + $0x8] sm:$0xff] %vm38, %v186
  $region33: #{decoder_layer.10} parent=0 // pred_fallthru
    _
  // Predicated region
  $region34: #{decoder_layer.10} parent=0 // pred_check
    _
  $region35: #{decoder_layer.10} parent=0 // pred_check_branch
    %190 = sbr.rel (0) target = $region37
  $region36: #{decoder_layer.10} parent=0 // pred_region
    _
  $region37: #{decoder_layer.10} parent=0 // pred_fallthru
    _
  // Predicated region
  $region38: #{decoder_layer.10} parent=0 // pred_check
    _
  $region39: #{decoder_layer.10} parent=0 // pred_check_branch
    %192 = sbr.rel (0) target = $region41
  $region40: #{decoder_layer.10} parent=0 // pred_region
    _
  $region41: #{decoder_layer.10} parent=0 // pred_fallthru
    _

// kernel: decoder_layer.9
$region0: #{decoder_layer.9}
  #allocation0 [shape = 'u32[]', space=smem, size = 0x4, offset = 0x4, fixed_abs, tag = 'smem constant byte address 0x4 - core index']
  #allocation1 [shape = 'u32[144,128]{1,0:T(1,128)}', space=vmem, size = 0x12000, scoped, tag = 'internal scratch']
  %s0 = inlined_call_operand.vmem [shape: f32[2,4,8,8], index: 0, kind: input, shape index: {}]
  %s1 = inlined_call_operand.vmem [shape: f32[2,4,8,8], index: 1, kind: input, shape index: {}]
  %s2 = inlined_call_operand.vmem [shape: f32[2,4,8,8], index: 2, kind: input, shape index: {}]
  %s3 = inlined_call_operand.vmem [shape: s32[1,1,8,8], index: 3, kind: input, shape index: {}]
  %s4 = inlined_call_operand.vmem [shape: f32[2,4,8,8], index: 4, kind: output, shape index: {0}]
  %s5 = inlined_call_operand.hbm [shape: f32[2,4,8,8], index: 5, kind: output, shape index: {1}]
  %6 = xla_tuple %s4, %s5
  %s7 = sld [smem:[#allocation0]]
  $region57: #{decoder_layer.9} parent=0
    _
  %s9 = ssub.s32 1, %s7
  %s10 = scalar_select 0, %s9, %s7
  $region1: #{decoder_layer.9} parent=0
    #allocation2 [shape = 'u8[8192]{0}', space=vmem, size = 0x2000, scoped, tag = 'output window, operand 1']
    #allocation3 [shape = 's32[2]{0}', space=sflag, size = 0x8, scoped, tag = 'scoped memory for decoder_layer.9']
    %11 = vsyncpa [#allocation3], 0
    %s12 = scalar_lea.sflag [#allocation3], 1
    %13 = vsyncpa %s12, 0
    loop: start=0, step=1, limit=10
    $region2: #{decoder_layer.9} parent=1 // loop_pre_header
      _
    $region3: #{decoder_layer.9} parent=1 // loop_header
      %s15 = sphi 0, %s19
      %p16 = scmp.ge.s32.totalorder %s15, 10
      %s22 = sphi 0, %s41
      %s23 = sphi 0, %s37
      %s24 = sphi 0, %s33
      %s25 = sphi 0, %s22
      %s26 = sphi 0, %s23
      %s27 = sphi 0, %s24
      %s28 = sphi 0, %s25
      %s29 = sphi 0, %s26
      %s30 = sphi 0, %s27
      %s48 = sphi 0, %s50
      %s51 = sphi 0, %s48
      %s52 = sphi 0, %s51
      %s68 = sphi 0, %s52
      %s76 = sphi 0, %s78
      %s79 = sphi 0, %s76
      %s80 = sphi 0, %s79
      %s96 = sphi 0, %s80
      %s104 = sphi 0, %s106
      %s107 = sphi 0, %s104
      %s108 = sphi 0, %s107
      %s124 = sphi 0, %s108
      %s130 = sphi 0, %s132
      %s133 = sphi 0, %s130
      %s134 = sphi 0, %s133
      %s150 = sphi 0, %s134
      %s160 = sphi 0, %s162
      %s163 = sphi 0, %s160
      %s164 = sphi 0, %s163
      %s180 = sphi 0, %s164
      %s190 = sphi 0, %s192
      %s193 = sphi 0, %s190
      %s194 = sphi 0, %s193
      %s210 = sphi 0, %s194
    $region4: #{decoder_layer.9} parent=1 // loop_header_branch
      %18 = sbr.rel (%p16) target = $region8
    $region5: #{decoder_layer.9} parent=1 // loop_body
      %s20 = ssub.s32 %s15, 1
      %s21 = ssub.s32 %s15, 2
      %s31 = sadd.s32 1, %s24
      %p32 = scmp.ge.s32.totalorder %s31, 1
      %s33 = scalar_select %p32, 0, %s31
      %s34 = sadd.s32 1, %s23
      %s35 = scalar_select %p32, %s34, %s23
      %p36 = scmp.ge.s32.totalorder %s35, 4
      %s37 = scalar_select %p36, 0, %s35
      %s38 = sadd.s32 1, %s22
      %s39 = scalar_select %p36, %s38, %s22
      %p40 = scmp.ge.s32.totalorder %s39, 2
      %s41 = scalar_select %p40, 0, %s39
      %s42 = ssub.s32 %s22, %s41
      %s43 = ssub.s32 %s23, %s37
      %s44 = sor.u32 %s42, %s43
      %s45 = ssub.s32 %s24, %s33
      %s46 = sor.u32 %s44, %s45
      %p47 = scmp.eq.s32.totalorder %s46, 0
      %s49 = sadd.s32 %s48, 1
      %s50 = scalar_select %p47, %s48, %s49
      %p53 = pneg %p47
      %p54 = scmp.eq.s32.totalorder %s15, 7
      %p55 = por %p53, %p54
      %p56 = scmp.ne.s32.totalorder %s48, %s51
      %p57 = scmp.eq.s32.totalorder %s15, 0
      %p58 = por %p56, %p57
      %p59 = scmp.ne.s32.totalorder %s48, %s51
      %p60 = scmp.eq.s32.totalorder %s20, 7
      %p61 = por %p59, %p60
      %p62 = scmp.ne.s32.totalorder %s51, %s52
      %p63 = scmp.eq.s32.totalorder %s20, 0
      %p64 = por %p62, %p63
      %p65 = scmp.ne.s32.totalorder %s51, %s52
      %p66 = scmp.eq.s32.totalorder %s21, 7
      %p67 = por %p65, %p66
      %p69 = scmp.ne.s32.totalorder %s52, %s68
      %p70 = scmp.eq.s32.totalorder %s21, 0
      %p71 = por %p69, %p70
      %s72 = ssub.s32 %s22, %s41
      %s73 = ssub.s32 %s23, %s37
      %s74 = sor.u32 %s72, %s73
      %p75 = scmp.eq.s32.totalorder %s74, 0
      %s77 = sadd.s32 %s76, 1
      %s78 = scalar_select %p75, %s76, %s77
      %p81 = pneg %p75
      %p82 = scmp.eq.s32.totalorder %s15, 7
      %p83 = por %p81, %p82
      %p84 = scmp.ne.s32.totalorder %s76, %s79
      %p85 = scmp.eq.s32.totalorder %s15, 0
      %p86 = por %p84, %p85
      %p87 = scmp.ne.s32.totalorder %s76, %s79
      %p88 = scmp.eq.s32.totalorder %s20, 7
      %p89 = por %p87, %p88
      %p90 = scmp.ne.s32.totalorder %s79, %s80
      %p91 = scmp.eq.s32.totalorder %s20, 0
      %p92 = por %p90, %p91
      %p93 = scmp.ne.s32.totalorder %s79, %s80
      %p94 = scmp.eq.s32.totalorder %s21, 7
      %p95 = por %p93, %p94
      %p97 = scmp.ne.s32.totalorder %s80, %s96
      %p98 = scmp.eq.s32.totalorder %s21, 0
      %p99 = por %p97, %p98
      %s100 = ssub.s32 %s22, %s41
      %s101 = ssub.s32 %s23, %s37
      %s102 = sor.u32 %s100, %s101
      %p103 = scmp.eq.s32.totalorder %s102, 0
      %s105 = sadd.s32 %s104, 1
      %s106 = scalar_select %p103, %s104, %s105
      %p109 = pneg %p103
      %p110 = scmp.eq.s32.totalorder %s15, 7
      %p111 = por %p109, %p110
      %p112 = scmp.ne.s32.totalorder %s104, %s107
      %p113 = scmp.eq.s32.totalorder %s15, 0
      %p114 = por %p112, %p113
      %p115 = scmp.ne.s32.totalorder %s104, %s107
      %p116 = scmp.eq.s32.totalorder %s20, 7
      %p117 = por %p115, %p116
      %p118 = scmp.ne.s32.totalorder %s107, %s108
      %p119 = scmp.eq.s32.totalorder %s20, 0
      %p120 = por %p118, %p119
      %p121 = scmp.ne.s32.totalorder %s107, %s108
      %p122 = scmp.eq.s32.totalorder %s21, 7
      %p123 = por %p121, %p122
      %p125 = scmp.ne.s32.totalorder %s108, %s124
      %p126 = scmp.eq.s32.totalorder %s21, 0
      %p127 = por %p125, %p126
      %s128 = ssub.s32 %s24, %s33
      %p129 = scmp.eq.s32.totalorder %s128, 0
      %s131 = sadd.s32 %s130, 1
      %s132 = scalar_select %p129, %s130, %s131
      %p135 = pneg %p129
      %p136 = scmp.eq.s32.totalorder %s15, 7
      %p137 = por %p135, %p136
      %p138 = scmp.ne.s32.totalorder %s130, %s133
      %p139 = scmp.eq.s32.totalorder %s15, 0
      %p140 = por %p138, %p139
      %p141 = scmp.ne.s32.totalorder %s130, %s133
      %p142 = scmp.eq.s32.totalorder %s20, 7
      %p143 = por %p141, %p142
      %p144 = scmp.ne.s32.totalorder %s133, %s134
      %p145 = scmp.eq.s32.totalorder %s20, 0
      %p146 = por %p144, %p145
      %p147 = scmp.ne.s32.totalorder %s133, %s134
      %p148 = scmp.eq.s32.totalorder %s21, 7
      %p149 = por %p147, %p148
      %p151 = scmp.ne.s32.totalorder %s134, %s150
      %p152 = scmp.eq.s32.totalorder %s21, 0
      %p153 = por %p151, %p152
      %s154 = ssub.s32 %s22, %s41
      %s155 = ssub.s32 %s23, %s37
      %s156 = sor.u32 %s154, %s155
      %s157 = ssub.s32 %s24, %s33
      %s158 = sor.u32 %s156, %s157
      %p159 = scmp.eq.s32.totalorder %s158, 0
      %s161 = sadd.s32 %s160, 1
      %s162 = scalar_select %p159, %s160, %s161
      %p165 = pneg %p159
      %p166 = scmp.eq.s32.totalorder %s15, 7
      %p167 = por %p165, %p166
      %p168 = scmp.ne.s32.totalorder %s160, %s163
      %p169 = scmp.eq.s32.totalorder %s15, 0
      %p170 = por %p168, %p169
      %p171 = scmp.ne.s32.totalorder %s160, %s163
      %p172 = scmp.eq.s32.totalorder %s20, 7
      %p173 = por %p171, %p172
      %p174 = scmp.ne.s32.totalorder %s163, %s164
      %p175 = scmp.eq.s32.totalorder %s20, 0
      %p176 = por %p174, %p175
      %p177 = scmp.ne.s32.totalorder %s163, %s164
      %p178 = scmp.eq.s32.totalorder %s21, 7
      %p179 = por %p177, %p178
      %p181 = scmp.ne.s32.totalorder %s164, %s180
      %p182 = scmp.eq.s32.totalorder %s21, 0
      %p183 = por %p181, %p182
      %s184 = ssub.s32 %s22, %s41
      %s185 = ssub.s32 %s23, %s37
      %s186 = sor.u32 %s184, %s185
      %s187 = ssub.s32 %s24, %s33
      %s188 = sor.u32 %s186, %s187
      %p189 = scmp.eq.s32.totalorder %s188, 0
      %s191 = sadd.s32 %s190, 1
      %s192 = scalar_select %p189, %s190, %s191
      %p195 = pneg %p189
      %p196 = scmp.eq.s32.totalorder %s15, 7
      %p197 = por %p195, %p196
      %p198 = scmp.ne.s32.totalorder %s190, %s193
      %p199 = scmp.eq.s32.totalorder %s15, 0
      %p200 = por %p198, %p199
      %p201 = scmp.ne.s32.totalorder %s190, %s193
      %p202 = scmp.eq.s32.totalorder %s20, 7
      %p203 = por %p201, %p202
      %p204 = scmp.ne.s32.totalorder %s193, %s194
      %p205 = scmp.eq.s32.totalorder %s20, 0
      %p206 = por %p204, %p205
      %p207 = scmp.ne.s32.totalorder %s193, %s194
      %p208 = scmp.eq.s32.totalorder %s21, 7
      %p209 = por %p207, %p208
      %p211 = scmp.ne.s32.totalorder %s194, %s210
      %p212 = scmp.eq.s32.totalorder %s21, 0
      %p213 = por %p211, %p212
      %p214 = scmp.le.s32.totalorder 1, %s15
      %p215 = scmp.lt.s32.totalorder %s15, 9
      %p216 = pnand %p214, %p215
      %p217 = pneg %p216
      // Predicated region
      $region9: #{decoder_layer.9} parent=5 // pred_check
        _
      $region10: #{decoder_layer.9} parent=5 // pred_check_branch
        %219 = sbr.rel (%p216) target = $region12
      $region11: #{decoder_layer.9} parent=5 // pred_region
        %s220 = ssub.s32 %s15, 1
        // Predicated region
        $region13: #{decoder_layer.9} parent=11 // pred_check
          %p221 = pneg %p146
        $region14: #{decoder_layer.9} parent=11 // pred_check_branch
          %223 = sbr.rel (%p221) target = $region16
        $region15: #{decoder_layer.9} parent=11 // pred_region
          %p224 = scmp.lt.s32.totalorder %s27, 0
          %s225 = scalar_select %p224, %s27, 0
          %s226 = smul.addr %s225, 8
          %s227 = scalar_lea.vmem %s3, %s226
        $region16: #{decoder_layer.9} parent=11 // pred_fallthru
          _
      $region12: #{decoder_layer.9} parent=5 // pred_fallthru
        _
      %p228 = scmp.lt.s32.totalorder %s15, 8
      // Predicated region
      $region17: #{decoder_layer.9} parent=5 // pred_check
        %p229 = pneg %p228
      $region18: #{decoder_layer.9} parent=5 // pred_check_branch
        %231 = sbr.rel (%p229) target = $region20
      $region19: #{decoder_layer.9} parent=5 // pred_region
        // Predicated region
        $region21: #{decoder_layer.9} parent=19 // pred_check
          %p232 = pneg %p58
        $region22: #{decoder_layer.9} parent=19 // pred_check_branch
          %234 = sbr.rel (%p232) target = $region24
        $region23: #{decoder_layer.9} parent=19 // pred_region
          %p235 = scmp.lt.s32.totalorder %s22, 1
          %s236 = scalar_select %p235, %s22, 1
          %p237 = scmp.lt.s32.totalorder %s23, 3
          %s238 = scalar_select %p237, %s23, 3
          %p239 = scmp.lt.s32.totalorder %s24, 0
          %s240 = scalar_select %p239, %s24, 0
          %s241 = sadd.s32 %s240, %s238
          %s242 = smul.addr %s236, 4
          %s243 = sadd.s32 %s241, %s242
          %s244 = smul.addr %s243, 8
          %s245 = scalar_lea.vmem %s0, %s244
        $region24: #{decoder_layer.9} parent=19 // pred_fallthru
          _
        // Predicated region
        $region25: #{decoder_layer.9} parent=19 // pred_check
          %p246 = pneg %p86
        $region26: #{decoder_layer.9} parent=19 // pred_check_branch
          %248 = sbr.rel (%p246) target = $region28
        $region27: #{decoder_layer.9} parent=19 // pred_region
          %p249 = scmp.lt.s32.totalorder %s22, 1
          %s250 = scalar_select %p249, %s22, 1
          %p251 = scmp.lt.s32.totalorder %s23, 3
          %s252 = scalar_select %p251, %s23, 3
          %s253 = smul.addr %s250, 4
          %s254 = sadd.s32 %s252, %s253
          %s255 = smul.addr %s254, 8
          %s256 = scalar_lea.vmem %s1, %s255
        $region28: #{decoder_layer.9} parent=19 // pred_fallthru
          _
        // Predicated region
        $region29: #{decoder_layer.9} parent=19 // pred_check
          %p257 = pneg %p114
        $region30: #{decoder_layer.9} parent=19 // pred_check_branch
          %259 = sbr.rel (%p257) target = $region32
        $region31: #{decoder_layer.9} parent=19 // pred_region
          %p260 = scmp.lt.s32.totalorder %s22, 1
          %s261 = scalar_select %p260, %s22, 1
          %p262 = scmp.lt.s32.totalorder %s23, 3
          %s263 = scalar_select %p262, %s23, 3
          %s264 = smul.addr %s261, 4
          %s265 = sadd.s32 %s263, %s264
          %s266 = smul.addr %s265, 8
          %s267 = scalar_lea.vmem %s2, %s266
        $region32: #{decoder_layer.9} parent=19 // pred_fallthru
          _
      $region20: #{decoder_layer.9} parent=5 // pred_fallthru
        _
      %p268 = scmp.le.s32.totalorder 1, %s15
      %p269 = scmp.lt.s32.totalorder %s15, 9
      %p270 = pnand %p268, %p269
      %p271 = pneg %p270
      // Predicated region
      $region33: #{decoder_layer.9} parent=5 // pred_check
        _
      $region34: #{decoder_layer.9} parent=5 // pred_check_branch
        %273 = sbr.rel (%p270) target = $region36
      $region35: #{decoder_layer.9} parent=5 // pred_region
        %s274 = ssub.s32 %s15, 1
        %p275 = scmp.lt.s32.totalorder %s25, 1
        %s276 = scalar_select %p275, %s25, 1
        %p277 = scmp.lt.s32.totalorder %s26, 3
        %s278 = scalar_select %p277, %s26, 3
        %p279 = scmp.lt.s32.totalorder %s27, 0
        %s280 = scalar_select %p279, %s27, 0
        %s281 = sadd.s32 %s280, %s278
        %s282 = smul.addr %s276, 4
        %s283 = sadd.s32 %s281, %s282
        %s284 = smul.addr %s283, 8
        %s285 = scalar_lea.vmem %s0, %s284
        %p286 = pneg %p64
        %p287 = pneg %p61
        %p288 = scmp.lt.s32.totalorder %s25, 1
        %s289 = scalar_select %p288, %s25, 1
        %p290 = scmp.lt.s32.totalorder %s26, 3
        %s291 = scalar_select %p290, %s26, 3
        %s292 = smul.addr %s289, 4
        %s293 = sadd.s32 %s291, %s292
        %s294 = smul.addr %s293, 8
        %s295 = scalar_lea.vmem %s1, %s294
        %p296 = pneg %p92
        %p297 = pneg %p89
        %p298 = scmp.lt.s32.totalorder %s25, 1
        %s299 = scalar_select %p298, %s25, 1
        %p300 = scmp.lt.s32.totalorder %s26, 3
        %s301 = scalar_select %p300, %s26, 3
        %s302 = smul.addr %s299, 4
        %s303 = sadd.s32 %s301, %s302
        %s304 = smul.addr %s303, 8
        %s305 = scalar_lea.vmem %s2, %s304
        %p306 = pneg %p120
        %p307 = pneg %p117
        %p308 = scmp.lt.s32.totalorder %s27, 0
        %s309 = scalar_select %p308, %s27, 0
        %s310 = smul.addr %s309, 8
        %s311 = scalar_lea.vmem %s3, %s310
        %p312 = pneg %p146
        %p313 = pneg %p143
        %p314 = pneg %p176
        %p315 = pneg %p173
        %p316 = scmp.lt.s32.totalorder %s25, 1
        %s317 = scalar_select %p316, %s25, 1
        %p318 = scmp.lt.s32.totalorder %s26, 3
        %s319 = scalar_select %p318, %s26, 3
        %p320 = scmp.lt.s32.totalorder %s27, 0
        %s321 = scalar_select %p320, %s27, 0
        %s322 = sadd.s32 %s321, %s319
        %s323 = smul.addr %s317, 4
        %s324 = sadd.s32 %s322, %s323
        %s325 = smul.addr %s324, 8
        %s326 = scalar_lea.vmem %s4, %s325
        %p327 = pneg %p206
        %p328 = pneg %p203
        %s329 = sand.u32 %s193, 1
        %s330 = scalar_lea.sflag [#allocation3], %s329
        %s331 = sand.u32 %s193, 1
        %s332 = smul.addr %s331, 8
        %s333 = scalar_lea.vmem [#allocation2], %s332
        %p334 = scmp.lt.s32.totalorder %s25, 1
        %s335 = scalar_select %p334, %s25, 1
        %p336 = scmp.lt.s32.totalorder %s26, 3
        %s337 = scalar_select %p336, %s26, 3
        %p338 = scmp.lt.s32.totalorder %s27, 0
        %s339 = scalar_select %p338, %s27, 0
        %s340 = sadd.s32 %s339, %s337
        %s341 = smul.addr %s335, 4
        %s342 = sadd.s32 %s340, %s341
        %s343 = smul.addr %s342, 8
        %s344 = scalar_lea.vmem %s0, %s343
        %p345 = scmp.lt.s32.totalorder %s25, 1
        %s346 = scalar_select %p345, %s25, 1
        %p347 = scmp.lt.s32.totalorder %s26, 3
        %s348 = scalar_select %p347, %s26, 3
        %s349 = smul.addr %s346, 4
        %s350 = sadd.s32 %s348, %s349
        %s351 = smul.addr %s350, 8
        %s352 = scalar_lea.vmem %s1, %s351
        %p353 = scmp.lt.s32.totalorder %s25, 1
        %s354 = scalar_select %p353, %s25, 1
        %p355 = scmp.lt.s32.totalorder %s26, 3
        %s356 = scalar_select %p355, %s26, 3
        %s357 = smul.addr %s354, 4
        %s358 = sadd.s32 %s356, %s357
        %s359 = smul.addr %s358, 8
        %s360 = scalar_lea.vmem %s2, %s359
        %p361 = scmp.lt.s32.totalorder %s27, 0
        %s362 = scalar_select %p361, %s27, 0
        %s363 = smul.addr %s362, 8
        %s364 = scalar_lea.vmem %s3, %s363
        %p365 = scmp.lt.s32.totalorder %s25, 1
        %s366 = scalar_select %p365, %s25, 1
        %p367 = scmp.lt.s32.totalorder %s26, 3
        %s368 = scalar_select %p367, %s26, 3
        %p369 = scmp.lt.s32.totalorder %s27, 0
        %s370 = scalar_select %p369, %s27, 0
        %s371 = sadd.s32 %s370, %s368
        %s372 = smul.addr %s366, 4
        %s373 = sadd.s32 %s371, %s372
        %s374 = smul.addr %s373, 8
        %s375 = scalar_lea.vmem %s4, %s374
        %v376 = vld [vmem:[%s344] sm:$0xff]
        %v377 = vld [vmem:[%s352] sm:$0xff]
        %v378 = vld [vmem:[%s360] sm:$0xff]
        %vm379 = vcmask 64512
        %v381 = vsel %vm379, %v376, 0
        %v384 = vsel %vm379, %v377, 0
        %386 = vmatprep.subr.mxu0 0.0
        %387 = vmatpush1.xpose.msra.mxu0 0.0
        %388 = vmatprep.subr.mxu0 0.0
        %389 = vmatpush1.xpose.msra.mxu0 0.0
        %390 = vmatprep.subr.mxu0 0.0
        %391 = vmatpush1.xpose.msra.mxu0 0.0
        %392 = vmatprep.subr.mxu0 0.0
        %393 = vmatpush1.xpose.msra.mxu0 0.0
        %394 = vmatprep.subr.mxu0 0.0
        %395 = vmatpush1.xpose.msra.mxu0 0.0
        %396 = vmatprep.subr.mxu0 0.0
        %397 = vmatpush1.xpose.msra.mxu0 0.0
        %398 = vmatprep.subr.mxu0 0.0
        %399 = vmatpush1.xpose.msra.mxu0 0.0
        %400 = vmatprep.subr.mxu0 0.0
        %401 = vmatpush1.xpose.msra.mxu0 0.0
        %402 = vmatprep.subr.mxu0 0.0
        %403 = vmatpush1.xpose.msra.mxu0 0.0
        %404 = vmatprep.subr.mxu0 0.0
        %405 = vmatpush1.xpose.msra.mxu0 0.0
        %406 = vmatprep.subr.mxu0 0.0
        %407 = vmatpush1.xpose.msra.mxu0 0.0
        %408 = vmatprep.subr.mxu0 0.0
        %409 = vmatpush1.xpose.msra.mxu0 0.0
        %410 = vmatprep.subr.mxu0 0.0
        %411 = vmatpush1.xpose.msra.mxu0 0.0
        %412 = vmatprep.subr.mxu0 0.0
        %413 = vmatpush1.xpose.msra.mxu0 0.0
        %414 = vmatprep.subr.mxu0 0.0
        %415 = vmatpush1.xpose.msra.mxu0 0.0
        %416 = vmatprep.subr.mxu0 0.0
        %417 = vmatpush1.xpose.msra.mxu0 %v384
        %418 = vmatprep.subr.mxu0 0.0
        %419 = vmatpush2.xpose.msra.mxu0 0.0
        %420 = vmatprep.subr.mxu0 0.0
        %421 = vmatpush2.xpose.msra.mxu0 0.0
        %422 = vmatprep.subr.mxu0 0.0
        %423 = vmatpush2.xpose.msra.mxu0 0.0
        %424 = vmatprep.subr.mxu0 0.0
        %425 = vmatpush2.xpose.msra.mxu0 0.0
        %426 = vmatprep.subr.mxu0 0.0
        %427 = vmatpush2.xpose.msra.mxu0 0.0
        %428 = vmatprep.subr.mxu0 0.0
        %429 = vmatpush2.xpose.msra.mxu0 0.0
        %430 = vmatprep.subr.mxu0 0.0
        %431 = vmatpush2.xpose.msra.mxu0 0.0
        %432 = vmatprep.subr.mxu0 0.0
        %433 = vmatpush2.xpose.msra.mxu0 0.0
        %434 = vmatprep.subr.mxu0 0.0
        %435 = vmatpush2.xpose.msra.mxu0 0.0
        %436 = vmatprep.subr.mxu0 0.0
        %437 = vmatpush2.xpose.msra.mxu0 0.0
        %438 = vmatprep.subr.mxu0 0.0
        %439 = vmatpush2.xpose.msra.mxu0 0.0
        %440 = vmatprep.subr.mxu0 0.0
        %441 = vmatpush2.xpose.msra.mxu0 0.0
        %442 = vmatprep.subr.mxu0 0.0
        %443 = vmatpush2.xpose.msra.mxu0 0.0
        %444 = vmatprep.subr.mxu0 0.0
        %445 = vmatpush2.xpose.msra.mxu0 0.0
        %446 = vmatprep.subr.mxu0 0.0
        %447 = vmatpush2.xpose.msra.mxu0 0.0
        %448 = vmatprep.subr.mxu0 0.0
        %449 = vmatpush2.xpose.msra.mxu0 0.0
        %450 = vmatprep.mubr.f32.mxu0 0.0
        %451 = vmatmul.mubr.f32.gmra.mxu0 %v381
        %v452 = vpop.f32.mrf.mxu0
        %v453 = vadd.f32 0.0, %v452
        %v454 = vpop.f32.mrf.mxu0
        %455 = vdwg.mxu0
        %v456 = vmul.f32 %v453, 0.35355338
        %v457 = vld [vmem:[%s364] sm:$0xff]
        %vm458 = vcmp.ne.s32.totalorder %v457, 0
        %v459 = vsel %vm458, %v456, -1e+09
        %v460 = vsel %vm379, %v459, -inf
        %461 = vmax.xlane.f32.xlu0 %v460
        %v462 = vpop.xlane.xlu0 %461
        %v463 = vsub.f32 %v459, %v462
        %v464 = vmul.f32 %v463, 1.442695
        %v465 = vpow.pop %v464
        %v466 = vsel %vm379, %v465, 0.0
        %467 = vadd.xlane.f32.xlu0 %v466
        %v468 = vpop.xlane.xlu0 %467
        %v469 = vrcp.pop %v468
        %v470 = vmul.f32 %v465, %v469
        %471 = vst.msk [vmem:[%s333] sm:$0xff] %vm379, %v470
        %v473 = vsel %vm379, %v470, 0
        %475 = vmatprep.subr.mxu0 0.0
        %476 = vmatpush1.msra.mxu0 0.0
        %477 = vmatprep.subr.mxu0 0.0
        %478 = vmatpush1.msra.mxu0 0.0
        %479 = vmatprep.subr.mxu0 0.0
        %480 = vmatpush1.msra.mxu0 0.0
        %481 = vmatprep.subr.mxu0 0.0
        %482 = vmatpush1.msra.mxu0 0.0
        %483 = vmatprep.subr.mxu0 0.0
        %484 = vmatpush1.msra.mxu0 0.0
        %485 = vmatprep.subr.mxu0 0.0
        %486 = vmatpush1.msra.mxu0 0.0
        %487 = vmatprep.subr.mxu0 0.0
        %488 = vmatpush1.msra.mxu0 0.0
        %489 = vmatprep.subr.mxu0 0.0
        %490 = vmatpush1.msra.mxu0 0.0
        %491 = vmatprep.subr.mxu0 0.0
        %492 = vmatpush1.msra.mxu0 0.0
        %493 = vmatprep.subr.mxu0 0.0
        %494 = vmatpush1.msra.mxu0 0.0
        %495 = vmatprep.subr.mxu0 0.0
        %496 = vmatpush1.msra.mxu0 0.0
        %497 = vmatprep.subr.mxu0 0.0
        %498 = vmatpush1.msra.mxu0 0.0
        %499 = vmatprep.subr.mxu0 0.0
        %500 = vmatpush1.msra.mxu0 0.0
        %501 = vmatprep.subr.mxu0 0.0
        %502 = vmatpush1.msra.mxu0 0.0
        %503 = vmatprep.subr.mxu0 0.0
        %504 = vmatpush1.msra.mxu0 0.0
        %505 = vmatprep.subr.mxu0 0.0
        %506 = vmatpush1.msra.mxu0 %v378
        %507 = vmatprep.subr.mxu0 0.0
        %508 = vmatpush2.msra.mxu0 0.0
        %509 = vmatprep.subr.mxu0 0.0
        %510 = vmatpush2.msra.mxu0 0.0
        %511 = vmatprep.subr.mxu0 0.0
        %512 = vmatpush2.msra.mxu0 0.0
        %513 = vmatprep.subr.mxu0 0.0
        %514 = vmatpush2.msra.mxu0 0.0
        %515 = vmatprep.subr.mxu0 0.0
        %516 = vmatpush2.msra.mxu0 0.0
        %517 = vmatprep.subr.mxu0 0.0
        %518 = vmatpush2.msra.mxu0 0.0
        %519 = vmatprep.subr.mxu0 0.0
        %520 = vmatpush2.msra.mxu0 0.0
        %521 = vmatprep.subr.mxu0 0.0
        %522 = vmatpush2.msra.mxu0 0.0
        %523 = vmatprep.subr.mxu0 0.0
        %524 = vmatpush2.msra.mxu0 0.0
        %525 = vmatprep.subr.mxu0 0.0
        %526 = vmatpush2.msra.mxu0 0.0
        %527 = vmatprep.subr.mxu0 0.0
        %528 = vmatpush2.msra.mxu0 0.0
        %529 = vmatprep.subr.mxu0 0.0
        %530 = vmatpush2.msra.mxu0 0.0
        %531 = vmatprep.subr.mxu0 0.0
        %532 = vmatpush2.msra.mxu0 0.0
        %533 = vmatprep.subr.mxu0 0.0
        %534 = vmatpush2.msra.mxu0 0.0
        %535 = vmatprep.subr.mxu0 0.0
        %536 = vmatpush2.msra.mxu0 0.0
        %537 = vmatprep.subr.mxu0 0.0
        %538 = vmatpush2.msra.mxu0 0.0
        %539 = vmatprep.mubr.f32.mxu0 0.0
        %540 = vmatmul.mubr.f32.gmra.mxu0 %v473
        %v541 = vpop.f32.mrf.mxu0
        %v542 = vadd.f32 0.0, %v541
        %v543 = vpop.f32.mrf.mxu0
        %544 = vdwg.mxu0
        %545 = vst.msk [vmem:[%s375] sm:$0xff] %vm379, %v542
        %p546 = scmp.lt.s32.totalorder %s25, 1
        %s547 = scalar_select %p546, %s25, 1
        %p548 = scmp.lt.s32.totalorder %s26, 3
        %s549 = scalar_select %p548, %s26, 3
        %p550 = scmp.lt.s32.totalorder %s27, 0
        %s551 = scalar_select %p550, %s27, 0
        %s552 = sadd.s32 %s551, %s549
        %s553 = smul.addr %s547, 4
        %s554 = sadd.s32 %s552, %s553
        %s555 = smul.addr %s554, 8
        %s556 = scalar_lea.vmem %s4, %s555
        %s557 = sand.u32 %s193, 1
        %s558 = scalar_lea.sflag [#allocation3], %s557
        %s559 = sand.u32 %s193, 1
        %s560 = smul.addr %s559, 8
        %s561 = scalar_lea.vmem [#allocation2], %s560
        // Predicated region
        $region37: #{decoder_layer.9} parent=35 // pred_check
          %p562 = pneg %p173
        $region38: #{decoder_layer.9} parent=35 // pred_check_branch
          %564 = sbr.rel (%p562) target = $region40
        $region39: #{decoder_layer.9} parent=35 // pred_region
          _
        $region40: #{decoder_layer.9} parent=35 // pred_fallthru
          _
        // Predicated region
        $region41: #{decoder_layer.9} parent=35 // pred_check
          %p565 = pneg %p203
        $region42: #{decoder_layer.9} parent=35 // pred_check_branch
          %567 = sbr.rel (%p565) target = $region44
        $region43: #{decoder_layer.9} parent=35 // pred_region
          %s569 = ssub.s32 128, 128
          %570 = vsyncadd %s558, %s569
          %s571 = sadd.s32 %s27, %s26
          %s572 = smul.addr %s25, 4
          %s573 = sadd.s32 %s571, %s572
          %s574 = smul.addr %s573, 128
          %s575 = scalar_lea.hbm %s5, %s574
          %s577 = sshll.u32 %s561, 4
          %s578 = int_to_ptr.vmem [resolvable:$true] %s577
          %580 = dma.vmem_to_hbm [thread:$0]  %s578, 128, %s575, %s558
        $region44: #{decoder_layer.9} parent=35 // pred_fallthru
          _
      $region36: #{decoder_layer.9} parent=5 // pred_fallthru
        _
      %p581 = scmp.le.s32.totalorder 2, %s15
      // Predicated region
      $region45: #{decoder_layer.9} parent=5 // pred_check
        %p582 = pneg %p581
      $region46: #{decoder_layer.9} parent=5 // pred_check_branch
        %584 = sbr.rel (%p582) target = $region48
      $region47: #{decoder_layer.9} parent=5 // pred_region
        %s585 = ssub.s32 %s15, 2
        // Predicated region
        $region49: #{decoder_layer.9} parent=47 // pred_check
          %p586 = pneg %p179
        $region50: #{decoder_layer.9} parent=47 // pred_check_branch
          %588 = sbr.rel (%p586) target = $region52
        $region51: #{decoder_layer.9} parent=47 // pred_region
          %p589 = scmp.lt.s32.totalorder %s28, 1
          %s590 = scalar_select %p589, %s28, 1
          %p591 = scmp.lt.s32.totalorder %s29, 3
          %s592 = scalar_select %p591, %s29, 3
          %p593 = scmp.lt.s32.totalorder %s30, 0
          %s594 = scalar_select %p593, %s30, 0
          %s595 = sadd.s32 %s594, %s592
          %s596 = smul.addr %s590, 4
          %s597 = sadd.s32 %s595, %s596
          %s598 = smul.addr %s597, 8
          %s599 = scalar_lea.vmem %s4, %s598
        $region52: #{decoder_layer.9} parent=47 // pred_fallthru
          _
        // Predicated region
        $region53: #{decoder_layer.9} parent=47 // pred_check
          %p600 = pneg %p209
        $region54: #{decoder_layer.9} parent=47 // pred_check_branch
          %602 = sbr.rel (%p600) target = $region56
        $region55: #{decoder_layer.9} parent=47 // pred_region
          %s603 = sand.u32 %s194, 1
          %s604 = scalar_lea.sflag [#allocation3], %s603
          %s605 = sand.u32 %s194, 1
          %s606 = smul.addr %s605, 8
          %s607 = scalar_lea.vmem [#allocation2], %s606
          %608 = dma.done %s604, 128
        $region56: #{decoder_layer.9} parent=47 // pred_fallthru
          _
      $region48: #{decoder_layer.9} parent=5 // pred_fallthru
        _
    $region6: #{decoder_layer.9} parent=1 // loop_footer
      %s19 = sadd.s32 1, %s15
    $region7: #{decoder_layer.9} parent=1 // loop_footer_branch
      %14 = sbr.rel target = $region3
    $region8: #{decoder_layer.9} parent=1 // loop_exit
      _
    %609 = vsyncpa [#allocation3], 1
    %s610 = scalar_lea.sflag [#allocation3], 1
    %611 = vsyncpa %s610, 1

// kernel: decoder_layer.12
$region0: #{decoder_layer.12}
  #allocation0 [shape = 'u32[]', space=smem, size = 0x4, offset = 0x4, fixed_abs, tag = 'smem constant byte address 0x4 - core index']
  #allocation1 [shape = 'u32[144,128]{1,0:T(1,128)}', space=vmem, size = 0x12000, scoped, tag = 'internal scratch']
  #allocation2 [shape = 'f32[16,64]{1,0:T(8,128)}', space=vmem, size = 0x2000, scoped, tag = 'scratch operand']
  %s0 = inlined_call_operand.vmem [shape: f32[16,32], index: 0, kind: input, shape index: {}]
  %s1 = inlined_call_operand.vmem [shape: f32[32,64], index: 1, kind: input, shape index: {}]
  %s2 = inlined_call_operand.vmem [shape: f32[1,64], index: 2, kind: input, shape index: {}]
  %s3 = inlined_call_operand.vmem [shape: f32[16,64], index: 3, kind: output, shape index: {}]
  %s4 = sld [smem:[#allocation0]]
  $region30: #{decoder_layer.12} parent=0
    _
  %s6 = ssub.s32 1, %s4
  %s7 = scalar_select 0, %s6, %s4
  // Predicated region
  $region2: #{decoder_layer.12} parent=0 // pred_check
    _
  $region3: #{decoder_layer.12} parent=0 // pred_check_branch
    %9 = sbr.rel (0) target = $region5
  $region4: #{decoder_layer.12} parent=0 // pred_region
    _
  $region5: #{decoder_layer.12} parent=0 // pred_fallthru
    _
  // Predicated region
  $region6: #{decoder_layer.12} parent=0 // pred_check
    _
  $region7: #{decoder_layer.12} parent=0 // pred_check_branch
    %11 = sbr.rel (0) target = $region9
  $region8: #{decoder_layer.12} parent=0 // pred_region
    _
  $region9: #{decoder_layer.12} parent=0 // pred_fallthru
    _
  // Predicated region
  $region10: #{decoder_layer.12} parent=0 // pred_check
    _
  $region11: #{decoder_layer.12} parent=0 // pred_check_branch
    %13 = sbr.rel (0) target = $region13
  $region12: #{decoder_layer.12} parent=0 // pred_region
    _
  $region13: #{decoder_layer.12} parent=0 // pred_fallthru
    _
  %p14 = scmp.eq.s32.totalorder 0, 0
  // Predicated region
  $region14: #{decoder_layer.12} parent=0 // pred_check
    %p15 = pneg %p14
  $region15: #{decoder_layer.12} parent=0 // pred_check_branch
    %17 = sbr.rel (%p15) target = $region17
  $region16: #{decoder_layer.12} parent=0 // pred_region
    %vm18 = vcmask 523264
    %19 = vst.msk [vmem:[#allocation2] sm:$0xff] %vm18, 0.0
    %20 = vst.msk [vmem:[#allocation2 + $0x8] sm:$0xff] %vm18, 0.0
  $region17: #{decoder_layer.12} parent=0 // pred_fallthru
    _
  %v21 = vld [vmem:[#allocation2] sm:$0xff]
  %v22 = vld [vmem:[#allocation2 + $0x8] sm:$0xff]
  %v23 = vld [vmem:[%s0] sm:$0xff]
  %v24 = vld [vmem:[%s0 + $0x8] sm:$0xff]
  %v25 = vld [vmem:[%s1] sm:$0xff]
  %v26 = vld [vmem:[%s1 + $0x8] sm:$0xff]
  %v27 = vld [vmem:[%s1 + $0x10] sm:$0xff]
  %v28 = vld [vmem:[%s1 + $0x18] sm:$0xff]
  %vm29 = vcmask 261120
  %v31 = vsel %vm29, %v23, 0
  %v34 = vsel %vm29, %v24, 0
  %36 = vmatprep.subr.mxu0 0.0
  %37 = vmatpush1.msra.mxu0 0.0
  %38 = vmatprep.subr.mxu0 0.0
  %39 = vmatpush1.msra.mxu0 0.0
  %40 = vmatprep.subr.mxu0 0.0
  %41 = vmatpush1.msra.mxu0 0.0
  %42 = vmatprep.subr.mxu0 0.0
  %43 = vmatpush1.msra.mxu0 0.0
  %44 = vmatprep.subr.mxu0 0.0
  %45 = vmatpush1.msra.mxu0 0.0
  %46 = vmatprep.subr.mxu0 0.0
  %47 = vmatpush1.msra.mxu0 0.0
  %48 = vmatprep.subr.mxu0 0.0
  %49 = vmatpush1.msra.mxu0 0.0
  %50 = vmatprep.subr.mxu0 0.0
  %51 = vmatpush1.msra.mxu0 0.0
  %52 = vmatprep.subr.mxu0 0.0
  %53 = vmatpush1.msra.mxu0 0.0
  %54 = vmatprep.subr.mxu0 0.0
  %55 = vmatpush1.msra.mxu0 0.0
  %56 = vmatprep.subr.mxu0 0.0
  %57 = vmatpush1.msra.mxu0 0.0
  %58 = vmatprep.subr.mxu0 0.0
  %59 = vmatpush1.msra.mxu0 0.0
  %60 = vmatprep.subr.mxu0 0.0
  %61 = vmatpush1.msra.mxu0 %v28
  %62 = vmatprep.subr.mxu0 0.0
  %63 = vmatpush1.msra.mxu0 %v27
  %64 = vmatprep.subr.mxu0 0.0
  %65 = vmatpush1.msra.mxu0 %v26
  %66 = vmatprep.subr.mxu0 0.0
  %67 = vmatpush1.msra.mxu0 %v25
  %68 = vmatprep.subr.mxu0 0.0
  %69 = vmatpush2.msra.mxu0 0.0
  %70 = vmatprep.subr.mxu0 0.0
  %71 = vmatpush2.msra.mxu0 0.0
  %72 = vmatprep.subr.mxu0 0.0
  %73 = vmatpush2.msra.mxu0 0.0
  %74 = vmatprep.subr.mxu0 0.0
  %75 = vmatpush2.msra.mxu0 0.0
  %76 = vmatprep.subr.mxu0 0.0
  %77 = vmatpush2.msra.mxu0 0.0
  %78 = vmatprep.subr.mxu0 0.0
  %79 = vmatpush2.msra.mxu0 0.0
  %80 = vmatprep.subr.mxu0 0.0
  %81 = vmatpush2.msra.mxu0 0.0
  %82 = vmatprep.subr.mxu0 0.0
  %83 = vmatpush2.msra.mxu0 0.0
  %84 = vmatprep.subr.mxu0 0.0
  %85 = vmatpush2.msra.mxu0 0.0
  %86 = vmatprep.subr.mxu0 0.0
  %87 = vmatpush2.msra.mxu0 0.0
  %88 = vmatprep.subr.mxu0 0.0
  %89 = vmatpush2.msra.mxu0 0.0
  %90 = vmatprep.subr.mxu0 0.0
  %91 = vmatpush2.msra.mxu0 0.0
  %92 = vmatprep.subr.mxu0 0.0
  %93 = vmatpush2.msra.mxu0 0.0
  %94 = vmatprep.subr.mxu0 0.0
  %95 = vmatpush2.msra.mxu0 0.0
  %96 = vmatprep.subr.mxu0 0.0
  %97 = vmatpush2.msra.mxu0 0.0
  %98 = vmatprep.subr.mxu0 0.0
  %99 = vmatpush2.msra.mxu0 0.0
  %100 = vmatprep.mubr.f32.mxu0 0.0
  %101 = vmatmul.mubr.f32.gmra.mxu0 %v31
  %v102 = vpop.f32.mrf.mxu0
  %v103 = vadd.f32 0.0, %v102
  %v104 = vpop.f32.mrf.mxu0
  %105 = vmatprep.mubr.f32.mxu0 0.0
  %106 = vmatmul.mubr.f32.gmra.mxu0 %v34
  %v107 = vpop.f32.mrf.mxu0
  %v108 = vadd.f32 0.0, %v107
  %v109 = vpop.f32.mrf.mxu0
  %110 = vdwg.mxu0
  %v111 = vadd.f32 %v21, %v103
  %v112 = vadd.f32 %v22, %v108
  %vm113 = vcmask 523264
  %114 = vst.msk [vmem:[#allocation2] sm:$0xff] %vm113, %v111
  %115 = vst.msk [vmem:[#allocation2 + $0x8] sm:$0xff] %vm113, %v112
  // Predicated region
  $region18: #{decoder_layer.12} parent=0 // pred_check
    %p116 = pneg %p14
  $region19: #{decoder_layer.12} parent=0 // pred_check_branch
    %118 = sbr.rel (%p116) target = $region21
  $region20: #{decoder_layer.12} parent=0 // pred_region
    %v119 = vld [vmem:[#allocation2] sm:$0xff]
    %v120 = vld [vmem:[#allocation2 + $0x8] sm:$0xff]
    %v121 = vld [vmem:[%s2] sm:$0x1]
    %v123 = vlaneseq
    %v124 = vshrl.u32 %v123, 7
    %v125 = vsub.s32 0, %v124
    %v126 = vrot.slane %v121, %v125
    %v128 = vadd.f32 %v119, %v126
    %v129 = vadd.f32 %v120, %v126
    %130 = vst.msk [vmem:[%s3] sm:$0xff] %vm113, %v128
    %131 = vst.msk [vmem:[%s3 + $0x8] sm:$0xff] %vm113, %v129
  $region21: #{decoder_layer.12} parent=0 // pred_fallthru
    _
  // Predicated region
  $region22: #{decoder_layer.12} parent=0 // pred_check
    _
  $region23: #{decoder_layer.12} parent=0 // pred_check_branch
    %133 = sbr.rel (0) target = $region25
  $region24: #{decoder_layer.12} parent=0 // pred_region
    _
  $region25: #{decoder_layer.12} parent=0 // pred_fallthru
    _
  // Predicated region
  $region26: #{decoder_layer.12} parent=0 // pred_check
    _
  $region27: #{decoder_layer.12} parent=0 // pred_check_branch
    %135 = sbr.rel (0) target = $region29
  $region28: #{decoder_layer.12} parent=0 // pred_region
    _
  $region29: #{decoder_layer.12} parent=0 // pred_fallthru
    _

// kernel: decoder_layer.13
$region0: #{decoder_layer.13}
  #allocation0 [shape = 'u32[]', space=smem, size = 0x4, offset = 0x4, fixed_abs, tag = 'smem constant byte address 0x4 - core index']
  #allocation1 [shape = 'u32[144,128]{1,0:T(1,128)}', space=vmem, size = 0x12000, scoped, tag = 'internal scratch']
  %s0 = inlined_call_operand.vmem [shape: f32[2,4,8,8], index: 0, kind: input, shape index: {}]
  %s1 = inlined_call_operand.vmem [shape: f32[2,4,8,8], index: 1, kind: input, shape index: {}]
  %s2 = inlined_call_operand.vmem [shape: f32[2,4,8,8], index: 2, kind: input, shape index: {}]
  %s3 = inlined_call_operand.vmem [shape: f32[2,4,8,8], index: 3, kind: output, shape index: {0}]
  %s4 = inlined_call_operand.hbm [shape: f32[2,4,8,8], index: 4, kind: output, shape index: {1}]
  %5 = xla_tuple %s3, %s4
  %s6 = sld [smem:[#allocation0]]
  $region53: #{decoder_layer.13} parent=0
    _
  %s8 = ssub.s32 1, %s6
  %s9 = scalar_select 0, %s8, %s6
  $region1: #{decoder_layer.13} parent=0
    #allocation2 [shape = 'u8[8192]{0}', space=vmem, size = 0x2000, scoped, tag = 'output window, operand 1']
    #allocation3 [shape = 's32[2]{0}', space=sflag, size = 0x8, scoped, tag = 'scoped memory for decoder_layer.13']
    %10 = vsyncpa [#allocation3], 0
    %s11 = scalar_lea.sflag [#allocation3], 1
    %12 = vsyncpa %s11, 0
    loop: start=0, step=1, limit=10
    $region2: #{decoder_layer.13} parent=1 // loop_pre_header
      _
    $region3: #{decoder_layer.13} parent=1 // loop_header
      %s14 = sphi 0, %s18
      %p15 = scmp.ge.s32.totalorder %s14, 10
      %s21 = sphi 0, %s40
      %s22 = sphi 0, %s36
      %s23 = sphi 0, %s32
      %s24 = sphi 0, %s21
      %s25 = sphi 0, %s22
      %s26 = sphi 0, %s23
      %s27 = sphi 0, %s24
      %s28 = sphi 0, %s25
      %s29 = sphi 0, %s26
      %s47 = sphi 0, %s49
      %s50 = sphi 0, %s47
      %s51 = sphi 0, %s50
      %s67 = sphi 0, %s51
      %s75 = sphi 0, %s77
      %s78 = sphi 0, %s75
      %s79 = sphi 0, %s78
      %s95 = sphi 0, %s79
      %s103 = sphi 0, %s105
      %s106 = sphi 0, %s103
      %s107 = sphi 0, %s106
      %s123 = sphi 0, %s107
      %s133 = sphi 0, %s135
      %s136 = sphi 0, %s133
      %s137 = sphi 0, %s136
      %s153 = sphi 0, %s137
      %s163 = sphi 0, %s165
      %s166 = sphi 0, %s163
      %s167 = sphi 0, %s166
      %s183 = sphi 0, %s167
    $region4: #{decoder_layer.13} parent=1 // loop_header_branch
      %17 = sbr.rel (%p15) target = $region8
    $region5: #{decoder_layer.13} parent=1 // loop_body
      %s19 = ssub.s32 %s14, 1
      %s20 = ssub.s32 %s14, 2
      %s30 = sadd.s32 1, %s23
      %p31 = scmp.ge.s32.totalorder %s30, 1
      %s32 = scalar_select %p31, 0, %s30
      %s33 = sadd.s32 1, %s22
      %s34 = scalar_select %p31, %s33, %s22
      %p35 = scmp.ge.s32.totalorder %s34, 4
      %s36 = scalar_select %p35, 0, %s34
      %s37 = sadd.s32 1, %s21
      %s38 = scalar_select %p35, %s37, %s21
      %p39 = scmp.ge.s32.totalorder %s38, 2
      %s40 = scalar_select %p39, 0, %s38
      %s41 = ssub.s32 %s21, %s40
      %s42 = ssub.s32 %s22, %s36
      %s43 = sor.u32 %s41, %s42
      %s44 = ssub.s32 %s23, %s32
      %s45 = sor.u32 %s43, %s44
      %p46 = scmp.eq.s32.totalorder %s45, 0
      %s48 = sadd.s32 %s47, 1
      %s49 = scalar_select %p46, %s47, %s48
      %p52 = pneg %p46
      %p53 = scmp.eq.s32.totalorder %s14, 7
      %p54 = por %p52, %p53
      %p55 = scmp.ne.s32.totalorder %s47, %s50
      %p56 = scmp.eq.s32.totalorder %s14, 0
      %p57 = por %p55, %p56
      %p58 = scmp.ne.s32.totalorder %s47, %s50
      %p59 = scmp.eq.s32.totalorder %s19, 7
      %p60 = por %p58, %p59
      %p61 = scmp.ne.s32.totalorder %s50, %s51
      %p62 = scmp.eq.s32.totalorder %s19, 0
      %p63 = por %p61, %p62
      %p64 = scmp.ne.s32.totalorder %s50, %s51
      %p65 = scmp.eq.s32.totalorder %s20, 7
      %p66 = por %p64, %p65
      %p68 = scmp.ne.s32.totalorder %s51, %s67
      %p69 = scmp.eq.s32.totalorder %s20, 0
      %p70 = por %p68, %p69
      %s71 = ssub.s32 %s21, %s40
      %s72 = ssub.s32 %s22, %s36
      %s73 = sor.u32 %s71, %s72
      %p74 = scmp.eq.s32.totalorder %s73, 0
      %s76 = sadd.s32 %s75, 1
      %s77 = scalar_select %p74, %s75, %s76
      %p80 = pneg %p74
      %p81 = scmp.eq.s32.totalorder %s14, 7
      %p82 = por %p80, %p81
      %p83 = scmp.ne.s32.totalorder %s75, %s78
      %p84 = scmp.eq.s32.totalorder %s14, 0
      %p85 = por %p83, %p84
      %p86 = scmp.ne.s32.totalorder %s75, %s78
      %p87 = scmp.eq.s32.totalorder %s19, 7
      %p88 = por %p86, %p87
      %p89 = scmp.ne.s32.totalorder %s78, %s79
      %p90 = scmp.eq.s32.totalorder %s19, 0
      %p91 = por %p89, %p90
      %p92 = scmp.ne.s32.totalorder %s78, %s79
      %p93 = scmp.eq.s32.totalorder %s20, 7
      %p94 = por %p92, %p93
      %p96 = scmp.ne.s32.totalorder %s79, %s95
      %p97 = scmp.eq.s32.totalorder %s20, 0
      %p98 = por %p96, %p97
      %s99 = ssub.s32 %s21, %s40
      %s100 = ssub.s32 %s22, %s36
      %s101 = sor.u32 %s99, %s100
      %p102 = scmp.eq.s32.totalorder %s101, 0
      %s104 = sadd.s32 %s103, 1
      %s105 = scalar_select %p102, %s103, %s104
      %p108 = pneg %p102
      %p109 = scmp.eq.s32.totalorder %s14, 7
      %p110 = por %p108, %p109
      %p111 = scmp.ne.s32.totalorder %s103, %s106
      %p112 = scmp.eq.s32.totalorder %s14, 0
      %p113 = por %p111, %p112
      %p114 = scmp.ne.s32.totalorder %s103, %s106
      %p115 = scmp.eq.s32.totalorder %s19, 7
      %p116 = por %p114, %p115
      %p117 = scmp.ne.s32.totalorder %s106, %s107
      %p118 = scmp.eq.s32.totalorder %s19, 0
      %p119 = por %p117, %p118
      %p120 = scmp.ne.s32.totalorder %s106, %s107
      %p121 = scmp.eq.s32.totalorder %s20, 7
      %p122 = por %p120, %p121
      %p124 = scmp.ne.s32.totalorder %s107, %s123
      %p125 = scmp.eq.s32.totalorder %s20, 0
      %p126 = por %p124, %p125
      %s127 = ssub.s32 %s21, %s40
      %s128 = ssub.s32 %s22, %s36
      %s129 = sor.u32 %s127, %s128
      %s130 = ssub.s32 %s23, %s32
      %s131 = sor.u32 %s129, %s130
      %p132 = scmp.eq.s32.totalorder %s131, 0
      %s134 = sadd.s32 %s133, 1
      %s135 = scalar_select %p132, %s133, %s134
      %p138 = pneg %p132
      %p139 = scmp.eq.s32.totalorder %s14, 7
      %p140 = por %p138, %p139
      %p141 = scmp.ne.s32.totalorder %s133, %s136
      %p142 = scmp.eq.s32.totalorder %s14, 0
      %p143 = por %p141, %p142
      %p144 = scmp.ne.s32.totalorder %s133, %s136
      %p145 = scmp.eq.s32.totalorder %s19, 7
      %p146 = por %p144, %p145
      %p147 = scmp.ne.s32.totalorder %s136, %s137
      %p148 = scmp.eq.s32.totalorder %s19, 0
      %p149 = por %p147, %p148
      %p150 = scmp.ne.s32.totalorder %s136, %s137
      %p151 = scmp.eq.s32.totalorder %s20, 7
      %p152 = por %p150, %p151
      %p154 = scmp.ne.s32.totalorder %s137, %s153
      %p155 = scmp.eq.s32.totalorder %s20, 0
      %p156 = por %p154, %p155
      %s157 = ssub.s32 %s21, %s40
      %s158 = ssub.s32 %s22, %s36
      %s159 = sor.u32 %s157, %s158
      %s160 = ssub.s32 %s23, %s32
      %s161 = sor.u32 %s159, %s160
      %p162 = scmp.eq.s32.totalorder %s161, 0
      %s164 = sadd.s32 %s163, 1
      %s165 = scalar_select %p162, %s163, %s164
      %p168 = pneg %p162
      %p169 = scmp.eq.s32.totalorder %s14, 7
      %p170 = por %p168, %p169
      %p171 = scmp.ne.s32.totalorder %s163, %s166
      %p172 = scmp.eq.s32.totalorder %s14, 0
      %p173 = por %p171, %p172
      %p174 = scmp.ne.s32.totalorder %s163, %s166
      %p175 = scmp.eq.s32.totalorder %s19, 7
      %p176 = por %p174, %p175
      %p177 = scmp.ne.s32.totalorder %s166, %s167
      %p178 = scmp.eq.s32.totalorder %s19, 0
      %p179 = por %p177, %p178
      %p180 = scmp.ne.s32.totalorder %s166, %s167
      %p181 = scmp.eq.s32.totalorder %s20, 7
      %p182 = por %p180, %p181
      %p184 = scmp.ne.s32.totalorder %s167, %s183
      %p185 = scmp.eq.s32.totalorder %s20, 0
      %p186 = por %p184, %p185
      %p187 = scmp.le.s32.totalorder 1, %s14
      %p188 = scmp.lt.s32.totalorder %s14, 9
      %p189 = pnand %p187, %p188
      %p190 = pneg %p189
      // Predicated region
      $region9: #{decoder_layer.13} parent=5 // pred_check
        _
      $region10: #{decoder_layer.13} parent=5 // pred_check_branch
        %192 = sbr.rel (%p189) target = $region12
      $region11: #{decoder_layer.13} parent=5 // pred_region
        %s193 = ssub.s32 %s14, 1
      $region12: #{decoder_layer.13} parent=5 // pred_fallthru
        _
      %p194 = scmp.lt.s32.totalorder %s14, 8
      // Predicated region
      $region13: #{decoder_layer.13} parent=5 // pred_check
        %p195 = pneg %p194
      $region14: #{decoder_layer.13} parent=5 // pred_check_branch
        %197 = sbr.rel (%p195) target = $region16
      $region15: #{decoder_layer.13} parent=5 // pred_region
        // Predicated region
        $region17: #{decoder_layer.13} parent=15 // pred_check
          %p198 = pneg %p57
        $region18: #{decoder_layer.13} parent=15 // pred_check_branch
          %200 = sbr.rel (%p198) target = $region20
        $region19: #{decoder_layer.13} parent=15 // pred_region
          %p201 = scmp.lt.s32.totalorder %s21, 1
          %s202 = scalar_select %p201, %s21, 1
          %p203 = scmp.lt.s32.totalorder %s22, 3
          %s204 = scalar_select %p203, %s22, 3
          %p205 = scmp.lt.s32.totalorder %s23, 0
          %s206 = scalar_select %p205, %s23, 0
          %s207 = sadd.s32 %s206, %s204
          %s208 = smul.addr %s202, 4
          %s209 = sadd.s32 %s207, %s208
          %s210 = smul.addr %s209, 8
          %s211 = scalar_lea.vmem %s0, %s210
        $region20: #{decoder_layer.13} parent=15 // pred_fallthru
          _
        // Predicated region
        $region21: #{decoder_layer.13} parent=15 // pred_check
          %p212 = pneg %p85
        $region22: #{decoder_layer.13} parent=15 // pred_check_branch
          %214 = sbr.rel (%p212) target = $region24
        $region23: #{decoder_layer.13} parent=15 // pred_region
          %p215 = scmp.lt.s32.totalorder %s21, 1
          %s216 = scalar_select %p215, %s21, 1
          %p217 = scmp.lt.s32.totalorder %s22, 3
          %s218 = scalar_select %p217, %s22, 3
          %s219 = smul.addr %s216, 4
          %s220 = sadd.s32 %s218, %s219
          %s221 = smul.addr %s220, 8
          %s222 = scalar_lea.vmem %s1, %s221
        $region24: #{decoder_layer.13} parent=15 // pred_fallthru
          _
        // Predicated region
        $region25: #{decoder_layer.13} parent=15 // pred_check
          %p223 = pneg %p113
        $region26: #{decoder_layer.13} parent=15 // pred_check_branch
          %225 = sbr.rel (%p223) target = $region28
        $region27: #{decoder_layer.13} parent=15 // pred_region
          %p226 = scmp.lt.s32.totalorder %s21, 1
          %s227 = scalar_select %p226, %s21, 1
          %p228 = scmp.lt.s32.totalorder %s22, 3
          %s229 = scalar_select %p228, %s22, 3
          %s230 = smul.addr %s227, 4
          %s231 = sadd.s32 %s229, %s230
          %s232 = smul.addr %s231, 8
          %s233 = scalar_lea.vmem %s2, %s232
        $region28: #{decoder_layer.13} parent=15 // pred_fallthru
          _
      $region16: #{decoder_layer.13} parent=5 // pred_fallthru
        _
      %p234 = scmp.le.s32.totalorder 1, %s14
      %p235 = scmp.lt.s32.totalorder %s14, 9
      %p236 = pnand %p234, %p235
      %p237 = pneg %p236
      // Predicated region
      $region29: #{decoder_layer.13} parent=5 // pred_check
        _
      $region30: #{decoder_layer.13} parent=5 // pred_check_branch
        %239 = sbr.rel (%p236) target = $region32
      $region31: #{decoder_layer.13} parent=5 // pred_region
        %s240 = ssub.s32 %s14, 1
        %p241 = scmp.lt.s32.totalorder %s24, 1
        %s242 = scalar_select %p241, %s24, 1
        %p243 = scmp.lt.s32.totalorder %s25, 3
        %s244 = scalar_select %p243, %s25, 3
        %p245 = scmp.lt.s32.totalorder %s26, 0
        %s246 = scalar_select %p245, %s26, 0
        %s247 = sadd.s32 %s246, %s244
        %s248 = smul.addr %s242, 4
        %s249 = sadd.s32 %s247, %s248
        %s250 = smul.addr %s249, 8
        %s251 = scalar_lea.vmem %s0, %s250
        %p252 = pneg %p63
        %p253 = pneg %p60
        %p254 = scmp.lt.s32.totalorder %s24, 1
        %s255 = scalar_select %p254, %s24, 1
        %p256 = scmp.lt.s32.totalorder %s25, 3
        %s257 = scalar_select %p256, %s25, 3
        %s258 = smul.addr %s255, 4
        %s259 = sadd.s32 %s257, %s258
        %s260 = smul.addr %s259, 8
        %s261 = scalar_lea.vmem %s1, %s260
        %p262 = pneg %p91
        %p263 = pneg %p88
        %p264 = scmp.lt.s32.totalorder %s24, 1
        %s265 = scalar_select %p264, %s24, 1
        %p266 = scmp.lt.s32.totalorder %s25, 3
        %s267 = scalar_select %p266, %s25, 3
        %s268 = smul.addr %s265, 4
        %s269 = sadd.s32 %s267, %s268
        %s270 = smul.addr %s269, 8
        %s271 = scalar_lea.vmem %s2, %s270
        %p272 = pneg %p119
        %p273 = pneg %p116
        %p274 = pneg %p149
        %p275 = pneg %p146
        %p276 = scmp.lt.s32.totalorder %s24, 1
        %s277 = scalar_select %p276, %s24, 1
        %p278 = scmp.lt.s32.totalorder %s25, 3
        %s279 = scalar_select %p278, %s25, 3
        %p280 = scmp.lt.s32.totalorder %s26, 0
        %s281 = scalar_select %p280, %s26, 0
        %s282 = sadd.s32 %s281, %s279
        %s283 = smul.addr %s277, 4
        %s284 = sadd.s32 %s282, %s283
        %s285 = smul.addr %s284, 8
        %s286 = scalar_lea.vmem %s3, %s285
        %p287 = pneg %p179
        %p288 = pneg %p176
        %s289 = sand.u32 %s166, 1
        %s290 = scalar_lea.sflag [#allocation3], %s289
        %s291 = sand.u32 %s166, 1
        %s292 = smul.addr %s291, 8
        %s293 = scalar_lea.vmem [#allocation2], %s292
        %p294 = scmp.lt.s32.totalorder %s24, 1
        %s295 = scalar_select %p294, %s24, 1
        %p296 = scmp.lt.s32.totalorder %s25, 3
        %s297 = scalar_select %p296, %s25, 3
        %p298 = scmp.lt.s32.totalorder %s26, 0
        %s299 = scalar_select %p298, %s26, 0
        %s300 = sadd.s32 %s299, %s297
        %s301 = smul.addr %s295, 4
        %s302 = sadd.s32 %s300, %s301
        %s303 = smul.addr %s302, 8
        %s304 = scalar_lea.vmem %s0, %s303
        %p305 = scmp.lt.s32.totalorder %s24, 1
        %s306 = scalar_select %p305, %s24, 1
        %p307 = scmp.lt.s32.totalorder %s25, 3
        %s308 = scalar_select %p307, %s25, 3
        %s309 = smul.addr %s306, 4
        %s310 = sadd.s32 %s308, %s309
        %s311 = smul.addr %s310, 8
        %s312 = scalar_lea.vmem %s1, %s311
        %p313 = scmp.lt.s32.totalorder %s24, 1
        %s314 = scalar_select %p313, %s24, 1
        %p315 = scmp.lt.s32.totalorder %s25, 3
        %s316 = scalar_select %p315, %s25, 3
        %s317 = smul.addr %s314, 4
        %s318 = sadd.s32 %s316, %s317
        %s319 = smul.addr %s318, 8
        %s320 = scalar_lea.vmem %s2, %s319
        %p321 = scmp.lt.s32.totalorder %s24, 1
        %s322 = scalar_select %p321, %s24, 1
        %p323 = scmp.lt.s32.totalorder %s25, 3
        %s324 = scalar_select %p323, %s25, 3
        %p325 = scmp.lt.s32.totalorder %s26, 0
        %s326 = scalar_select %p325, %s26, 0
        %s327 = sadd.s32 %s326, %s324
        %s328 = smul.addr %s322, 4
        %s329 = sadd.s32 %s327, %s328
        %s330 = smul.addr %s329, 8
        %s331 = scalar_lea.vmem %s3, %s330
        %v332 = vld [vmem:[%s304] sm:$0xff]
        %v333 = vld [vmem:[%s312] sm:$0xff]
        %v334 = vld [vmem:[%s320] sm:$0xff]
        %vm335 = vcmask 64512
        %v337 = vsel %vm335, %v332, 0
        %v340 = vsel %vm335, %v333, 0
        %342 = vmatprep.subr.mxu0 0.0
        %343 = vmatpush1.xpose.msra.mxu0 0.0
        %344 = vmatprep.subr.mxu0 0.0
        %345 = vmatpush1.xpose.msra.mxu0 0.0
        %346 = vmatprep.subr.mxu0 0.0
        %347 = vmatpush1.xpose.msra.mxu0 0.0
        %348 = vmatprep.subr.mxu0 0.0
        %349 = vmatpush1.xpose.msra.mxu0 0.0
        %350 = vmatprep.subr.mxu0 0.0
        %351 = vmatpush1.xpose.msra.mxu0 0.0
        %352 = vmatprep.subr.mxu0 0.0
        %353 = vmatpush1.xpose.msra.mxu0 0.0
        %354 = vmatprep.subr.mxu0 0.0
        %355 = vmatpush1.xpose.msra.mxu0 0.0
        %356 = vmatprep.subr.mxu0 0.0
        %357 = vmatpush1.xpose.msra.mxu0 0.0
        %358 = vmatprep.subr.mxu0 0.0
        %359 = vmatpush1.xpose.msra.mxu0 0.0
        %360 = vmatprep.subr.mxu0 0.0
        %361 = vmatpush1.xpose.msra.mxu0 0.0
        %362 = vmatprep.subr.mxu0 0.0
        %363 = vmatpush1.xpose.msra.mxu0 0.0
        %364 = vmatprep.subr.mxu0 0.0
        %365 = vmatpush1.xpose.msra.mxu0 0.0
        %366 = vmatprep.subr.mxu0 0.0
        %367 = vmatpush1.xpose.msra.mxu0 0.0
        %368 = vmatprep.subr.mxu0 0.0
        %369 = vmatpush1.xpose.msra.mxu0 0.0
        %370 = vmatprep.subr.mxu0 0.0
        %371 = vmatpush1.xpose.msra.mxu0 0.0
        %372 = vmatprep.subr.mxu0 0.0
        %373 = vmatpush1.xpose.msra.mxu0 %v340
        %374 = vmatprep.subr.mxu0 0.0
        %375 = vmatpush2.xpose.msra.mxu0 0.0
        %376 = vmatprep.subr.mxu0 0.0
        %377 = vmatpush2.xpose.msra.mxu0 0.0
        %378 = vmatprep.subr.mxu0 0.0
        %379 = vmatpush2.xpose.msra.mxu0 0.0
        %380 = vmatprep.subr.mxu0 0.0
        %381 = vmatpush2.xpose.msra.mxu0 0.0
        %382 = vmatprep.subr.mxu0 0.0
        %383 = vmatpush2.xpose.msra.mxu0 0.0
        %384 = vmatprep.subr.mxu0 0.0
        %385 = vmatpush2.xpose.msra.mxu0 0.0
        %386 = vmatprep.subr.mxu0 0.0
        %387 = vmatpush2.xpose.msra.mxu0 0.0
        %388 = vmatprep.subr.mxu0 0.0
        %389 = vmatpush2.xpose.msra.mxu0 0.0
        %390 = vmatprep.subr.mxu0 0.0
        %391 = vmatpush2.xpose.msra.mxu0 0.0
        %392 = vmatprep.subr.mxu0 0.0
        %393 = vmatpush2.xpose.msra.mxu0 0.0
        %394 = vmatprep.subr.mxu0 0.0
        %395 = vmatpush2.xpose.msra.mxu0 0.0
        %396 = vmatprep.subr.mxu0 0.0
        %397 = vmatpush2.xpose.msra.mxu0 0.0
        %398 = vmatprep.subr.mxu0 0.0
        %399 = vmatpush2.xpose.msra.mxu0 0.0
        %400 = vmatprep.subr.mxu0 0.0
        %401 = vmatpush2.xpose.msra.mxu0 0.0
        %402 = vmatprep.subr.mxu0 0.0
        %403 = vmatpush2.xpose.msra.mxu0 0.0
        %404 = vmatprep.subr.mxu0 0.0
        %405 = vmatpush2.xpose.msra.mxu0 0.0
        %406 = vmatprep.mubr.f32.mxu0 0.0
        %407 = vmatmul.mubr.f32.gmra.mxu0 %v337
        %v408 = vpop.f32.mrf.mxu0
        %v409 = vadd.f32 0.0, %v408
        %v410 = vpop.f32.mrf.mxu0
        %411 = vdwg.mxu0
        %v412 = vmul.f32 %v409, 0.35355338
        %v413 = vsel %vm335, %v412, -inf
        %414 = vmax.xlane.f32.xlu0 %v413
        %v415 = vpop.xlane.xlu0 %414
        %v416 = vsub.f32 %v412, %v415
        %v417 = vmul.f32 %v416, 1.442695
        %v418 = vpow.pop %v417
        %v419 = vsel %vm335, %v418, 0.0
        %420 = vadd.xlane.f32.xlu0 %v419
        %v421 = vpop.xlane.xlu0 %420
        %v422 = vrcp.pop %v421
        %v423 = vmul.f32 %v418, %v422
        %424 = vst.msk [vmem:[%s293] sm:$0xff] %vm335, %v423
        %v426 = vsel %vm335, %v423, 0
        %428 = vmatprep.subr.mxu0 0.0
        %429 = vmatpush1.msra.mxu0 0.0
        %430 = vmatprep.subr.mxu0 0.0
        %431 = vmatpush1.msra.mxu0 0.0
        %432 = vmatprep.subr.mxu0 0.0
        %433 = vmatpush1.msra.mxu0 0.0
        %434 = vmatprep.subr.mxu0 0.0
        %435 = vmatpush1.msra.mxu0 0.0
        %436 = vmatprep.subr.mxu0 0.0
        %437 = vmatpush1.msra.mxu0 0.0
        %438 = vmatprep.subr.mxu0 0.0
        %439 = vmatpush1.msra.mxu0 0.0
        %440 = vmatprep.subr.mxu0 0.0
        %441 = vmatpush1.msra.mxu0 0.0
        %442 = vmatprep.subr.mxu0 0.0
        %443 = vmatpush1.msra.mxu0 0.0
        %444 = vmatprep.subr.mxu0 0.0
        %445 = vmatpush1.msra.mxu0 0.0
        %446 = vmatprep.subr.mxu0 0.0
        %447 = vmatpush1.msra.mxu0 0.0
        %448 = vmatprep.subr.mxu0 0.0
        %449 = vmatpush1.msra.mxu0 0.0
        %450 = vmatprep.subr.mxu0 0.0
        %451 = vmatpush1.msra.mxu0 0.0
        %452 = vmatprep.subr.mxu0 0.0
        %453 = vmatpush1.msra.mxu0 0.0
        %454 = vmatprep.subr.mxu0 0.0
        %455 = vmatpush1.msra.mxu0 0.0
        %456 = vmatprep.subr.mxu0 0.0
        %457 = vmatpush1.msra.mxu0 0.0
        %458 = vmatprep.subr.mxu0 0.0
        %459 = vmatpush1.msra.mxu0 %v334
        %460 = vmatprep.subr.mxu0 0.0
        %461 = vmatpush2.msra.mxu0 0.0
        %462 = vmatprep.subr.mxu0 0.0
        %463 = vmatpush2.msra.mxu0 0.0
        %464 = vmatprep.subr.mxu0 0.0
        %465 = vmatpush2.msra.mxu0 0.0
        %466 = vmatprep.subr.mxu0 0.0
        %467 = vmatpush2.msra.mxu0 0.0
        %468 = vmatprep.subr.mxu0 0.0
        %469 = vmatpush2.msra.mxu0 0.0
        %470 = vmatprep.subr.mxu0 0.0
        %471 = vmatpush2.msra.mxu0 0.0
        %472 = vmatprep.subr.mxu0 0.0
        %473 = vmatpush2.msra.mxu0 0.0
        %474 = vmatprep.subr.mxu0 0.0
        %475 = vmatpush2.msra.mxu0 0.0
        %476 = vmatprep.subr.mxu0 0.0
        %477 = vmatpush2.msra.mxu0 0.0
        %478 = vmatprep.subr.mxu0 0.0
        %479 = vmatpush2.msra.mxu0 0.0
        %480 = vmatprep.subr.mxu0 0.0
        %481 = vmatpush2.msra.mxu0 0.0
        %482 = vmatprep.subr.mxu0 0.0
        %483 = vmatpush2.msra.mxu0 0.0
        %484 = vmatprep.subr.mxu0 0.0
        %485 = vmatpush2.msra.mxu0 0.0
        %486 = vmatprep.subr.mxu0 0.0
        %487 = vmatpush2.msra.mxu0 0.0
        %488 = vmatprep.subr.mxu0 0.0
        %489 = vmatpush2.msra.mxu0 0.0
        %490 = vmatprep.subr.mxu0 0.0
        %491 = vmatpush2.msra.mxu0 0.0
        %492 = vmatprep.mubr.f32.mxu0 0.0
        %493 = vmatmul.mubr.f32.gmra.mxu0 %v426
        %v494 = vpop.f32.mrf.mxu0
        %v495 = vadd.f32 0.0, %v494
        %v496 = vpop.f32.mrf.mxu0
        %497 = vdwg.mxu0
        %498 = vst.msk [vmem:[%s331] sm:$0xff] %vm335, %v495
        %p499 = scmp.lt.s32.totalorder %s24, 1
        %s500 = scalar_select %p499, %s24, 1
        %p501 = scmp.lt.s32.totalorder %s25, 3
        %s502 = scalar_select %p501, %s25, 3
        %p503 = scmp.lt.s32.totalorder %s26, 0
        %s504 = scalar_select %p503, %s26, 0
        %s505 = sadd.s32 %s504, %s502
        %s506 = smul.addr %s500, 4
        %s507 = sadd.s32 %s505, %s506
        %s508 = smul.addr %s507, 8
        %s509 = scalar_lea.vmem %s3, %s508
        %s510 = sand.u32 %s166, 1
        %s511 = scalar_lea.sflag [#allocation3], %s510
        %s512 = sand.u32 %s166, 1
        %s513 = smul.addr %s512, 8
        %s514 = scalar_lea.vmem [#allocation2], %s513
        // Predicated region
        $region33: #{decoder_layer.13} parent=31 // pred_check
          %p515 = pneg %p146
        $region34: #{decoder_layer.13} parent=31 // pred_check_branch
          %517 = sbr.rel (%p515) target = $region36
        $region35: #{decoder_layer.13} parent=31 // pred_region
          _
        $region36: #{decoder_layer.13} parent=31 // pred_fallthru
          _
        // Predicated region
        $region37: #{decoder_layer.13} parent=31 // pred_check
          %p518 = pneg %p176
        $region38: #{decoder_layer.13} parent=31 // pred_check_branch
          %520 = sbr.rel (%p518) target = $region40
        $region39: #{decoder_layer.13} parent=31 // pred_region
          %s522 = ssub.s32 128, 128
          %523 = vsyncadd %s511, %s522
          %s524 = sadd.s32 %s26, %s25
          %s525 = smul.addr %s24, 4
          %s526 = sadd.s32 %s524, %s525
          %s527 = smul.addr %s526, 128
          %s528 = scalar_lea.hbm %s4, %s527
          %s530 = sshll.u32 %s514, 4
          %s531 = int_to_ptr.vmem [resolvable:$true] %s530
          %533 = dma.vmem_to_hbm [thread:$0]  %s531, 128, %s528, %s511
        $region40: #{decoder_layer.13} parent=31 // pred_fallthru
          _
      $region32: #{decoder_layer.13} parent=5 // pred_fallthru
        _
      %p534 = scmp.le.s32.totalorder 2, %s14
      // Predicated region
      $region41: #{decoder_layer.13} parent=5 // pred_check
        %p535 = pneg %p534
      $region42: #{decoder_layer.13} parent=5 // pred_check_branch
        %537 = sbr.rel (%p535) target = $region44
      $region43: #{decoder_layer.13} parent=5 // pred_region
        %s538 = ssub.s32 %s14, 2
        // Predicated region
        $region45: #{decoder_layer.13} parent=43 // pred_check
          %p539 = pneg %p152
        $region46: #{decoder_layer.13} parent=43 // pred_check_branch
          %541 = sbr.rel (%p539) target = $region48
        $region47: #{decoder_layer.13} parent=43 // pred_region
          %p542 = scmp.lt.s32.totalorder %s27, 1
          %s543 = scalar_select %p542, %s27, 1
          %p544 = scmp.lt.s32.totalorder %s28, 3
          %s545 = scalar_select %p544, %s28, 3
          %p546 = scmp.lt.s32.totalorder %s29, 0
          %s547 = scalar_select %p546, %s29, 0
          %s548 = sadd.s32 %s547, %s545
          %s549 = smul.addr %s543, 4
          %s550 = sadd.s32 %s548, %s549
          %s551 = smul.addr %s550, 8
          %s552 = scalar_lea.vmem %s3, %s551
        $region48: #{decoder_layer.13} parent=43 // pred_fallthru
          _
        // Predicated region
        $region49: #{decoder_layer.13} parent=43 // pred_check
          %p553 = pneg %p182
        $region50: #{decoder_layer.13} parent=43 // pred_check_branch
          %555 = sbr.rel (%p553) target = $region52
        $region51: #{decoder_layer.13} parent=43 // pred_region
          %s556 = sand.u32 %s167, 1
          %s557 = scalar_lea.sflag [#allocation3], %s556
          %s558 = sand.u32 %s167, 1
          %s559 = smul.addr %s558, 8
          %s560 = scalar_lea.vmem [#allocation2], %s559
          %561 = dma.done %s557, 128
        $region52: #{decoder_layer.13} parent=43 // pred_fallthru
          _
      $region44: #{decoder_layer.13} parent=5 // pred_fallthru
        _
    $region6: #{decoder_layer.13} parent=1 // loop_footer
      %s18 = sadd.s32 1, %s14
    $region7: #{decoder_layer.13} parent=1 // loop_footer_branch
      %13 = sbr.rel target = $region3
    $region8: #{decoder_layer.13} parent=1 // loop_exit
      _
    %562 = vsyncpa [#allocation3], 1
    %s563 = scalar_lea.sflag [#allocation3], 1
    %564 = vsyncpa %s563, 1

// kernel: decoder_layer.15
$region0: #{decoder_layer.15}
  #allocation0 [shape = 'u32[]', space=smem, size = 0x4, offset = 0x4, fixed_abs, tag = 'smem constant byte address 0x4 - core index']
  #allocation1 [shape = 'u32[144,128]{1,0:T(1,128)}', space=vmem, size = 0x12000, scoped, tag = 'internal scratch']
  %s0 = inlined_call_operand.vmem [shape: f32[16,32], index: 0, kind: input, shape index: {}]
  %s1 = inlined_call_operand.vmem [shape: f32[32,64], index: 1, kind: input, shape index: {}]
  %s2 = inlined_call_operand.vmem [shape: f32[1,64], index: 2, kind: input, shape index: {}]
  %s3 = inlined_call_operand.vmem [shape: f32[64,32], index: 3, kind: input, shape index: {}]
  %s4 = inlined_call_operand.vmem [shape: f32[1,32], index: 4, kind: input, shape index: {}]
  %s5 = inlined_call_operand.vmem [shape: f32[1,32], index: 5, kind: input, shape index: {}]
  %s6 = inlined_call_operand.vmem [shape: f32[1,32], index: 6, kind: input, shape index: {}]
  %s7 = inlined_call_operand.hbm [shape: f32[16,32], index: 7, kind: output, shape index: {}]
  %s8 = sld [smem:[#allocation0]]
  $region38: #{decoder_layer.15} parent=0
    _
  %s10 = ssub.s32 1, %s8
  %s11 = scalar_select 0, %s10, %s8
  $region1: #{decoder_layer.15} parent=0
    #allocation2 [shape = 'u8[8192]{0}', space=vmem, size = 0x2000, scoped, tag = 'output window, operand 0, single buffered']
    #allocation3 [shape = 's32[1]{0}', space=sflag, size = 0x4, scoped, tag = 'scoped memory for decoder_layer.15']
    %12 = vsyncpa [#allocation3], 0
    // Predicated region
    $region2: #{decoder_layer.15} parent=1 // pred_check
      _
    $region3: #{decoder_layer.15} parent=1 // pred_check_branch
      %14 = sbr.rel (0) target = $region5
    $region4: #{decoder_layer.15} parent=1 // pred_region
      _
    $region5: #{decoder_layer.15} parent=1 // pred_fallthru
      _
    // Predicated region
    $region6: #{decoder_layer.15} parent=1 // pred_check
      _
    $region7: #{decoder_layer.15} parent=1 // pred_check_branch
      %16 = sbr.rel (0) target = $region9
    $region8: #{decoder_layer.15} parent=1 // pred_region
      _
    $region9: #{decoder_layer.15} parent=1 // pred_fallthru
      _
    // Predicated region
    $region10: #{decoder_layer.15} parent=1 // pred_check
      _
    $region11: #{decoder_layer.15} parent=1 // pred_check_branch
      %18 = sbr.rel (0) target = $region13
    $region12: #{decoder_layer.15} parent=1 // pred_region
      _
    $region13: #{decoder_layer.15} parent=1 // pred_fallthru
      _
    // Predicated region
    $region14: #{decoder_layer.15} parent=1 // pred_check
      _
    $region15: #{decoder_layer.15} parent=1 // pred_check_branch
      %20 = sbr.rel (0) target = $region17
    $region16: #{decoder_layer.15} parent=1 // pred_region
      _
    $region17: #{decoder_layer.15} parent=1 // pred_fallthru
      _
    // Predicated region
    $region18: #{decoder_layer.15} parent=1 // pred_check
      _
    $region19: #{decoder_layer.15} parent=1 // pred_check_branch
      %22 = sbr.rel (0) target = $region21
    $region20: #{decoder_layer.15} parent=1 // pred_region
      _
    $region21: #{decoder_layer.15} parent=1 // pred_fallthru
      _
    // Predicated region
    $region22: #{decoder_layer.15} parent=1 // pred_check
      _
    $region23: #{decoder_layer.15} parent=1 // pred_check_branch
      %24 = sbr.rel (0) target = $region25
    $region24: #{decoder_layer.15} parent=1 // pred_region
      _
    $region25: #{decoder_layer.15} parent=1 // pred_fallthru
      _
    // Predicated region
    $region26: #{decoder_layer.15} parent=1 // pred_check
      _
    $region27: #{decoder_layer.15} parent=1 // pred_check_branch
      %26 = sbr.rel (0) target = $region29
    $region28: #{decoder_layer.15} parent=1 // pred_region
      _
    $region29: #{decoder_layer.15} parent=1 // pred_fallthru
      _
    %v27 = vld [vmem:[%s0] sm:$0xff]
    %v28 = vld [vmem:[%s0 + $0x8] sm:$0xff]
    %v29 = vld [vmem:[%s1] sm:$0xff]
    %v30 = vld [vmem:[%s1 + $0x8] sm:$0xff]
    %v31 = vld [vmem:[%s1 + $0x10] sm:$0xff]
    %v32 = vld [vmem:[%s1 + $0x18] sm:$0xff]
    %v33 = vld [vmem:[%s2] sm:$0x1]
    %v35 = vlaneseq
    %v36 = vshrl.u32 %v35, 7
    %v37 = vsub.s32 0, %v36
    %v38 = vrot.slane %v33, %v37
    %vm40 = vcmask 261120
    %v42 = vsel %vm40, %v27, 0
    %v45 = vsel %vm40, %v28, 0
    %47 = vmatprep.subr.mxu0 0.0
    %48 = vmatpush1.msra.mxu0 0.0
    %49 = vmatprep.subr.mxu0 0.0
    %50 = vmatpush1.msra.mxu0 0.0
    %51 = vmatprep.subr.mxu0 0.0
    %52 = vmatpush1.msra.mxu0 0.0
    %53 = vmatprep.subr.mxu0 0.0
    %54 = vmatpush1.msra.mxu0 0.0
    %55 = vmatprep.subr.mxu0 0.0
    %56 = vmatpush1.msra.mxu0 0.0
    %57 = vmatprep.subr.mxu0 0.0
    %58 = vmatpush1.msra.mxu0 0.0
    %59 = vmatprep.subr.mxu0 0.0
    %60 = vmatpush1.msra.mxu0 0.0
    %61 = vmatprep.subr.mxu0 0.0
    %62 = vmatpush1.msra.mxu0 0.0
    %63 = vmatprep.subr.mxu0 0.0
    %64 = vmatpush1.msra.mxu0 0.0
    %65 = vmatprep.subr.mxu0 0.0
    %66 = vmatpush1.msra.mxu0 0.0
    %67 = vmatprep.subr.mxu0 0.0
    %68 = vmatpush1.msra.mxu0 0.0
    %69 = vmatprep.subr.mxu0 0.0
    %70 = vmatpush1.msra.mxu0 0.0
    %71 = vmatprep.subr.mxu0 0.0
    %72 = vmatpush1.msra.mxu0 %v32
    %73 = vmatprep.subr.mxu0 0.0
    %74 = vmatpush1.msra.mxu0 %v31
    %75 = vmatprep.subr.mxu0 0.0
    %76 = vmatpush1.msra.mxu0 %v30
    %77 = vmatprep.subr.mxu0 0.0
    %78 = vmatpush1.msra.mxu0 %v29
    %79 = vmatprep.subr.mxu0 0.0
    %80 = vmatpush2.msra.mxu0 0.0
    %81 = vmatprep.subr.mxu0 0.0
    %82 = vmatpush2.msra.mxu0 0.0
    %83 = vmatprep.subr.mxu0 0.0
    %84 = vmatpush2.msra.mxu0 0.0
    %85 = vmatprep.subr.mxu0 0.0
    %86 = vmatpush2.msra.mxu0 0.0
    %87 = vmatprep.subr.mxu0 0.0
    %88 = vmatpush2.msra.mxu0 0.0
    %89 = vmatprep.subr.mxu0 0.0
    %90 = vmatpush2.msra.mxu0 0.0
    %91 = vmatprep.subr.mxu0 0.0
    %92 = vmatpush2.msra.mxu0 0.0
    %93 = vmatprep.subr.mxu0 0.0
    %94 = vmatpush2.msra.mxu0 0.0
    %95 = vmatprep.subr.mxu0 0.0
    %96 = vmatpush2.msra.mxu0 0.0
    %97 = vmatprep.subr.mxu0 0.0
    %98 = vmatpush2.msra.mxu0 0.0
    %99 = vmatprep.subr.mxu0 0.0
    %100 = vmatpush2.msra.mxu0 0.0
    %101 = vmatprep.subr.mxu0 0.0
    %102 = vmatpush2.msra.mxu0 0.0
    %103 = vmatprep.subr.mxu0 0.0
    %104 = vmatpush2.msra.mxu0 0.0
    %105 = vmatprep.subr.mxu0 0.0
    %106 = vmatpush2.msra.mxu0 0.0
    %107 = vmatprep.subr.mxu0 0.0
    %108 = vmatpush2.msra.mxu0 0.0
    %109 = vmatprep.subr.mxu0 0.0
    %110 = vmatpush2.msra.mxu0 0.0
    %111 = vmatprep.mubr.f32.mxu0 0.0
    %112 = vmatmul.mubr.f32.gmra.mxu0 %v42
    %v113 = vpop.f32.mrf.mxu0
    %v114 = vadd.f32 %v38, %v113
    %v115 = vpop.f32.mrf.mxu0
    %116 = vmatprep.mubr.f32.mxu0 0.0
    %117 = vmatmul.mubr.f32.gmra.mxu0 %v45
    %v118 = vpop.f32.mrf.mxu0
    %v119 = vadd.f32 %v38, %v118
    %v120 = vpop.f32.mrf.mxu0
    %121 = vdwg.mxu0
    %v122 = vmax.f32 %v114, 0.0
    %v123 = vmax.f32 %v119, 0.0
    %v124 = vld [vmem:[%s3] sm:$0xff]
    %v125 = vld [vmem:[%s3 + $0x8] sm:$0xff]
    %v126 = vld [vmem:[%s3 + $0x10] sm:$0xff]
    %v127 = vld [vmem:[%s3 + $0x18] sm:$0xff]
    %v128 = vld [vmem:[%s3 + $0x20] sm:$0xff]
    %v129 = vld [vmem:[%s3 + $0x28] sm:$0xff]
    %v130 = vld [vmem:[%s3 + $0x30] sm:$0xff]
    %v131 = vld [vmem:[%s3 + $0x38] sm:$0xff]
    %v132 = vld [vmem:[%s4] sm:$0x1]
    %v134 = vlaneseq
    %v135 = vshrl.u32 %v134, 7
    %v136 = vsub.s32 0, %v135
    %v137 = vrot.slane %v132, %v136
    %vm139 = vcmask 523264
    %v141 = vsel %vm139, %v122, 0
    %v144 = vsel %vm139, %v123, 0
    %146 = vmatprep.subr.mxu0 0.0
    %147 = vmatpush1.msra.mxu0 0.0
    %148 = vmatprep.subr.mxu0 0.0
    %149 = vmatpush1.msra.mxu0 0.0
    %150 = vmatprep.subr.mxu0 0.0
    %151 = vmatpush1.msra.mxu0 0.0
    %152 = vmatprep.subr.mxu0 0.0
    %153 = vmatpush1.msra.mxu0 0.0
    %154 = vmatprep.subr.mxu0 0.0
    %155 = vmatpush1.msra.mxu0 0.0
    %156 = vmatprep.subr.mxu0 0.0
    %157 = vmatpush1.msra.mxu0 0.0
    %158 = vmatprep.subr.mxu0 0.0
    %159 = vmatpush1.msra.mxu0 0.0
    %160 = vmatprep.subr.mxu0 0.0
    %161 = vmatpush1.msra.mxu0 0.0
    %162 = vmatprep.subr.mxu0 0.0
    %163 = vmatpush1.msra.mxu0 %v131
    %164 = vmatprep.subr.mxu0 0.0
    %165 = vmatpush1.msra.mxu0 %v130
    %166 = vmatprep.subr.mxu0 0.0
    %167 = vmatpush1.msra.mxu0 %v129
    %168 = vmatprep.subr.mxu0 0.0
    %169 = vmatpush1.msra.mxu0 %v128
    %170 = vmatprep.subr.mxu0 0.0
    %171 = vmatpush1.msra.mxu0 %v127
    %172 = vmatprep.subr.mxu0 0.0
    %173 = vmatpush1.msra.mxu0 %v126
    %174 = vmatprep.subr.mxu0 0.0
    %175 = vmatpush1.msra.mxu0 %v125
    %176 = vmatprep.subr.mxu0 0.0
    %177 = vmatpush1.msra.mxu0 %v124
    %178 = vmatprep.subr.mxu0 0.0
    %179 = vmatpush2.msra.mxu0 0.0
    %180 = vmatprep.subr.mxu0 0.0
    %181 = vmatpush2.msra.mxu0 0.0
    %182 = vmatprep.subr.mxu0 0.0
    %183 = vmatpush2.msra.mxu0 0.0
    %184 = vmatprep.subr.mxu0 0.0
    %185 = vmatpush2.msra.mxu0 0.0
    %186 = vmatprep.subr.mxu0 0.0
    %187 = vmatpush2.msra.mxu0 0.0
    %188 = vmatprep.subr.mxu0 0.0
    %189 = vmatpush2.msra.mxu0 0.0
    %190 = vmatprep.subr.mxu0 0.0
    %191 = vmatpush2.msra.mxu0 0.0
    %192 = vmatprep.subr.mxu0 0.0
    %193 = vmatpush2.msra.mxu0 0.0
    %194 = vmatprep.subr.mxu0 0.0
    %195 = vmatpush2.msra.mxu0 0.0
    %196 = vmatprep.subr.mxu0 0.0
    %197 = vmatpush2.msra.mxu0 0.0
    %198 = vmatprep.subr.mxu0 0.0
    %199 = vmatpush2.msra.mxu0 0.0
    %200 = vmatprep.subr.mxu0 0.0
    %201 = vmatpush2.msra.mxu0 0.0
    %202 = vmatprep.subr.mxu0 0.0
    %203 = vmatpush2.msra.mxu0 0.0
    %204 = vmatprep.subr.mxu0 0.0
    %205 = vmatpush2.msra.mxu0 0.0
    %206 = vmatprep.subr.mxu0 0.0
    %207 = vmatpush2.msra.mxu0 0.0
    %208 = vmatprep.subr.mxu0 0.0
    %209 = vmatpush2.msra.mxu0 0.0
    %210 = vmatprep.mubr.f32.mxu0 0.0
    %211 = vmatmul.mubr.f32.gmra.mxu0 %v141
    %v212 = vpop.f32.mrf.mxu0
    %v213 = vadd.f32 %v137, %v212
    %v214 = vpop.f32.mrf.mxu0
    %215 = vmatprep.mubr.f32.mxu0 0.0
    %216 = vmatmul.mubr.f32.gmra.mxu0 %v144
    %v217 = vpop.f32.mrf.mxu0
    %v218 = vadd.f32 %v137, %v217
    %v219 = vpop.f32.mrf.mxu0
    %220 = vdwg.mxu0
    %v221 = vadd.f32 %v213, %v27
    %v222 = vadd.f32 %v218, %v28
    %v223 = vld [vmem:[%s5] sm:$0x1]
    %v224 = vld [vmem:[%s6] sm:$0x1]
    %v225 = vsel %vm40, %v221, 0.0
    %226 = vadd.xlane.f32.xlu0 %v225
    %v227 = vpop.xlane.xlu0 %226
    %v228 = vsel %vm40, %v222, 0.0
    %229 = vadd.xlane.f32.xlu0 %v228
    %v230 = vpop.xlane.xlu0 %229
    %v231 = vrcp.pop 32.0
    %v232 = vmul.f32 %v227, %v231
    %v233 = vmul.f32 %v230, %v231
    %v234 = vsub.f32 %v221, %v232
    %v235 = vsub.f32 %v222, %v233
    %v236 = vmul.f32 %v234, %v234
    %v237 = vmul.f32 %v235, %v235
    %v238 = vsel %vm40, %v236, 0.0
    %239 = vadd.xlane.f32.xlu0 %v238
    %v240 = vpop.xlane.xlu0 %239
    %v241 = vsel %vm40, %v237, 0.0
    %242 = vadd.xlane.f32.xlu0 %v241
    %v243 = vpop.xlane.xlu0 %242
    %v244 = vmul.f32 %v240, %v231
    %v245 = vmul.f32 %v243, %v231
    %v246 = vadd.f32 %v244, 1e-05
    %v247 = vadd.f32 %v245, 1e-05
    %v248 = vrsqrt.pop %v246
    %v249 = vrsqrt.pop %v247
    %v250 = vmul.f32 %v234, %v248
    %v251 = vmul.f32 %v235, %v249
    %v253 = vlaneseq
    %v254 = vshrl.u32 %v253, 7
    %v255 = vsub.s32 0, %v254
    %v256 = vrot.slane %v223, %v255
    %v258 = vmul.f32 %v250, %v256
    %v259 = vmul.f32 %v251, %v256
    %v261 = vlaneseq
    %v262 = vshrl.u32 %v261, 7
    %v263 = vsub.s32 0, %v262
    %v264 = vrot.slane %v224, %v263
    %v266 = vadd.f32 %v258, %v264
    %v267 = vadd.f32 %v259, %v264
    %268 = vst.msk [vmem:[#allocation2] sm:$0xff] %vm40, %v266
    %269 = vst.msk [vmem:[#allocation2 + $0x8] sm:$0xff] %vm40, %v267
    // Predicated region
    $region30: #{decoder_layer.15} parent=1 // pred_check
      _
    $region31: #{decoder_layer.15} parent=1 // pred_check_branch
      %271 = sbr.rel (0) target = $region33
    $region32: #{decoder_layer.15} parent=1 // pred_region
      %s273 = ssub.s32 256, 256
      %274 = vsyncadd [#allocation3], %s273
      %s275 = sshll.u32 [#allocation2], 4
      %s276 = int_to_ptr.vmem [resolvable:$true] %s275
      %281 = dma.vmem_to_hbm [thread:$0]  %s276, 256, %s7, [#allocation3], 128, 128, 8
    $region33: #{decoder_layer.15} parent=1 // pred_fallthru
      _
    // Predicated region
    $region34: #{decoder_layer.15} parent=1 // pred_check
      _
    $region35: #{decoder_layer.15} parent=1 // pred_check_branch
      %283 = sbr.rel (0) target = $region37
    $region36: #{decoder_layer.15} parent=1 // pred_region
      %284 = dma.done [#allocation3], 256
    $region37: #{decoder_layer.15} parent=1 // pred_fallthru
      _
    %285 = vsyncpa [#allocation3], 1

</llo_original>
